<compile_context>
chip_gen: v6e
topology: v6e:2x2x1
jax: 0.10.0
libtpu: 0.0.40
codegen_flags: <defaults>
</compile_context>

<pallas_src>
import jax
import jax.numpy as jnp
from jax.experimental import pallas as pl
from jax.experimental.pallas import tpu as pltpu

EPS = 1e-5
LANE = 128      # pad output-channel dims to the 128-wide lane axis
SUBLANE = 16    # bf16 sublane packing


def _round_up(v, m):
    return (v + m - 1) // m * m


def _vmem_limit_bytes():
    """Generation-aware VMEM limit (~3/4 of physical, capped at 100 MiB)."""
    phys = 64 * 1024 * 1024                      # conservative default (v7x)
    try:
        cap = getattr(pltpu.get_tpu_info(), "vmem_capacity_bytes", None)
        if cap:
            phys = int(cap)
    except Exception:
        pass
    return int(min(phys * 3 // 4, 100 * 1024 * 1024))


def _compiler_params(vmem_limit):
    return pltpu.CompilerParams(dimension_semantics=("parallel",),
                                vmem_limit_bytes=int(vmem_limit))


def _whole_spec(shape):
    return pl.BlockSpec(shape, lambda i: (0,) * len(shape))


# ---------------------------------------------------------------------------
# In-kernel helpers
# ---------------------------------------------------------------------------
def _stats_block(y):
    """(8, C) block: row 0 = per-channel sum, row 1 = per-channel sum(y*y)."""
    c = y.shape[-1]
    s = jnp.broadcast_to(jnp.sum(y, axis=0, keepdims=True), (8, c))
    ss = jnp.broadcast_to(jnp.sum(y * y, axis=0, keepdims=True), (8, c))
    row = jax.lax.broadcasted_iota(jnp.int32, (8, c), 0)
    zero = jnp.zeros((8, c), jnp.float32)
    return jnp.where(row == 0, s, jnp.where(row == 1, ss, zero))


def _valid_row_mask(rows, wp, wo):
    """(rows, 1) bool mask: True where (row % wp) < wo.  Uses f32 arithmetic
    only (no vector integer division) so it lowers on every generation."""
    r = jax.lax.broadcasted_iota(jnp.int32, (rows, 1), 0).astype(jnp.float32)
    j = r - jnp.floor((r + 0.5) * (1.0 / wp)) * wp
    return j < (wo - 0.5)


# ---------------------------------------------------------------------------
# Fused 3x3 conv (stride 1) kernel: in-VMEM patch construction, optional
# bn+relu on the input, optional fused 1x1 projection matmul, partial BN stats.
# ---------------------------------------------------------------------------
def _make_conv3x3_kernel(h_sp, w_sp, cout_p, interior, shift, pre_affine,
                         with_proj):
    wp = w_sp + 2
    rows = h_sp * wp
    taps = [(dh, dw) for dh in range(3) for dw in range(3)]

    def kernel(*refs):
        it = iter(refs)
        x_ref = next(it)
        if pre_affine:
            s_ref = next(it)
            b_ref = next(it)
        w_ref = next(it)
        if with_proj:
            xs_ref = next(it)
            wsc_ref = next(it)
        y_ref = next(it)
        st_ref = next(it)
        if with_proj:
            ysc_ref = next(it)
            stsc_ref = next(it)
        pad_ref = next(it)

        valid = _valid_row_mask(rows, wp, w_sp)

        # Activation feeding the 3x3 taps (bn1+relu fused in for conv2).
        # Dead (j >= w_sp) rows MUST be zero: they become the spatial padding.
        if pre_affine:
            h = jnp.maximum(x_ref[0].astype(jnp.float32) * s_ref[...] +
                            b_ref[...], 0.0)
            h = jnp.where(valid, h, 0.0).astype(pad_ref.dtype)
        else:
            h = x_ref[0]                      # dead rows already zero (XLA pad)

        pad_ref[...] = jnp.zeros_like(pad_ref)
        pad_ref[pl.ds(interior, rows), :] = h  # interior offset is 16-aligned

        acc = jnp.zeros((rows, cout_p), jnp.float32)
        for t, (dh, dw) in enumerate(taps):
            lhs = pad_ref[pl.ds(dh * wp + dw + shift, rows), :]
            acc = acc + jnp.dot(lhs, w_ref[t],
                                preferred_element_type=jnp.float32)
        acc = jnp.where(valid, acc, 0.0)      # dead rows out of stats / output
        y_ref[0] = acc.astype(y_ref.dtype)
        st_ref[...] = _stats_block(acc)

        if with_proj:
            ysc = jnp.dot(xs_ref[0], wsc_ref[...],
                          preferred_element_type=jnp.float32)
            ysc_ref[0] = ysc.astype(ysc_ref.dtype)
            stsc_ref[...] = _stats_block(ysc)

    return kernel


def _call_conv3x3(x_wp, w9, h_sp, w_sp, vmem_limit, pre=None, proj=None):
    """Fused stride-1 3x3 conv, one image per grid step, wp-row layout I/O."""
    n, rows, cin = x_wp.shape
    cout_p = w9.shape[-1]
    wp = w_sp + 2
    assert rows == h_sp * wp

    shift = (-(wp + 1)) % SUBLANE             # aligns the interior scratch store
    interior = wp + 1 + shift
    scratch_rows = (h_sp + 3) * wp + shift    # taps never read out of bounds

    kernel = _make_conv3x3_kernel(h_sp, w_sp, cout_p, interior, shift,
                                  pre is not None, proj is not None)

    def img_in(c):
        return pl.BlockSpec((1, rows, c), lambda i: (i, 0, 0))

    in_specs = [img_in(cin)]
    args = [x_wp]
    if pre is not None:
        in_specs += [_whole_spec((1, cin)), _whole_spec((1, cin))]
        args += [pre[0], pre[1]]
    in_specs.append(_whole_spec((9, cin, cout_p)))
    args.append(w9)

    out_specs = [pl.BlockSpec((1, rows, cout_p), lambda i: (i, 0, 0)),
                 pl.BlockSpec((8, cout_p), lambda i: (i, 0))]
    out_shape = [jax.ShapeDtypeStruct((n, rows, cout_p), jnp.bfloat16),
                 jax.ShapeDtypeStruct((n * 8, cout_p), jnp.float32)]
    if proj is not None:
        xs, wsc = proj
        csc = xs.shape[-1]
        in_specs += [img_in(csc), _whole_spec((csc, cout_p))]
        args += [xs, wsc]
        out_specs += [pl.BlockSpec((1, rows, cout_p), lambda i: (i, 0, 0)),
                      pl.BlockSpec((8, cout_p), lambda i: (i, 0))]
        out_shape += [jax.ShapeDtypeStruct((n, rows, cout_p), jnp.bfloat16),
                      jax.ShapeDtypeStruct((n * 8, cout_p), jnp.float32)]

    return pl.pallas_call(
        kernel,
        grid=(n,),
        in_specs=in_specs,
        out_specs=tuple(out_specs),
        out_shape=tuple(out_shape),
        scratch_shapes=[pltpu.VMEM((scratch_rows, cin), jnp.bfloat16)],
        compiler_params=_compiler_params(vmem_limit),
    )(*args)


# ---------------------------------------------------------------------------
# im2col matmul kernel (only used for conv1 when stride > 1)
# ---------------------------------------------------------------------------
def _conv_stats_kernel(p_ref, w_ref, y_ref, st_ref):
    y = jnp.dot(p_ref[...], w_ref[...], preferred_element_type=jnp.float32)
    y_ref[...] = y.astype(y_ref.dtype)
    st_ref[...] = _stats_block(y)


def _call_conv_stats(patches, w, tile_m, vmem_limit):
    m_pad, k = patches.shape
    c = w.shape[1]
    n_tiles = m_pad // tile_m
    return pl.pallas_call(
        _conv_stats_kernel,
        grid=(n_tiles,),
        in_specs=[pl.BlockSpec((tile_m, k), lambda i: (i, 0)),
                  _whole_spec((k, c))],
        out_specs=(pl.BlockSpec((tile_m, c), lambda i: (i, 0)),
                   pl.BlockSpec((8, c), lambda i: (i, 0))),
        out_shape=(jax.ShapeDtypeStruct((m_pad, c), jnp.bfloat16),
                   jax.ShapeDtypeStruct((n_tiles * 8, c), jnp.float32)),
        compiler_params=_compiler_params(vmem_limit),
    )(patches, w)


# ---------------------------------------------------------------------------
# BN2 + residual-add epilogue kernels (per-image grid)
# ---------------------------------------------------------------------------
def _bn_add_proj_kernel(y_ref, ysc_ref, s2_ref, b2_ref, ssc_ref, bsc_ref, o_ref):
    o_ref[0] = (y_ref[0].astype(jnp.float32) * s2_ref[...] + b2_ref[...]) + \
               (ysc_ref[0].astype(jnp.float32) * ssc_ref[...] + bsc_ref[...])


def _bn_add_ident_kernel(y_ref, sc_ref, s2_ref, b2_ref, o_ref):
    o_ref[0] = (y_ref[0].astype(jnp.float32) * s2_ref[...] + b2_ref[...] +
                sc_ref[0].astype(jnp.float32))


def _call_bn_add(y2, other, scales, vmem_limit, proj):
    n, rows, c = y2.shape

    def img():
        return pl.BlockSpec((1, rows, c), lambda i: (i, 0, 0))

    def vec():
        return _whole_spec((1, c))

    if proj:
        kernel = _bn_add_proj_kernel
        in_specs = [img(), img(), vec(), vec(), vec(), vec()]
    else:
        kernel = _bn_add_ident_kernel
        in_specs = [img(), img(), vec(), vec()]
    return pl.pallas_call(
        kernel,
        grid=(n,),
        in_specs=in_specs,
        out_specs=img(),
        out_shape=jax.ShapeDtypeStruct((n, rows, c), jnp.float32),
        compiler_params=_compiler_params(vmem_limit),
    )(y2, other, *scales)


# ---------------------------------------------------------------------------
# JAX glue: layouts, stat folding, tile planning
# ---------------------------------------------------------------------------
def _im2col(x_nhwc, ksize, stride, pad):
    """(N*Ho*Wo, ksize*ksize*C) patches, columns in (kh, kw, cin) order."""
    n, h, w, c = x_nhwc.shape
    xp = jnp.pad(x_nhwc, ((0, 0), (pad, pad), (pad, pad), (0, 0)))
    ho = (h + 2 * pad - ksize) // stride + 1
    wo = (w + 2 * pad - ksize) // stride + 1
    taps = []
    for dh in range(ksize):
        for dw in range(ksize):
            taps.append(xp[:, dh:dh + stride * ho:stride,
                           dw:dw + stride * wo:stride, :])
    p = jnp.stack(taps, axis=3)
    return p.reshape(n * ho * wo, ksize * ksize * c), ho, wo


def _pad_rows(a, m_pad):
    return jnp.pad(a, ((0, m_pad - a.shape[0]), (0, 0)))


def _pad_last(a, c_pad):
    pads = [(0, 0)] * (a.ndim - 1) + [(0, c_pad - a.shape[-1])]
    return jnp.pad(a, pads)


def _to_wp_rows(a_nhwc, c_pad=None):
    """(N,H,W,C) -> (N, H*(W+2), C[_pad]) bf16, right-padding W by two zeros."""
    n, h, w, c = a_nhwc.shape
    cp = c if c_pad is None else c_pad
    a = jnp.pad(a_nhwc, ((0, 0), (0, 0), (0, 2), (0, cp - c)))
    return a.astype(jnp.bfloat16).reshape(n, h * (w + 2), cp)


def _fold_stats(stats, m_rows, gamma, beta):
    """Fold per-tile/per-image (sum, sumsq) partials into BN scale/shift."""
    sums = stats.reshape(-1, 8, stats.shape[-1]).sum(axis=0)
    s, ss = sums[0], sums[1]
    mean = s / m_rows
    var = jnp.maximum(ss / m_rows - mean * mean, 0.0)   # biased batch variance
    scale = gamma * jax.lax.rsqrt(var + EPS)
    shift = beta - mean * scale
    return scale.reshape(1, -1), shift.reshape(1, -1)


def _plan_tiles(m, bytes_per_row, vmem_limit, resident_bytes):
    """Tile the im2col M dim: double-buffered row blocks within the budget,
    and at least 2 grid steps so v7x's two TensorCores both get work."""
    budget = max(2 * 1024 * 1024, vmem_limit - resident_bytes - 2 * 1024 * 1024)
    tile = 1024
    while tile > SUBLANE and 2 * tile * bytes_per_row > budget:
        tile //= 2
    if m > 2 * SUBLANE:
        tile = min(tile, _round_up((m + 1) // 2, SUBLANE))
    tile = max(tile, SUBLANE)
    return tile, _round_up(m, tile)


# ---------------------------------------------------------------------------
# Parameters + forward
# ---------------------------------------------------------------------------
def init_resblk_params(key, ch_in, ch_out):
    k1, k2, k3, k4, k5, k6 = jax.random.split(key, 6)
    p = {
        # conv weights in HWIO layout; biases kept for the reference only
        # (they are exactly cancelled by training-mode BatchNorm).
        "w1": jax.random.normal(k1, (3, 3, ch_in, ch_out), jnp.float32) * 0.1,
        "b1": jax.random.normal(k2, (ch_out,), jnp.float32) * 0.1,
        "w2": jax.random.normal(k3, (3, 3, ch_out, ch_out), jnp.float32) * 0.1,
        "b2": jax.random.normal(k4, (ch_out,), jnp.float32) * 0.1,
        "g1": jnp.ones((ch_out,), jnp.float32),
        "be1": jnp.zeros((ch_out,), jnp.float32),
        "g2": jnp.ones((ch_out,), jnp.float32),
        "be2": jnp.zeros((ch_out,), jnp.float32),
    }
    if ch_in != ch_out:
        p["wsc"] = jax.random.normal(k5, (1, 1, ch_in, ch_out), jnp.float32) * 0.1
        p["bsc"] = jax.random.normal(k6, (ch_out,), jnp.float32) * 0.1
        p["gsc"] = jnp.ones((ch_out,), jnp.float32)
        p["besc"] = jnp.zeros((ch_out,), jnp.float32)
    return p


def resblk_forward(x_nchw, params, stride=1):
    """Pallas TPU implementation of resblk.forward (NCHW in, NCHW out)."""
    x = jnp.transpose(x_nchw, (0, 2, 3, 1)).astype(jnp.float32)    # -> NHWC
    n, h, w, ch_in = x.shape
    ch_out = params["w1"].shape[-1]
    proj = "wsc" in params
    if not proj:
        assert ch_in == ch_out and stride == 1, \
            "identity shortcut requires ch_in == ch_out and stride == 1"

    cout_p = _round_up(ch_out, LANE)
    ho = (h + 2 - 3) // stride + 1
    wo = (w + 2 - 3) // stride + 1
    wp = wo + 2
    rows = ho * wp
    m = n * ho * wo
    vmem_limit = _vmem_limit_bytes()

    g1 = _pad_last(params["g1"], cout_p)
    be1 = _pad_last(params["be1"], cout_p)
    g2 = _pad_last(params["g2"], cout_p)
    be2 = _pad_last(params["be2"], cout_p)

    # ---- Stage A: conv1 + partial bn1 statistics ---------------------------
    if stride == 1:
        # In-kernel patch construction: x enters once, in wp-row layout, bf16.
        x_wp = _to_wp_rows(x)                                     # (n,rows,cin)
        w1 = _pad_last(params["w1"], cout_p).reshape(9, ch_in, cout_p)
        y1, st1 = _call_conv3x3(x_wp, w1.astype(jnp.bfloat16), h, w, vmem_limit)
    else:
        # TODO(synk): stride>1 conv1 still uses an XLA im2col (true-Cin K).
        p1, _, _ = _im2col(x.astype(jnp.bfloat16), 3, stride, 1)  # (m, 9*cin)
        k_true = 9 * ch_in
        k_pad = _round_up(k_true, LANE)
        p1 = jnp.pad(p1, ((0, 0), (0, k_pad - k_true)))
        w1 = params["w1"].reshape(k_true, ch_out)
        w1 = jnp.pad(w1, ((0, k_pad - k_true), (0, cout_p - ch_out)))
        bytes_per_row = 2 * (k_pad + cout_p)                      # bf16 in + out
        resident = 2 * 2 * k_pad * cout_p                         # dbl-buf weights
        tile_m, m_pad = _plan_tiles(m, bytes_per_row, vmem_limit, resident)
        y1s, st1 = _call_conv_stats(_pad_rows(p1, m_pad),
                                    w1.astype(jnp.bfloat16), tile_m, vmem_limit)
        y1 = y1s[:m].reshape(n, ho, wo, cout_p)
        y1 = jnp.pad(y1, ((0, 0), (0, 0), (0, 2), (0, 0)))
        y1 = y1.reshape(n, rows, cout_p)                          # wp-row layout
    scale1, shift1 = _fold_stats(st1, m, g1, be1)

    # ---- Stage B: conv2 with bn1+relu fused into its input load (+ fused 1x1
    # projection shortcut), partial bn2 / bn_sc statistics --------------------
    w2 = jnp.pad(params["w2"],
                 ((0, 0), (0, 0), (0, cout_p - ch_out), (0, cout_p - ch_out)))
    w2 = w2.reshape(9, cout_p, cout_p).astype(jnp.bfloat16)
    if proj:
        xs = _to_wp_rows(x[:, ::stride, ::stride, :])             # (n,rows,cin)
        wsc = params["wsc"].reshape(ch_in, ch_out)
        wsc = jnp.pad(wsc, ((0, 0), (0, cout_p - ch_out))).astype(jnp.bfloat16)
        y2, st2, ysc, stsc = _call_conv3x3(
            y1, w2, ho, wo, vmem_limit, pre=(scale1, shift1), proj=(xs, wsc))
        scale2, shift2 = _fold_stats(st2, m, g2, be2)
        gsc = _pad_last(params["gsc"], cout_p)
        besc = _pad_last(params["besc"], cout_p)
        scalesc, shiftsc = _fold_stats(stsc, m, gsc, besc)
        out = _call_bn_add(y2, ysc, (scale2, shift2, scalesc, shiftsc),
                           vmem_limit, proj=True)
    else:
        y2, st2 = _call_conv3x3(y1, w2, ho, wo, vmem_limit,
                                pre=(scale1, shift1))
        scale2, shift2 = _fold_stats(st2, m, g2, be2)
        sc = _to_wp_rows(x, c_pad=cout_p)                         # identity
        out = _call_bn_add(y2, sc, (scale2, shift2), vmem_limit, proj=False)

    out = out.reshape(n, ho, wp, cout_p)[:, :, :wo, :ch_out]
    return jnp.transpose(out, (0, 3, 1, 2))                       # -> NCHW


# ---------------------------------------------------------------------------
# Pure-JAX f32 reference (matches the PyTorch module, biases included)
# ---------------------------------------------------------------------------
def resblk_reference(x_nchw, params, stride=1):
    x = jnp.transpose(x_nchw, (0, 2, 3, 1)).astype(jnp.float32)

    def conv(inp, w, b, s, pad):
        y = jax.lax.conv_general_dilated(
            inp, w, (s, s), [(pad, pad), (pad, pad)],
            dimension_numbers=("NHWC", "HWIO", "NHWC"),
            precision=jax.lax.Precision.HIGHEST)
        return y + b

    def bn(y, g, be):
        mean = jnp.mean(y, axis=(0, 1, 2), keepdims=True)
        var = jnp.mean(jnp.square(y - mean), axis=(0, 1, 2), keepdims=True)
        return (y - mean) / jnp.sqrt(var + EPS) * g + be

    out = jnp.maximum(bn(conv(x, params["w1"], params["b1"], stride, 1),
                         params["g1"], params["be1"]), 0.0)
    out = bn(conv(out, params["w2"], params["b2"], 1, 1),
             params["g2"], params["be2"])
    if "wsc" in params:
        sc = bn(conv(x, params["wsc"], params["bsc"], stride, 0),
                params["gsc"], params["besc"])
    else:
        sc = x
    return jnp.transpose(sc + out, (0, 3, 1, 2))


# ---------------------------------------------------------------------------
if __name__ == "__main__":
    fwd = jax.jit(resblk_forward, static_argnames=("stride",))

    key = jax.random.PRNGKey(0)
    kx1, kp1, kx2, kp2 = jax.random.split(key, 4)

    # bf16 MXU operands AND bf16-stored intermediates (per perf review) ->
    # slightly looser tolerance than a pure-f32 pipeline.
    RTOL = ATOL = 4e-2

    # Projection-shortcut block: ch_in=4 -> ch_out=8, stride 2, 16x16 input.
    x1 = jax.random.normal(kx1, (2, 4, 16, 16), jnp.float32)
    params1 = init_resblk_params(kp1, 4, 8)
    out1 = jax.block_until_ready(fwd(x1, params1, stride=2))
    ref1 = jax.block_until_ready(resblk_reference(x1, params1, stride=2))
    assert out1.shape == ref1.shape == (2, 8, 8, 8), (out1.shape, ref1.shape)
    assert jnp.allclose(out1, ref1, rtol=RTOL, atol=ATOL), \
        float(jnp.max(jnp.abs(out1 - ref1)))

    # Identity-shortcut block: ch_in == ch_out = 8, stride 1.
    x2 = jax.random.normal(kx2, (2, 8, 16, 16), jnp.float32)
    params2 = init_resblk_params(kp2, 8, 8)
    out2 = jax.block_until_ready(fwd(x2, params2, stride=1))
    ref2 = jax.block_until_ready(resblk_reference(x2, params2, stride=1))
    assert out2.shape == ref2.shape == (2, 8, 16, 16), (out2.shape, ref2.shape)
    assert jnp.allclose(out2, ref2, rtol=RTOL, atol=ATOL), \
        float(jnp.max(jnp.abs(out2 - ref2)))

    print("KERNEL_OK")
</pallas_src>

<mosaic_0001>
module attributes {stable_mosaic.version = 11 : i64} {
  func.func @_conv_stats_kernel(%arg0: i32, %arg1: memref<64x128xbf16, #tpu.memory_space<vmem>>, %arg2: memref<128x128xbf16, #tpu.memory_space<vmem>>, %arg3: memref<64x128xbf16, #tpu.memory_space<vmem>>, %arg4: memref<8x128xf32, #tpu.memory_space<vmem>>) attributes {dimension_semantics = [#tpu.dimension_semantics<parallel>], iteration_bounds = array<i64: 2>, scalar_prefetch = 0 : i64, scratch_operands = 0 : i64, tpu.core_type = #tpu.core_type<tc>, window_params = [{transform_indices = @transform_0, window_bounds = array<i64: 64, 128>}, {pipeline_mode = #tpu.pipeline_mode<synchronous>, transform_indices = @transform_1, window_bounds = array<i64: 128, 128>}, {transform_indices = @transform_2, window_bounds = array<i64: 64, 128>}, {transform_indices = @transform_3, window_bounds = array<i64: 8, 128>}]} {
    %c0 = arith.constant 0 : index
    %c0_0 = arith.constant 0 : index
    %0 = vector.load %arg1[%c0, %c0_0] : memref<64x128xbf16, #tpu.memory_space<vmem>>, vector<64x128xbf16>
    %c0_1 = arith.constant 0 : index
    %c0_2 = arith.constant 0 : index
    %1 = vector.load %arg2[%c0_1, %c0_2] : memref<128x128xbf16, #tpu.memory_space<vmem>>, vector<128x128xbf16>
    %cst = arith.constant dense<0.000000e+00> : vector<64x128xf32>
    %2 = tpu.matmul %0, %1, %cst {dimension_numbers = #tpu.dot_dimension_numbers<[1], [0], [0], [1], [0, 0, 1, 1], [], []>} : vector<64x128xbf16>, vector<128x128xbf16>, vector<64x128xf32> -> vector<64x128xf32>
    %3 = arith.truncf %2 : vector<64x128xf32> to vector<64x128xbf16>
    %c0_3 = arith.constant 0 : index
    %c0_4 = arith.constant 0 : index
    %4 = vector.load %arg3[%c0_3, %c0_4] : memref<64x128xbf16, #tpu.memory_space<vmem>>, vector<64x128xbf16>
    tpu.vector_store %arg3[%c0_3, %c0_4], %3 {strides = array<i32>} : memref<64x128xbf16, #tpu.memory_space<vmem>>, vector<64x128xbf16>,
    %cst_5 = arith.constant dense<0.000000e+00> : vector<128xf32>
    %5 = vector.multi_reduction <add>, %2, %cst_5 [0] : vector<64x128xf32> to vector<128xf32>
    %6 = vector.shape_cast %5 : vector<128xf32> to vector<1x128xf32>
    %7 = vector.shape_cast %6 : vector<1x128xf32> to vector<1x128xf32>
    %8 = vector.broadcast %7 : vector<1x128xf32> to vector<8x128xf32>
    %9 = arith.mulf %2, %2 : vector<64x128xf32>
    %cst_6 = arith.constant dense<0.000000e+00> : vector<128xf32>
    %10 = vector.multi_reduction <add>, %9, %cst_6 [0] : vector<64x128xf32> to vector<128xf32>
    %11 = vector.shape_cast %10 : vector<128xf32> to vector<1x128xf32>
    %12 = vector.shape_cast %11 : vector<1x128xf32> to vector<1x128xf32>
    %13 = vector.broadcast %12 : vector<1x128xf32> to vector<8x128xf32>
    %14 = tpu.iota {dimensions = array<i32: 0>} : vector<8x128xi32>
    %cst_7 = arith.constant 0.000000e+00 : f32
    %15 = vector.broadcast %cst_7 : f32 to vector<8x128xf32>
    %c0_i32 = arith.constant 0 : i32
    %16 = vector.broadcast %c0_i32 : i32 to vector<8x128xi32>
    %17 = arith.cmpi eq, %14, %16 : vector<8x128xi32>
    %c1_i32 = arith.constant 1 : i32
    %18 = vector.broadcast %c1_i32 : i32 to vector<8x128xi32>
    %19 = arith.cmpi eq, %14, %18 : vector<8x128xi32>
    %20 = arith.select %19, %13, %15 : vector<8x128xi1>, vector<8x128xf32>
    %21 = arith.select %17, %8, %20 : vector<8x128xi1>, vector<8x128xf32>
    %c0_8 = arith.constant 0 : index
    %c0_9 = arith.constant 0 : index
    %22 = vector.load %arg4[%c0_8, %c0_9] : memref<8x128xf32, #tpu.memory_space<vmem>>, vector<8x128xf32>
    tpu.vector_store %arg4[%c0_8, %c0_9], %21 {strides = array<i32>} : memref<8x128xf32, #tpu.memory_space<vmem>>, vector<8x128xf32>,
    return
  }
  func.func @transform_0(%arg0: i32) -> (i32, i32) {
    %c0_i32 = arith.constant 0 : i32
    %c0_i32_0 = arith.constant 0 : i32
    return %arg0, %c0_i32 : i32, i32
  }
  func.func @transform_1(%arg0: i32) -> (i32, i32) {
    %c0_i32 = arith.constant 0 : i32
    %c0_i32_0 = arith.constant 0 : i32
    %c0_i32_1 = arith.constant 0 : i32
    return %c0_i32, %c0_i32_0 : i32, i32
  }
  func.func @transform_2(%arg0: i32) -> (i32, i32) {
    %c0_i32 = arith.constant 0 : i32
    %c0_i32_0 = arith.constant 0 : i32
    return %arg0, %c0_i32 : i32, i32
  }
  func.func @transform_3(%arg0: i32) -> (i32, i32) {
    %c0_i32 = arith.constant 0 : i32
    %c0_i32_0 = arith.constant 0 : i32
    return %arg0, %c0_i32 : i32, i32
  }
}

module attributes {stable_mosaic.version = 11 : i64} {
  func.func @_bn_add_proj_kernel(%arg0: i32, %arg1: memref<1x80x128xbf16, #tpu.memory_space<vmem>>, %arg2: memref<1x80x128xbf16, #tpu.memory_space<vmem>>, %arg3: memref<1x128xf32, #tpu.memory_space<vmem>>, %arg4: memref<1x128xf32, #tpu.memory_space<vmem>>, %arg5: memref<1x128xf32, #tpu.memory_space<vmem>>, %arg6: memref<1x128xf32, #tpu.memory_space<vmem>>, %arg7: memref<1x80x128xf32, #tpu.memory_space<vmem>>) attributes {dimension_semantics = [#tpu.dimension_semantics<parallel>], iteration_bounds = array<i64: 2>, scalar_prefetch = 0 : i64, scratch_operands = 0 : i64, tpu.core_type = #tpu.core_type<tc>, window_params = [{transform_indices = @transform_0, window_bounds = array<i64: 1, 80, 128>}, {transform_indices = @transform_1, window_bounds = array<i64: 1, 80, 128>}, {pipeline_mode = #tpu.pipeline_mode<synchronous>, transform_indices = @transform_2, window_bounds = array<i64: 1, 128>}, {pipeline_mode = #tpu.pipeline_mode<synchronous>, transform_indices = @transform_3, window_bounds = array<i64: 1, 128>}, {pipeline_mode = #tpu.pipeline_mode<synchronous>, transform_indices = @transform_4, window_bounds = array<i64: 1, 128>}, {pipeline_mode = #tpu.pipeline_mode<synchronous>, transform_indices = @transform_5, window_bounds = array<i64: 1, 128>}, {transform_indices = @transform_6, window_bounds = array<i64: 1, 80, 128>}]} {
    %c0 = arith.constant 0 : index
    %c0_0 = arith.constant 0 : index
    %c0_1 = arith.constant 0 : index
    %0 = vector.load %arg1[%c0, %c0_0, %c0_1] : memref<1x80x128xbf16, #tpu.memory_space<vmem>>, vector<1x80x128xbf16>
    %1 = vector.shape_cast %0 : vector<1x80x128xbf16> to vector<80x128xbf16>
    %2 = arith.extf %1 : vector<80x128xbf16> to vector<80x128xf32>
    %c0_2 = arith.constant 0 : index
    %c0_3 = arith.constant 0 : index
    %3 = vector.load %arg3[%c0_2, %c0_3] : memref<1x128xf32, #tpu.memory_space<vmem>>, vector<1x128xf32>
    %4 = vector.broadcast %3 : vector<1x128xf32> to vector<80x128xf32>
    %5 = arith.mulf %2, %4 : vector<80x128xf32>
    %c0_4 = arith.constant 0 : index
    %c0_5 = arith.constant 0 : index
    %6 = vector.load %arg4[%c0_4, %c0_5] : memref<1x128xf32, #tpu.memory_space<vmem>>, vector<1x128xf32>
    %7 = vector.broadcast %6 : vector<1x128xf32> to vector<80x128xf32>
    %8 = arith.addf %5, %7 : vector<80x128xf32>
    %c0_6 = arith.constant 0 : index
    %c0_7 = arith.constant 0 : index
    %c0_8 = arith.constant 0 : index
    %9 = vector.load %arg2[%c0_6, %c0_7, %c0_8] : memref<1x80x128xbf16, #tpu.memory_space<vmem>>, vector<1x80x128xbf16>
    %10 = vector.shape_cast %9 : vector<1x80x128xbf16> to vector<80x128xbf16>
    %11 = arith.extf %10 : vector<80x128xbf16> to vector<80x128xf32>
    %c0_9 = arith.constant 0 : index
    %c0_10 = arith.constant 0 : index
    %12 = vector.load %arg5[%c0_9, %c0_10] : memref<1x128xf32, #tpu.memory_space<vmem>>, vector<1x128xf32>
    %13 = vector.broadcast %12 : vector<1x128xf32> to vector<80x128xf32>
    %14 = arith.mulf %11, %13 : vector<80x128xf32>
    %c0_11 = arith.constant 0 : index
    %c0_12 = arith.constant 0 : index
    %15 = vector.load %arg6[%c0_11, %c0_12] : memref<1x128xf32, #tpu.memory_space<vmem>>, vector<1x128xf32>
    %16 = vector.broadcast %15 : vector<1x128xf32> to vector<80x128xf32>
    %17 = arith.addf %14, %16 : vector<80x128xf32>
    %18 = arith.addf %8, %17 : vector<80x128xf32>
    %c0_13 = arith.constant 0 : index
    %c0_14 = arith.constant 0 : index
    %c0_15 = arith.constant 0 : index
    %19 = vector.load %arg7[%c0_13, %c0_14, %c0_15] : memref<1x80x128xf32, #tpu.memory_space<vmem>>, vector<1x80x128xf32>
    %20 = vector.shape_cast %19 : vector<1x80x128xf32> to vector<80x128xf32>
    %21 = vector.shape_cast %18 : vector<80x128xf32> to vector<1x80x128xf32>
    tpu.vector_store %arg7[%c0_13, %c0_14, %c0_15], %21 {strides = array<i32>} : memref<1x80x128xf32, #tpu.memory_space<vmem>>, vector<1x80x128xf32>,
    return
  }
  func.func @transform_0(%arg0: i32) -> (i32, i32, i32) {
    %c0_i32 = arith.constant 0 : i32
    %c0_i32_0 = arith.constant 0 : i32
    %c0_i32_1 = arith.constant 0 : i32
    return %arg0, %c0_i32, %c0_i32_0 : i32, i32, i32
  }
  func.func @transform_1(%arg0: i32) -> (i32, i32, i32) {
    %c0_i32 = arith.constant 0 : i32
    %c0_i32_0 = arith.constant 0 : i32
    %c0_i32_1 = arith.constant 0 : i32
    return %arg0, %c0_i32, %c0_i32_0 : i32, i32, i32
  }
  func.func @transform_2(%arg0: i32) -> (i32, i32) {
    %c0_i32 = arith.constant 0 : i32
    %c0_i32_0 = arith.constant 0 : i32
    %c0_i32_1 = arith.constant 0 : i32
    return %c0_i32, %c0_i32_0 : i32, i32
  }
  func.func @transform_3(%arg0: i32) -> (i32, i32) {
    %c0_i32 = arith.constant 0 : i32
    %c0_i32_0 = arith.constant 0 : i32
    %c0_i32_1 = arith.constant 0 : i32
    return %c0_i32, %c0_i32_0 : i32, i32
  }
  func.func @transform_4(%arg0: i32) -> (i32, i32) {
    %c0_i32 = arith.constant 0 : i32
    %c0_i32_0 = arith.constant 0 : i32
    %c0_i32_1 = arith.constant 0 : i32
    return %c0_i32, %c0_i32_0 : i32, i32
  }
  func.func @transform_5(%arg0: i32) -> (i32, i32) {
    %c0_i32 = arith.constant 0 : i32
    %c0_i32_0 = arith.constant 0 : i32
    %c0_i32_1 = arith.constant 0 : i32
    return %c0_i32, %c0_i32_0 : i32, i32
  }
  func.func @transform_6(%arg0: i32) -> (i32, i32, i32) {
    %c0_i32 = arith.constant 0 : i32
    %c0_i32_0 = arith.constant 0 : i32
    %c0_i32_1 = arith.constant 0 : i32
    return %arg0, %c0_i32, %c0_i32_0 : i32, i32, i32
  }
}

module attributes {stable_mosaic.version = 11 : i64} {
  func.func @kernel(%arg0: i32, %arg1: memref<1x80x128xbf16, #tpu.memory_space<vmem>>, %arg2: memref<1x128xf32, #tpu.memory_space<vmem>>, %arg3: memref<1x128xf32, #tpu.memory_space<vmem>>, %arg4: memref<9x128x128xbf16, #tpu.memory_space<vmem>>, %arg5: memref<1x80x4xbf16, #tpu.memory_space<vmem>>, %arg6: memref<4x128xbf16, #tpu.memory_space<vmem>>, %arg7: memref<1x80x128xbf16, #tpu.memory_space<vmem>>, %arg8: memref<8x128xf32, #tpu.memory_space<vmem>>, %arg9: memref<1x80x128xbf16, #tpu.memory_space<vmem>>, %arg10: memref<8x128xf32, #tpu.memory_space<vmem>>, %arg11: memref<115x128xbf16, #tpu.memory_space<vmem>>) attributes {dimension_semantics = [#tpu.dimension_semantics<parallel>], iteration_bounds = array<i64: 2>, scalar_prefetch = 0 : i64, scratch_operands = 1 : i64, tpu.core_type = #tpu.core_type<tc>, window_params = [{transform_indices = @transform_0, window_bounds = array<i64: 1, 80, 128>}, {pipeline_mode = #tpu.pipeline_mode<synchronous>, transform_indices = @transform_1, window_bounds = array<i64: 1, 128>}, {pipeline_mode = #tpu.pipeline_mode<synchronous>, transform_indices = @transform_2, window_bounds = array<i64: 1, 128>}, {pipeline_mode = #tpu.pipeline_mode<synchronous>, transform_indices = @transform_3, window_bounds = array<i64: 9, 128, 128>}, {transform_indices = @transform_4, window_bounds = array<i64: 1, 80, 4>}, {pipeline_mode = #tpu.pipeline_mode<synchronous>, transform_indices = @transform_5, window_bounds = array<i64: 4, 128>}, {transform_indices = @transform_6, window_bounds = array<i64: 1, 80, 128>}, {transform_indices = @transform_7, window_bounds = array<i64: 8, 128>}, {transform_indices = @transform_8, window_bounds = array<i64: 1, 80, 128>}, {transform_indices = @transform_9, window_bounds = array<i64: 8, 128>}]} {
    %0 = tpu.iota {dimensions = array<i32: 0>} : vector<80x1xi32>
    %1 = arith.sitofp %0 : vector<80x1xi32> to vector<80x1xf32>
    %cst = arith.constant 5.000000e-01 : f32
    %2 = vector.broadcast %cst : f32 to vector<80x1xf32>
    %3 = arith.addf %1, %2 : vector<80x1xf32>
    %cst_0 = arith.constant 1.000000e-01 : f32
    %4 = vector.broadcast %cst_0 : f32 to vector<80x1xf32>
    %5 = arith.mulf %3, %4 : vector<80x1xf32>
    %6 = math.floor %5 : vector<80x1xf32>
    %cst_1 = arith.constant 1.000000e+01 : f32
    %7 = vector.broadcast %cst_1 : f32 to vector<80x1xf32>
    %8 = arith.mulf %6, %7 : vector<80x1xf32>
    %9 = arith.subf %1, %8 : vector<80x1xf32>
    %cst_2 = arith.constant 7.500000e+00 : f32
    %10 = vector.broadcast %cst_2 : f32 to vector<80x1xf32>
    %11 = arith.cmpf olt, %9, %10 : vector<80x1xf32>
    %c0 = arith.constant 0 : index
    %c0_3 = arith.constant 0 : index
    %c0_4 = arith.constant 0 : index
    %12 = vector.load %arg1[%c0, %c0_3, %c0_4] : memref<1x80x128xbf16, #tpu.memory_space<vmem>>, vector<1x80x128xbf16>
    %13 = vector.shape_cast %12 : vector<1x80x128xbf16> to vector<80x128xbf16>
    %14 = arith.extf %13 : vector<80x128xbf16> to vector<80x128xf32>
    %c0_5 = arith.constant 0 : index
    %c0_6 = arith.constant 0 : index
    %15 = vector.load %arg2[%c0_5, %c0_6] : memref<1x128xf32, #tpu.memory_space<vmem>>, vector<1x128xf32>
    %16 = vector.broadcast %15 : vector<1x128xf32> to vector<80x128xf32>
    %17 = arith.mulf %14, %16 : vector<80x128xf32>
    %c0_7 = arith.constant 0 : index
    %c0_8 = arith.constant 0 : index
    %18 = vector.load %arg3[%c0_7, %c0_8] : memref<1x128xf32, #tpu.memory_space<vmem>>, vector<1x128xf32>
    %19 = vector.broadcast %18 : vector<1x128xf32> to vector<80x128xf32>
    %20 = arith.addf %17, %19 : vector<80x128xf32>
    %cst_9 = arith.constant 0.000000e+00 : f32
    %21 = vector.broadcast %cst_9 : f32 to vector<80x128xf32>
    %22 = arith.maximumf %20, %21 : vector<80x128xf32>
    %cst_10 = arith.constant 0.000000e+00 : f32
    %23 = vector.shape_cast %11 : vector<80x1xi1> to vector<80x1xi1>
    %24 = vector.broadcast %23 : vector<80x1xi1> to vector<80x128xi1>
    %25 = vector.broadcast %cst_10 : f32 to vector<80x128xf32>
    %26 = arith.select %24, %22, %25 : vector<80x128xi1>, vector<80x128xf32>
    %27 = arith.truncf %26 : vector<80x128xf32> to vector<80x128xbf16>
    %cst_11 = arith.constant 0.000000e+00 : bf16
    %28 = vector.broadcast %cst_11 : bf16 to vector<115x128xbf16>
    %c0_12 = arith.constant 0 : index
    %c0_13 = arith.constant 0 : index
    %29 = vector.load %arg11[%c0_12, %c0_13] : memref<115x128xbf16, #tpu.memory_space<vmem>>, vector<115x128xbf16>
    tpu.vector_store %arg11[%c0_12, %c0_13], %28 {strides = array<i32>} : memref<115x128xbf16, #tpu.memory_space<vmem>>, vector<115x128xbf16>,
    %c16 = arith.constant 16 : index
    %c0_14 = arith.constant 0 : index
    %30 = vector.load %arg11[%c16, %c0_14] : memref<115x128xbf16, #tpu.memory_space<vmem>>, vector<80x128xbf16>
    tpu.vector_store %arg11[%c16, %c0_14], %27 {strides = array<i32>} : memref<115x128xbf16, #tpu.memory_space<vmem>>, vector<80x128xbf16>,
    %cst_15 = arith.constant 0.000000e+00 : f32
    %31 = vector.broadcast %cst_15 : f32 to vector<80x128xf32>
    %c5 = arith.constant 5 : index
    %c0_16 = arith.constant 0 : index
    %32 = vector.load %arg11[%c5, %c0_16] : memref<115x128xbf16, #tpu.memory_space<vmem>>, vector<80x128xbf16>
    %c0_17 = arith.constant 0 : index
    %c0_18 = arith.constant 0 : index
    %c0_19 = arith.constant 0 : index
    %33 = vector.load %arg4[%c0_17, %c0_18, %c0_19] : memref<9x128x128xbf16, #tpu.memory_space<vmem>>, vector<1x128x128xbf16>
    %34 = vector.shape_cast %33 : vector<1x128x128xbf16> to vector<128x128xbf16>
    %cst_20 = arith.constant dense<0.000000e+00> : vector<80x128xf32>
    %35 = tpu.matmul %32, %34, %cst_20 {dimension_numbers = #tpu.dot_dimension_numbers<[1], [0], [0], [1], [0, 0, 1, 1], [], []>} : vector<80x128xbf16>, vector<128x128xbf16>, vector<80x128xf32> -> vector<80x128xf32>
    %36 = arith.addf %31, %35 : vector<80x128xf32>
    %c6 = arith.constant 6 : index
    %c0_21 = arith.constant 0 : index
    %37 = vector.load %arg11[%c6, %c0_21] : memref<115x128xbf16, #tpu.memory_space<vmem>>, vector<80x128xbf16>
    %c1 = arith.constant 1 : index
    %c0_22 = arith.constant 0 : index
    %c0_23 = arith.constant 0 : index
    %38 = vector.load %arg4[%c1, %c0_22, %c0_23] : memref<9x128x128xbf16, #tpu.memory_space<vmem>>, vector<1x128x128xbf16>
    %39 = vector.shape_cast %38 : vector<1x128x128xbf16> to vector<128x128xbf16>
    %cst_24 = arith.constant dense<0.000000e+00> : vector<80x128xf32>
    %40 = tpu.matmul %37, %39, %cst_24 {dimension_numbers = #tpu.dot_dimension_numbers<[1], [0], [0], [1], [0, 0, 1, 1], [], []>} : vector<80x128xbf16>, vector<128x128xbf16>, vector<80x128xf32> -> vector<80x128xf32>
    %41 = arith.addf %36, %40 : vector<80x128xf32>
    %c7 = arith.constant 7 : index
    %c0_25 = arith.constant 0 : index
    %42 = vector.load %arg11[%c7, %c0_25] : memref<115x128xbf16, #tpu.memory_space<vmem>>, vector<80x128xbf16>
    %c2 = arith.constant 2 : index
    %c0_26 = arith.constant 0 : index
    %c0_27 = arith.constant 0 : index
    %43 = vector.load %arg4[%c2, %c0_26, %c0_27] : memref<9x128x128xbf16, #tpu.memory_space<vmem>>, vector<1x128x128xbf16>
    %44 = vector.shape_cast %43 : vector<1x128x128xbf16> to vector<128x128xbf16>
    %cst_28 = arith.constant dense<0.000000e+00> : vector<80x128xf32>
    %45 = tpu.matmul %42, %44, %cst_28 {dimension_numbers = #tpu.dot_dimension_numbers<[1], [0], [0], [1], [0, 0, 1, 1], [], []>} : vector<80x128xbf16>, vector<128x128xbf16>, vector<80x128xf32> -> vector<80x128xf32>
    %46 = arith.addf %41, %45 : vector<80x128xf32>
    %c15 = arith.constant 15 : index
    %c0_29 = arith.constant 0 : index
    %47 = vector.load %arg11[%c15, %c0_29] : memref<115x128xbf16, #tpu.memory_space<vmem>>, vector<80x128xbf16>
    %c3 = arith.constant 3 : index
    %c0_30 = arith.constant 0 : index
    %c0_31 = arith.constant 0 : index
    %48 = vector.load %arg4[%c3, %c0_30, %c0_31] : memref<9x128x128xbf16, #tpu.memory_space<vmem>>, vector<1x128x128xbf16>
    %49 = vector.shape_cast %48 : vector<1x128x128xbf16> to vector<128x128xbf16>
    %cst_32 = arith.constant dense<0.000000e+00> : vector<80x128xf32>
    %50 = tpu.matmul %47, %49, %cst_32 {dimension_numbers = #tpu.dot_dimension_numbers<[1], [0], [0], [1], [0, 0, 1, 1], [], []>} : vector<80x128xbf16>, vector<128x128xbf16>, vector<80x128xf32> -> vector<80x128xf32>
    %51 = arith.addf %46, %50 : vector<80x128xf32>
    %c16_33 = arith.constant 16 : index
    %c0_34 = arith.constant 0 : index
    %52 = vector.load %arg11[%c16_33, %c0_34] : memref<115x128xbf16, #tpu.memory_space<vmem>>, vector<80x128xbf16>
    %c4 = arith.constant 4 : index
    %c0_35 = arith.constant 0 : index
    %c0_36 = arith.constant 0 : index
    %53 = vector.load %arg4[%c4, %c0_35, %c0_36] : memref<9x128x128xbf16, #tpu.memory_space<vmem>>, vector<1x128x128xbf16>
    %54 = vector.shape_cast %53 : vector<1x128x128xbf16> to vector<128x128xbf16>
    %cst_37 = arith.constant dense<0.000000e+00> : vector<80x128xf32>
    %55 = tpu.matmul %52, %54, %cst_37 {dimension_numbers = #tpu.dot_dimension_numbers<[1], [0], [0], [1], [0, 0, 1, 1], [], []>} : vector<80x128xbf16>, vector<128x128xbf16>, vector<80x128xf32> -> vector<80x128xf32>
    %56 = arith.addf %51, %55 : vector<80x128xf32>
    %c17 = arith.constant 17 : index
    %c0_38 = arith.constant 0 : index
    %57 = vector.load %arg11[%c17, %c0_38] : memref<115x128xbf16, #tpu.memory_space<vmem>>, vector<80x128xbf16>
    %c5_39 = arith.constant 5 : index
    %c0_40 = arith.constant 0 : index
    %c0_41 = arith.constant 0 : index
    %58 = vector.load %arg4[%c5_39, %c0_40, %c0_41] : memref<9x128x128xbf16, #tpu.memory_space<vmem>>, vector<1x128x128xbf16>
    %59 = vector.shape_cast %58 : vector<1x128x128xbf16> to vector<128x128xbf16>
    %cst_42 = arith.constant dense<0.000000e+00> : vector<80x128xf32>
    %60 = tpu.matmul %57, %59, %cst_42 {dimension_numbers = #tpu.dot_dimension_numbers<[1], [0], [0], [1], [0, 0, 1, 1], [], []>} : vector<80x128xbf16>, vector<128x128xbf16>, vector<80x128xf32> -> vector<80x128xf32>
    %61 = arith.addf %56, %60 : vector<80x128xf32>
    %c25 = arith.constant 25 : index
    %c0_43 = arith.constant 0 : index
    %62 = vector.load %arg11[%c25, %c0_43] : memref<115x128xbf16, #tpu.memory_space<vmem>>, vector<80x128xbf16>
    %c6_44 = arith.constant 6 : index
    %c0_45 = arith.constant 0 : index
    %c0_46 = arith.constant 0 : index
    %63 = vector.load %arg4[%c6_44, %c0_45, %c0_46] : memref<9x128x128xbf16, #tpu.memory_space<vmem>>, vector<1x128x128xbf16>
    %64 = vector.shape_cast %63 : vector<1x128x128xbf16> to vector<128x128xbf16>
    %cst_47 = arith.constant dense<0.000000e+00> : vector<80x128xf32>
    %65 = tpu.matmul %62, %64, %cst_47 {dimension_numbers = #tpu.dot_dimension_numbers<[1], [0], [0], [1], [0, 0, 1, 1], [], []>} : vector<80x128xbf16>, vector<128x128xbf16>, vector<80x128xf32> -> vector<80x128xf32>
    %66 = arith.addf %61, %65 : vector<80x128xf32>
    %c26 = arith.constant 26 : index
    %c0_48 = arith.constant 0 : index
    %67 = vector.load %arg11[%c26, %c0_48] : memref<115x128xbf16, #tpu.memory_space<vmem>>, vector<80x128xbf16>
    %c7_49 = arith.constant 7 : index
    %c0_50 = arith.constant 0 : index
    %c0_51 = arith.constant 0 : index
    %68 = vector.load %arg4[%c7_49, %c0_50, %c0_51] : memref<9x128x128xbf16, #tpu.memory_space<vmem>>, vector<1x128x128xbf16>
    %69 = vector.shape_cast %68 : vector<1x128x128xbf16> to vector<128x128xbf16>
    %cst_52 = arith.constant dense<0.000000e+00> : vector<80x128xf32>
    %70 = tpu.matmul %67, %69, %cst_52 {dimension_numbers = #tpu.dot_dimension_numbers<[1], [0], [0], [1], [0, 0, 1, 1], [], []>} : vector<80x128xbf16>, vector<128x128xbf16>, vector<80x128xf32> -> vector<80x128xf32>
    %71 = arith.addf %66, %70 : vector<80x128xf32>
    %c27 = arith.constant 27 : index
    %c0_53 = arith.constant 0 : index
    %72 = vector.load %arg11[%c27, %c0_53] : memref<115x128xbf16, #tpu.memory_space<vmem>>, vector<80x128xbf16>
    %c8 = arith.constant 8 : index
    %c0_54 = arith.constant 0 : index
    %c0_55 = arith.constant 0 : index
    %73 = vector.load %arg4[%c8, %c0_54, %c0_55] : memref<9x128x128xbf16, #tpu.memory_space<vmem>>, vector<1x128x128xbf16>
    %74 = vector.shape_cast %73 : vector<1x128x128xbf16> to vector<128x128xbf16>
    %cst_56 = arith.constant dense<0.000000e+00> : vector<80x128xf32>
    %75 = tpu.matmul %72, %74, %cst_56 {dimension_numbers = #tpu.dot_dimension_numbers<[1], [0], [0], [1], [0, 0, 1, 1], [], []>} : vector<80x128xbf16>, vector<128x128xbf16>, vector<80x128xf32> -> vector<80x128xf32>
    %76 = arith.addf %71, %75 : vector<80x128xf32>
    %cst_57 = arith.constant 0.000000e+00 : f32
    %77 = vector.shape_cast %11 : vector<80x1xi1> to vector<80x1xi1>
    %78 = vector.broadcast %77 : vector<80x1xi1> to vector<80x128xi1>
    %79 = vector.broadcast %cst_57 : f32 to vector<80x128xf32>
    %80 = arith.select %78, %76, %79 : vector<80x128xi1>, vector<80x128xf32>
    %81 = arith.truncf %80 : vector<80x128xf32> to vector<80x128xbf16>
    %c0_58 = arith.constant 0 : index
    %c0_59 = arith.constant 0 : index
    %c0_60 = arith.constant 0 : index
    %82 = vector.load %arg7[%c0_58, %c0_59, %c0_60] : memref<1x80x128xbf16, #tpu.memory_space<vmem>>, vector<1x80x128xbf16>
    %83 = vector.shape_cast %82 : vector<1x80x128xbf16> to vector<80x128xbf16>
    %84 = vector.shape_cast %81 : vector<80x128xbf16> to vector<1x80x128xbf16>
    tpu.vector_store %arg7[%c0_58, %c0_59, %c0_60], %84 {strides = array<i32>} : memref<1x80x128xbf16, #tpu.memory_space<vmem>>, vector<1x80x128xbf16>,
    %cst_61 = arith.constant dense<0.000000e+00> : vector<128xf32>
    %85 = vector.multi_reduction <add>, %80, %cst_61 [0] : vector<80x128xf32> to vector<128xf32>
    %86 = vector.shape_cast %85 : vector<128xf32> to vector<1x128xf32>
    %87 = vector.shape_cast %86 : vector<1x128xf32> to vector<1x128xf32>
    %88 = vector.broadcast %87 : vector<1x128xf32> to vector<8x128xf32>
    %89 = arith.mulf %80, %80 : vector<80x128xf32>
    %cst_62 = arith.constant dense<0.000000e+00> : vector<128xf32>
    %90 = vector.multi_reduction <add>, %89, %cst_62 [0] : vector<80x128xf32> to vector<128xf32>
    %91 = vector.shape_cast %90 : vector<128xf32> to vector<1x128xf32>
    %92 = vector.shape_cast %91 : vector<1x128xf32> to vector<1x128xf32>
    %93 = vector.broadcast %92 : vector<1x128xf32> to vector<8x128xf32>
    %94 = tpu.iota {dimensions = array<i32: 0>} : vector<8x128xi32>
    %cst_63 = arith.constant 0.000000e+00 : f32
    %95 = vector.broadcast %cst_63 : f32 to vector<8x128xf32>
    %c0_i32 = arith.constant 0 : i32
    %96 = vector.broadcast %c0_i32 : i32 to vector<8x128xi32>
    %97 = arith.cmpi eq, %94, %96 : vector<8x128xi32>
    %c1_i32 = arith.constant 1 : i32
    %98 = vector.broadcast %c1_i32 : i32 to vector<8x128xi32>
    %99 = arith.cmpi eq, %94, %98 : vector<8x128xi32>
    %100 = arith.select %99, %93, %95 : vector<8x128xi1>, vector<8x128xf32>
    %101 = arith.select %97, %88, %100 : vector<8x128xi1>, vector<8x128xf32>
    %c0_64 = arith.constant 0 : index
    %c0_65 = arith.constant 0 : index
    %102 = vector.load %arg8[%c0_64, %c0_65] : memref<8x128xf32, #tpu.memory_space<vmem>>, vector<8x128xf32>
    tpu.vector_store %arg8[%c0_64, %c0_65], %101 {strides = array<i32>} : memref<8x128xf32, #tpu.memory_space<vmem>>, vector<8x128xf32>,
    %c0_66 = arith.constant 0 : index
    %c0_67 = arith.constant 0 : index
    %c0_68 = arith.constant 0 : index
    %103 = vector.load %arg5[%c0_66, %c0_67, %c0_68] : memref<1x80x4xbf16, #tpu.memory_space<vmem>>, vector<1x80x4xbf16>
    %104 = vector.shape_cast %103 : vector<1x80x4xbf16> to vector<80x4xbf16>
    %c0_69 = arith.constant 0 : index
    %c0_70 = arith.constant 0 : index
    %105 = vector.load %arg6[%c0_69, %c0_70] : memref<4x128xbf16, #tpu.memory_space<vmem>>, vector<4x128xbf16>
    %cst_71 = arith.constant dense<0.000000e+00> : vector<80x128xf32>
    %106 = tpu.matmul %104, %105, %cst_71 {dimension_numbers = #tpu.dot_dimension_numbers<[1], [0], [0], [1], [0, 0, 1, 1], [], []>} : vector<80x4xbf16>, vector<4x128xbf16>, vector<80x128xf32> -> vector<80x128xf32>
    %107 = arith.truncf %106 : vector<80x128xf32> to vector<80x128xbf16>
    %c0_72 = arith.constant 0 : index
    %c0_73 = arith.constant 0 : index
    %c0_74 = arith.constant 0 : index
    %108 = vector.load %arg9[%c0_72, %c0_73, %c0_74] : memref<1x80x128xbf16, #tpu.memory_space<vmem>>, vector<1x80x128xbf16>
    %109 = vector.shape_cast %108 : vector<1x80x128xbf16> to vector<80x128xbf16>
    %110 = vector.shape_cast %107 : vector<80x128xbf16> to vector<1x80x128xbf16>
    tpu.vector_store %arg9[%c0_72, %c0_73, %c0_74], %110 {strides = array<i32>} : memref<1x80x128xbf16, #tpu.memory_space<vmem>>, vector<1x80x128xbf16>,
    %cst_75 = arith.constant dense<0.000000e+00> : vector<128xf32>
    %111 = vector.multi_reduction <add>, %106, %cst_75 [0] : vector<80x128xf32> to vector<128xf32>
    %112 = vector.shape_cast %111 : vector<128xf32> to vector<1x128xf32>
    %113 = vector.shape_cast %112 : vector<1x128xf32> to vector<1x128xf32>
    %114 = vector.broadcast %113 : vector<1x128xf32> to vector<8x128xf32>
    %115 = arith.mulf %106, %106 : vector<80x128xf32>
    %cst_76 = arith.constant dense<0.000000e+00> : vector<128xf32>
    %116 = vector.multi_reduction <add>, %115, %cst_76 [0] : vector<80x128xf32> to vector<128xf32>
    %117 = vector.shape_cast %116 : vector<128xf32> to vector<1x128xf32>
    %118 = vector.shape_cast %117 : vector<1x128xf32> to vector<1x128xf32>
    %119 = vector.broadcast %118 : vector<1x128xf32> to vector<8x128xf32>
    %120 = tpu.iota {dimensions = array<i32: 0>} : vector<8x128xi32>
    %cst_77 = arith.constant 0.000000e+00 : f32
    %121 = vector.broadcast %cst_77 : f32 to vector<8x128xf32>
    %c0_i32_78 = arith.constant 0 : i32
    %122 = vector.broadcast %c0_i32_78 : i32 to vector<8x128xi32>
    %123 = arith.cmpi eq, %120, %122 : vector<8x128xi32>
    %c1_i32_79 = arith.constant 1 : i32
    %124 = vector.broadcast %c1_i32_79 : i32 to vector<8x128xi32>
    %125 = arith.cmpi eq, %120, %124 : vector<8x128xi32>
    %126 = arith.select %125, %119, %121 : vector<8x128xi1>, vector<8x128xf32>
    %127 = arith.select %123, %114, %126 : vector<8x128xi1>, vector<8x128xf32>
    %c0_80 = arith.constant 0 : index
    %c0_81 = arith.constant 0 : index
    %128 = vector.load %arg10[%c0_80, %c0_81] : memref<8x128xf32, #tpu.memory_space<vmem>>, vector<8x128xf32>
    tpu.vector_store %arg10[%c0_80, %c0_81], %127 {strides = array<i32>} : memref<8x128xf32, #tpu.memory_space<vmem>>, vector<8x128xf32>,
    return
  }
  func.func @transform_0(%arg0: i32) -> (i32, i32, i32) {
    %c0_i32 = arith.constant 0 : i32
    %c0_i32_0 = arith.constant 0 : i32
    %c0_i32_1 = arith.constant 0 : i32
    return %arg0, %c0_i32, %c0_i32_0 : i32, i32, i32
  }
  func.func @transform_1(%arg0: i32) -> (i32, i32) {
    %c0_i32 = arith.constant 0 : i32
    %c0_i32_0 = arith.constant 0 : i32
    %c0_i32_1 = arith.constant 0 : i32
    return %c0_i32, %c0_i32_0 : i32, i32
  }
  func.func @transform_2(%arg0: i32) -> (i32, i32) {
    %c0_i32 = arith.constant 0 : i32
    %c0_i32_0 = arith.constant 0 : i32
    %c0_i32_1 = arith.constant 0 : i32
    return %c0_i32, %c0_i32_0 : i32, i32
  }
  func.func @transform_3(%arg0: i32) -> (i32, i32, i32) {
    %c0_i32 = arith.constant 0 : i32
    %c0_i32_0 = arith.constant 0 : i32
    %c0_i32_1 = arith.constant 0 : i32
    %c0_i32_2 = arith.constant 0 : i32
    return %c0_i32, %c0_i32_0, %c0_i32_1 : i32, i32, i32
  }
  func.func @transform_4(%arg0: i32) -> (i32, i32, i32) {
    %c0_i32 = arith.constant 0 : i32
    %c0_i32_0 = arith.constant 0 : i32
    %c0_i32_1 = arith.constant 0 : i32
    return %arg0, %c0_i32, %c0_i32_0 : i32, i32, i32
  }
  func.func @transform_5(%arg0: i32) -> (i32, i32) {
    %c0_i32 = arith.constant 0 : i32
    %c0_i32_0 = arith.constant 0 : i32
    %c0_i32_1 = arith.constant 0 : i32
    return %c0_i32, %c0_i32_0 : i32, i32
  }
  func.func @transform_6(%arg0: i32) -> (i32, i32, i32) {
    %c0_i32 = arith.constant 0 : i32
    %c0_i32_0 = arith.constant 0 : i32
    %c0_i32_1 = arith.constant 0 : i32
    return %arg0, %c0_i32, %c0_i32_0 : i32, i32, i32
  }
  func.func @transform_7(%arg0: i32) -> (i32, i32) {
    %c0_i32 = arith.constant 0 : i32
    %c0_i32_0 = arith.constant 0 : i32
    return %arg0, %c0_i32 : i32, i32
  }
  func.func @transform_8(%arg0: i32) -> (i32, i32, i32) {
    %c0_i32 = arith.constant 0 : i32
    %c0_i32_0 = arith.constant 0 : i32
    %c0_i32_1 = arith.constant 0 : i32
    return %arg0, %c0_i32, %c0_i32_0 : i32, i32, i32
  }
  func.func @transform_9(%arg0: i32) -> (i32, i32) {
    %c0_i32 = arith.constant 0 : i32
    %c0_i32_0 = arith.constant 0 : i32
    return %arg0, %c0_i32 : i32, i32
  }
}

</mosaic_0001>

<llo_original>
// kernel: resblk_forward.3
$region0: #{resblk_forward.3}
  #allocation0 [shape = 'u32[]', space=smem, size = 0x4, offset = 0x4, fixed_abs, tag = 'smem constant byte address 0x4 - core index']
  #allocation1 [shape = 'u32[144,128]{1,0:T(1,128)}', space=vmem, size = 0x12000, scoped, tag = 'internal scratch']
  %s0 = inlined_call_operand.vmem [shape: bf16[128,128], index: 0, kind: input, shape index: {}]
  %s1 = inlined_call_operand.vmem [shape: bf16[128,128], index: 1, kind: input, shape index: {}]
  %s2 = inlined_call_operand.vmem [shape: bf16[128,128], index: 2, kind: output, shape index: {0}]
  %s3 = inlined_call_operand.vmem [shape: f32[16,128], index: 3, kind: output, shape index: {1}]
  %4 = xla_tuple %s2, %s3
  %s5 = sld [smem:[#allocation0]]
  $region49: #{resblk_forward.3} parent=0
    _
  %s7 = ssub.s32 1, %s5
  %s8 = scalar_select 0, %s7, %s5
  loop: start=0, step=1, limit=4
  $region2: #{resblk_forward.3} parent=0 // loop_pre_header
    _
  $region3: #{resblk_forward.3} parent=0 // loop_header
    %s10 = sphi 0, %s14
    %p11 = scmp.ge.s32.totalorder %s10, 4
    %s20 = sphi 0, %s22
    %s23 = sphi 0, %s20
    %s24 = sphi 0, %s23
    %s40 = sphi 0, %s24
    %s44 = sphi 0, %s44
    %s46 = sphi 0, %s44
    %s47 = sphi 0, %s46
    %s61 = sphi 0, %s47
    %s67 = sphi 0, %s69
    %s70 = sphi 0, %s67
    %s71 = sphi 0, %s70
    %s87 = sphi 0, %s71
    %s93 = sphi 0, %s95
    %s96 = sphi 0, %s93
    %s97 = sphi 0, %s96
    %s113 = sphi 0, %s97
  $region4: #{resblk_forward.3} parent=0 // loop_header_branch
    %13 = sbr.rel (%p11) target = $region8
  $region5: #{resblk_forward.3} parent=0 // loop_body
    %s15 = ssub.s32 %s10, 1
    %s16 = ssub.s32 %s10, 2
    %s17 = sadd.s32 %s10, 1
    %s18 = ssub.s32 %s10, %s17
    %p19 = scmp.eq.s32.totalorder %s18, 0
    %s21 = sadd.s32 %s20, 1
    %s22 = scalar_select %p19, %s20, %s21
    %p25 = pneg %p19
    %p26 = scmp.eq.s32.totalorder %s10, 1
    %p27 = por %p25, %p26
    %p28 = scmp.ne.s32.totalorder %s20, %s23
    %p29 = scmp.eq.s32.totalorder %s10, 0
    %p30 = por %p28, %p29
    %p31 = scmp.ne.s32.totalorder %s20, %s23
    %p32 = scmp.eq.s32.totalorder %s15, 1
    %p33 = por %p31, %p32
    %p34 = scmp.ne.s32.totalorder %s23, %s24
    %p35 = scmp.eq.s32.totalorder %s15, 0
    %p36 = por %p34, %p35
    %p37 = scmp.ne.s32.totalorder %s23, %s24
    %p38 = scmp.eq.s32.totalorder %s16, 1
    %p39 = por %p37, %p38
    %p41 = scmp.ne.s32.totalorder %s24, %s40
    %p42 = scmp.eq.s32.totalorder %s16, 0
    %p43 = por %p41, %p42
    %s45 = sadd.s32 %s44, 1
    %p48 = scmp.eq.s32.totalorder %s10, 1
    %p49 = scmp.ne.s32.totalorder %s44, %s46
    %p50 = scmp.eq.s32.totalorder %s10, 0
    %p51 = por %p49, %p50
    %p52 = scmp.ne.s32.totalorder %s44, %s46
    %p53 = scmp.eq.s32.totalorder %s15, 1
    %p54 = por %p52, %p53
    %p55 = scmp.ne.s32.totalorder %s46, %s47
    %p56 = scmp.eq.s32.totalorder %s15, 0
    %p57 = por %p55, %p56
    %p58 = scmp.ne.s32.totalorder %s46, %s47
    %p59 = scmp.eq.s32.totalorder %s16, 1
    %p60 = por %p58, %p59
    %p62 = scmp.ne.s32.totalorder %s47, %s61
    %p63 = scmp.eq.s32.totalorder %s16, 0
    %p64 = por %p62, %p63
    %s65 = ssub.s32 %s10, %s17
    %p66 = scmp.eq.s32.totalorder %s65, 0
    %s68 = sadd.s32 %s67, 1
    %s69 = scalar_select %p66, %s67, %s68
    %p72 = pneg %p66
    %p73 = scmp.eq.s32.totalorder %s10, 1
    %p74 = por %p72, %p73
    %p75 = scmp.ne.s32.totalorder %s67, %s70
    %p76 = scmp.eq.s32.totalorder %s10, 0
    %p77 = por %p75, %p76
    %p78 = scmp.ne.s32.totalorder %s67, %s70
    %p79 = scmp.eq.s32.totalorder %s15, 1
    %p80 = por %p78, %p79
    %p81 = scmp.ne.s32.totalorder %s70, %s71
    %p82 = scmp.eq.s32.totalorder %s15, 0
    %p83 = por %p81, %p82
    %p84 = scmp.ne.s32.totalorder %s70, %s71
    %p85 = scmp.eq.s32.totalorder %s16, 1
    %p86 = por %p84, %p85
    %p88 = scmp.ne.s32.totalorder %s71, %s87
    %p89 = scmp.eq.s32.totalorder %s16, 0
    %p90 = por %p88, %p89
    %s91 = ssub.s32 %s10, %s17
    %p92 = scmp.eq.s32.totalorder %s91, 0
    %s94 = sadd.s32 %s93, 1
    %s95 = scalar_select %p92, %s93, %s94
    %p98 = pneg %p92
    %p99 = scmp.eq.s32.totalorder %s10, 1
    %p100 = por %p98, %p99
    %p101 = scmp.ne.s32.totalorder %s93, %s96
    %p102 = scmp.eq.s32.totalorder %s10, 0
    %p103 = por %p101, %p102
    %p104 = scmp.ne.s32.totalorder %s93, %s96
    %p105 = scmp.eq.s32.totalorder %s15, 1
    %p106 = por %p104, %p105
    %p107 = scmp.ne.s32.totalorder %s96, %s97
    %p108 = scmp.eq.s32.totalorder %s15, 0
    %p109 = por %p107, %p108
    %p110 = scmp.ne.s32.totalorder %s96, %s97
    %p111 = scmp.eq.s32.totalorder %s16, 1
    %p112 = por %p110, %p111
    %p114 = scmp.ne.s32.totalorder %s97, %s113
    %p115 = scmp.eq.s32.totalorder %s16, 0
    %p116 = por %p114, %p115
    %p117 = scmp.le.s32.totalorder 1, %s10
    %p118 = scmp.lt.s32.totalorder %s10, 3
    %p119 = pnand %p117, %p118
    %p120 = pneg %p119
    // Predicated region
    $region9: #{resblk_forward.3} parent=5 // pred_check
      _
    $region10: #{resblk_forward.3} parent=5 // pred_check_branch
      %122 = sbr.rel (%p119) target = $region12
    $region11: #{resblk_forward.3} parent=5 // pred_region
      %s123 = ssub.s32 %s10, 1
      // Predicated region
      $region13: #{resblk_forward.3} parent=11 // pred_check
        %p124 = pneg %p57
      $region14: #{resblk_forward.3} parent=11 // pred_check_branch
        %126 = sbr.rel (%p124) target = $region16
      $region15: #{resblk_forward.3} parent=11 // pred_region
        _
      $region16: #{resblk_forward.3} parent=11 // pred_fallthru
        _
    $region12: #{resblk_forward.3} parent=5 // pred_fallthru
      _
    %p127 = scmp.lt.s32.totalorder %s10, 2
    // Predicated region
    $region17: #{resblk_forward.3} parent=5 // pred_check
      %p128 = pneg %p127
    $region18: #{resblk_forward.3} parent=5 // pred_check_branch
      %130 = sbr.rel (%p128) target = $region20
    $region19: #{resblk_forward.3} parent=5 // pred_region
      // Predicated region
      $region21: #{resblk_forward.3} parent=19 // pred_check
        %p131 = pneg %p30
      $region22: #{resblk_forward.3} parent=19 // pred_check_branch
        %133 = sbr.rel (%p131) target = $region24
      $region23: #{resblk_forward.3} parent=19 // pred_region
        %s134 = smul.u32 8, %s10
        %p135 = scmp.lt.s32.totalorder %s134, 15
        %s136 = scalar_select %p135, %s134, 15
        %s137 = smul.addr %s136, 4
        %s138 = scalar_lea.vmem %s0, %s137
        %s139 = smul.u32 8, %s10
      $region24: #{resblk_forward.3} parent=19 // pred_fallthru
        _
    $region20: #{resblk_forward.3} parent=5 // pred_fallthru
      _
    %p140 = scmp.le.s32.totalorder 1, %s10
    %p141 = scmp.lt.s32.totalorder %s10, 3
    %p142 = pnand %p140, %p141
    %p143 = pneg %p142
    // Predicated region
    $region25: #{resblk_forward.3} parent=5 // pred_check
      _
    $region26: #{resblk_forward.3} parent=5 // pred_check_branch
      %145 = sbr.rel (%p142) target = $region28
    $region27: #{resblk_forward.3} parent=5 // pred_region
      %s146 = ssub.s32 %s10, 1
      %s147 = smul.u32 8, %s15
      %p148 = scmp.lt.s32.totalorder %s147, 15
      %s149 = scalar_select %p148, %s147, 15
      %s150 = smul.addr %s149, 4
      %s151 = scalar_lea.vmem %s0, %s150
      %p152 = pneg %p36
      %p153 = pneg %p33
      %p154 = pneg %p57
      %p155 = pneg %p54
      %p156 = pneg %p83
      %p157 = pneg %p80
      %s158 = smul.u32 8, %s15
      %p159 = scmp.lt.s32.totalorder %s158, 15
      %s160 = scalar_select %p159, %s158, 15
      %s161 = smul.addr %s160, 4
      %s162 = scalar_lea.vmem %s2, %s161
      %p163 = pneg %p109
      %p164 = pneg %p106
      %p165 = scmp.lt.s32.totalorder %s15, 1
      %s166 = scalar_select %p165, %s15, 1
      %s167 = smul.addr %s166, 8
      %s168 = scalar_lea.vmem %s3, %s167
      %s169 = smul.u32 8, %s15
      %p170 = scmp.lt.s32.totalorder %s169, 15
      %s171 = scalar_select %p170, %s169, 15
      %s172 = smul.addr %s171, 4
      %s173 = scalar_lea.vmem %s0, %s172
      %s174 = smul.u32 8, %s15
      %s175 = smul.u32 8, %s15
      %p176 = scmp.lt.s32.totalorder %s175, 15
      %s177 = scalar_select %p176, %s175, 15
      %s178 = smul.addr %s177, 4
      %s179 = scalar_lea.vmem %s2, %s178
      %s180 = smul.u32 8, %s15
      %p181 = scmp.lt.s32.totalorder %s15, 1
      %s182 = scalar_select %p181, %s15, 1
      %s183 = smul.addr %s182, 8
      %s184 = scalar_lea.vmem %s3, %s183
      %v186 = vld [vmem:[%s173] sm:$0xf]
      %v187 = vld [vmem:[%s173 + $0x4] sm:$0xf]
      %v188 = vld [vmem:[%s173 + $0x8] sm:$0xf]
      %v189 = vld [vmem:[%s173 + $0xc] sm:$0xf]
      %v190 = vld [vmem:[%s173 + $0x10] sm:$0xf]
      %v191 = vld [vmem:[%s173 + $0x14] sm:$0xf]
      %v192 = vld [vmem:[%s173 + $0x18] sm:$0xf]
      %v193 = vld [vmem:[%s173 + $0x1c] sm:$0xf]
      %v194 = vld [vmem:[%s1] sm:$0xf]
      %v195 = vld [vmem:[%s1 + $0x4] sm:$0xf]
      %v196 = vld [vmem:[%s1 + $0x8] sm:$0xf]
      %v197 = vld [vmem:[%s1 + $0xc] sm:$0xf]
      %v198 = vld [vmem:[%s1 + $0x10] sm:$0xf]
      %v199 = vld [vmem:[%s1 + $0x14] sm:$0xf]
      %v200 = vld [vmem:[%s1 + $0x18] sm:$0xf]
      %v201 = vld [vmem:[%s1 + $0x1c] sm:$0xf]
      %v202 = vld [vmem:[%s1 + $0x20] sm:$0xf]
      %v203 = vld [vmem:[%s1 + $0x24] sm:$0xf]
      %v204 = vld [vmem:[%s1 + $0x28] sm:$0xf]
      %v205 = vld [vmem:[%s1 + $0x2c] sm:$0xf]
      %v206 = vld [vmem:[%s1 + $0x30] sm:$0xf]
      %v207 = vld [vmem:[%s1 + $0x34] sm:$0xf]
      %v208 = vld [vmem:[%s1 + $0x38] sm:$0xf]
      %v209 = vld [vmem:[%s1 + $0x3c] sm:$0xf]
      %v218 = vunpack.c.l.b16 %v186
      %v219 = vunpack.c.l.b16 %v187
      %v220 = vunpack.c.l.b16 %v188
      %v221 = vunpack.c.l.b16 %v189
      %v222 = vunpack.c.l.b16 %v190
      %v223 = vunpack.c.l.b16 %v191
      %v224 = vunpack.c.l.b16 %v192
      %v225 = vunpack.c.l.b16 %v193
      %v226 = vpack.c.b16 %v219, %v218
      %v227 = vpack.c.b16 %v221, %v220
      %v228 = vpack.c.b16 %v223, %v222
      %v229 = vpack.c.b16 %v225, %v224
      %v250 = vunpack.c.l.b16 %v194
      %v251 = vunpack.c.l.b16 %v195
      %v252 = vunpack.c.l.b16 %v196
      %v253 = vunpack.c.l.b16 %v197
      %v254 = vunpack.c.l.b16 %v198
      %v255 = vunpack.c.l.b16 %v199
      %v256 = vunpack.c.l.b16 %v200
      %v257 = vunpack.c.l.b16 %v201
      %v258 = vunpack.c.l.b16 %v202
      %v259 = vunpack.c.l.b16 %v203
      %v260 = vunpack.c.l.b16 %v204
      %v261 = vunpack.c.l.b16 %v205
      %v262 = vunpack.c.l.b16 %v206
      %v263 = vunpack.c.l.b16 %v207
      %v264 = vunpack.c.l.b16 %v208
      %v265 = vunpack.c.l.b16 %v209
      %v266 = vpack.c.b16 %v251, %v250
      %v267 = vpack.c.b16 %v253, %v252
      %v268 = vpack.c.b16 %v255, %v254
      %v269 = vpack.c.b16 %v257, %v256
      %v270 = vpack.c.b16 %v259, %v258
      %v271 = vpack.c.b16 %v261, %v260
      %v272 = vpack.c.b16 %v263, %v262
      %v273 = vpack.c.b16 %v265, %v264
      %282 = vmatprep.subr.bf16.mxu0 0
      %283 = vmatpush1.bf16.msra.mxu0 %v273
      %284 = vmatprep.subr.bf16.mxu0 0
      %285 = vmatpush1.bf16.msra.mxu0 %v272
      %286 = vmatprep.subr.bf16.mxu0 0
      %287 = vmatpush1.bf16.msra.mxu0 %v271
      %288 = vmatprep.subr.bf16.mxu0 0
      %289 = vmatpush1.bf16.msra.mxu0 %v270
      %290 = vmatprep.subr.bf16.mxu0 0
      %291 = vmatpush1.bf16.msra.mxu0 %v269
      %292 = vmatprep.subr.bf16.mxu0 0
      %293 = vmatpush1.bf16.msra.mxu0 %v268
      %294 = vmatprep.subr.bf16.mxu0 0
      %295 = vmatpush1.bf16.msra.mxu0 %v267
      %296 = vmatprep.subr.bf16.mxu0 0
      %297 = vmatpush1.bf16.msra.mxu0 %v266
      %298 = vmatprep.subr.bf16.mxu0 0
      %299 = vmatpush2.bf16.msra.mxu0 0
      %300 = vmatprep.subr.bf16.mxu0 0
      %301 = vmatpush2.bf16.msra.mxu0 0
      %302 = vmatprep.subr.bf16.mxu0 0
      %303 = vmatpush2.bf16.msra.mxu0 0
      %304 = vmatprep.subr.bf16.mxu0 0
      %305 = vmatpush2.bf16.msra.mxu0 0
      %306 = vmatprep.subr.bf16.mxu0 0
      %307 = vmatpush2.bf16.msra.mxu0 0
      %308 = vmatprep.subr.bf16.mxu0 0
      %309 = vmatpush2.bf16.msra.mxu0 0
      %310 = vmatprep.subr.bf16.mxu0 0
      %311 = vmatpush2.bf16.msra.mxu0 0
      %312 = vmatprep.subr.bf16.mxu0 0
      %313 = vmatpush2.bf16.msra.mxu0 0
      %314 = vmatprep.mubr.bf16.mxu0 0
      %315 = vmatmul.mubr.bf16.gmra.mxu0 %v226
      %v316 = vpop.f32.mrf.mxu0
      %v317 = vadd.f32 0.0, %v316
      %v318 = vpop.f32.mrf.mxu0
      %v319 = vpop.f32.mrf.mxu0
      %v320 = vadd.f32 0.0, %v319
      %v321 = vpop.f32.mrf.mxu0
      %322 = vmatprep.mubr.bf16.mxu0 0
      %323 = vmatmul.mubr.bf16.gmra.mxu0 %v227
      %v324 = vpop.f32.mrf.mxu0
      %v325 = vadd.f32 0.0, %v324
      %v326 = vpop.f32.mrf.mxu0
      %v327 = vpop.f32.mrf.mxu0
      %v328 = vadd.f32 0.0, %v327
      %v329 = vpop.f32.mrf.mxu0
      %330 = vmatprep.mubr.bf16.mxu0 0
      %331 = vmatmul.mubr.bf16.gmra.mxu0 %v228
      %v332 = vpop.f32.mrf.mxu0
      %v333 = vadd.f32 0.0, %v332
      %v334 = vpop.f32.mrf.mxu0
      %v335 = vpop.f32.mrf.mxu0
      %v336 = vadd.f32 0.0, %v335
      %v337 = vpop.f32.mrf.mxu0
      %338 = vmatprep.mubr.bf16.mxu0 0
      %339 = vmatmul.mubr.bf16.gmra.mxu0 %v229
      %v340 = vpop.f32.mrf.mxu0
      %v341 = vadd.f32 0.0, %v340
      %v342 = vpop.f32.mrf.mxu0
      %v343 = vpop.f32.mrf.mxu0
      %v344 = vadd.f32 0.0, %v343
      %v345 = vpop.f32.mrf.mxu0
      %346 = vdwg.mxu0
      %v347 = vpack.c.bf16 %v320, %v317
      %v348 = vpack.c.bf16 %v328, %v325
      %v349 = vpack.c.bf16 %v336, %v333
      %v350 = vpack.c.bf16 %v344, %v341
      %v355 = vunpack.c.l.b16 %v347
      %v356 = vunpack.c.h.b16 %v347
      %v357 = vunpack.c.l.b16 %v348
      %v358 = vunpack.c.h.b16 %v348
      %v359 = vunpack.c.l.b16 %v349
      %v360 = vunpack.c.h.b16 %v349
      %v361 = vunpack.c.l.b16 %v350
      %v362 = vunpack.c.h.b16 %v350
      %v363 = vpack.c.b16 %v355, %v355
      %v364 = vpack.c.b16 %v356, %v356
      %v365 = vpack.c.b16 %v357, %v357
      %v366 = vpack.c.b16 %v358, %v358
      %v367 = vpack.c.b16 %v359, %v359
      %v368 = vpack.c.b16 %v360, %v360
      %v369 = vpack.c.b16 %v361, %v361
      %v370 = vpack.c.b16 %v362, %v362
      %379 = vst [vmem:[%s179] sm:$0xf] %v363
      %380 = vst [vmem:[%s179 + $0x4] sm:$0xf] %v364
      %381 = vst [vmem:[%s179 + $0x8] sm:$0xf] %v365
      %382 = vst [vmem:[%s179 + $0xc] sm:$0xf] %v366
      %383 = vst [vmem:[%s179 + $0x10] sm:$0xf] %v367
      %384 = vst [vmem:[%s179 + $0x14] sm:$0xf] %v368
      %385 = vst [vmem:[%s179 + $0x18] sm:$0xf] %v369
      %386 = vst [vmem:[%s179 + $0x1c] sm:$0xf] %v370
      %v387 = vadd.f32 %v317, %v320
      %v388 = vadd.f32 %v387, %v325
      %v389 = vadd.f32 %v388, %v328
      %v390 = vadd.f32 %v389, %v333
      %v391 = vadd.f32 %v390, %v336
      %v392 = vadd.f32 %v391, %v341
      %v393 = vadd.f32 %v392, %v344
      %v394 = vrot.slane %v393, 4
      %v395 = vadd.f32 %v393, %v394
      %v396 = vrot.slane %v395, 2
      %v397 = vadd.f32 %v395, %v396
      %v398 = vrot.slane %v397, 1
      %v399 = vadd.f32 %v397, %v398
      %v400 = vmul.f32 %v317, %v317
      %v401 = vmul.f32 %v320, %v320
      %v402 = vmul.f32 %v325, %v325
      %v403 = vmul.f32 %v328, %v328
      %v404 = vmul.f32 %v333, %v333
      %v405 = vmul.f32 %v336, %v336
      %v406 = vmul.f32 %v341, %v341
      %v407 = vmul.f32 %v344, %v344
      %v408 = vadd.f32 %v400, %v401
      %v409 = vadd.f32 %v408, %v402
      %v410 = vadd.f32 %v409, %v403
      %v411 = vadd.f32 %v410, %v404
      %v412 = vadd.f32 %v411, %v405
      %v413 = vadd.f32 %v412, %v406
      %v414 = vadd.f32 %v413, %v407
      %v415 = vrot.slane %v414, 4
      %v416 = vadd.f32 %v414, %v415
      %v417 = vrot.slane %v416, 2
      %v418 = vadd.f32 %v416, %v417
      %v419 = vrot.slane %v418, 1
      %v420 = vadd.f32 %v418, %v419
      %v421 = vlaneseq
      %v422 = vshrl.u32 %v421, 7
      %vm423 = vcmp.eq.s32.totalorder %v422, 0
      %vm424 = vcmp.eq.s32.totalorder %v422, 1
      %v425 = vsel %vm424, %v420, 0.0
      %v426 = vsel %vm423, %v399, %v425
      %427 = vst [vmem:[%s184] sm:$0xff] %v426
      %s428 = smul.u32 8, %s15
      %p429 = scmp.lt.s32.totalorder %s428, 15
      %s430 = scalar_select %p429, %s428, 15
      %s431 = smul.addr %s430, 4
      %s432 = scalar_lea.vmem %s2, %s431
      %p433 = scmp.lt.s32.totalorder %s15, 1
      %s434 = scalar_select %p433, %s15, 1
      %s435 = smul.addr %s434, 8
      %s436 = scalar_lea.vmem %s3, %s435
      // Predicated region
      $region29: #{resblk_forward.3} parent=27 // pred_check
        %p437 = pneg %p80
      $region30: #{resblk_forward.3} parent=27 // pred_check_branch
        %439 = sbr.rel (%p437) target = $region32
      $region31: #{resblk_forward.3} parent=27 // pred_region
        %s440 = smul.u32 8, %s15
      $region32: #{resblk_forward.3} parent=27 // pred_fallthru
        _
      // Predicated region
      $region33: #{resblk_forward.3} parent=27 // pred_check
        %p441 = pneg %p106
      $region34: #{resblk_forward.3} parent=27 // pred_check_branch
        %443 = sbr.rel (%p441) target = $region36
      $region35: #{resblk_forward.3} parent=27 // pred_region
        _
      $region36: #{resblk_forward.3} parent=27 // pred_fallthru
        _
    $region28: #{resblk_forward.3} parent=5 // pred_fallthru
      _
    %p444 = scmp.le.s32.totalorder 2, %s10
    // Predicated region
    $region37: #{resblk_forward.3} parent=5 // pred_check
      %p445 = pneg %p444
    $region38: #{resblk_forward.3} parent=5 // pred_check_branch
      %447 = sbr.rel (%p445) target = $region40
    $region39: #{resblk_forward.3} parent=5 // pred_region
      %s448 = ssub.s32 %s10, 2
      // Predicated region
      $region41: #{resblk_forward.3} parent=39 // pred_check
        %p449 = pneg %p86
      $region42: #{resblk_forward.3} parent=39 // pred_check_branch
        %451 = sbr.rel (%p449) target = $region44
      $region43: #{resblk_forward.3} parent=39 // pred_region
        %s452 = smul.u32 8, %s16
        %p453 = scmp.lt.s32.totalorder %s452, 15
        %s454 = scalar_select %p453, %s452, 15
        %s455 = smul.addr %s454, 4
        %s456 = scalar_lea.vmem %s2, %s455
      $region44: #{resblk_forward.3} parent=39 // pred_fallthru
        _
      // Predicated region
      $region45: #{resblk_forward.3} parent=39 // pred_check
        %p457 = pneg %p112
      $region46: #{resblk_forward.3} parent=39 // pred_check_branch
        %459 = sbr.rel (%p457) target = $region48
      $region47: #{resblk_forward.3} parent=39 // pred_region
        %p460 = scmp.lt.s32.totalorder %s16, 1
        %s461 = scalar_select %p460, %s16, 1
        %s462 = smul.addr %s461, 8
        %s463 = scalar_lea.vmem %s3, %s462
      $region48: #{resblk_forward.3} parent=39 // pred_fallthru
        _
    $region40: #{resblk_forward.3} parent=5 // pred_fallthru
      _
  $region6: #{resblk_forward.3} parent=0 // loop_footer
    %s14 = sadd.s32 1, %s10
  $region7: #{resblk_forward.3} parent=0 // loop_footer_branch
    %9 = sbr.rel target = $region3
  $region8: #{resblk_forward.3} parent=0 // loop_exit
    _

// kernel: resblk_forward.5
$region0: #{resblk_forward.5}
  #allocation0 [shape = 'u32[]', space=smem, size = 0x4, offset = 0x4, fixed_abs, tag = 'smem constant byte address 0x4 - core index']
  #allocation1 [shape = 'u32[144,128]{1,0:T(1,128)}', space=vmem, size = 0x12000, scoped, tag = 'internal scratch']
  %s0 = inlined_call_operand.vmem [shape: bf16[2,80,128], index: 0, kind: input, shape index: {}]
  %s1 = inlined_call_operand.vmem [shape: bf16[2,80,128], index: 1, kind: input, shape index: {}]
  %s2 = inlined_call_operand.vmem [shape: f32[1,128], index: 2, kind: input, shape index: {}]
  %s3 = inlined_call_operand.vmem [shape: f32[1,128], index: 3, kind: input, shape index: {}]
  %s4 = inlined_call_operand.vmem [shape: f32[1,128], index: 4, kind: input, shape index: {}]
  %s5 = inlined_call_operand.vmem [shape: f32[1,128], index: 5, kind: input, shape index: {}]
  %s6 = inlined_call_operand.vmem [shape: f32[2,80,128], index: 6, kind: output, shape index: {}]
  %s7 = sld [smem:[#allocation0]]
  $region57: #{resblk_forward.5} parent=0
    _
  %s9 = ssub.s32 1, %s7
  %s10 = scalar_select 0, %s9, %s7
  loop: start=0, step=1, limit=4
  $region2: #{resblk_forward.5} parent=0 // loop_pre_header
    _
  $region3: #{resblk_forward.5} parent=0 // loop_header
    %s12 = sphi 0, %s16
    %p13 = scmp.ge.s32.totalorder %s12, 4
    %s22 = sphi 0, %s24
    %s25 = sphi 0, %s22
    %s26 = sphi 0, %s25
    %s42 = sphi 0, %s26
    %s48 = sphi 0, %s50
    %s51 = sphi 0, %s48
    %s52 = sphi 0, %s51
    %s68 = sphi 0, %s52
    %s72 = sphi 0, %s72
    %s74 = sphi 0, %s72
    %s75 = sphi 0, %s74
    %s89 = sphi 0, %s75
    %s93 = sphi 0, %s93
    %s95 = sphi 0, %s93
    %s96 = sphi 0, %s95
    %s110 = sphi 0, %s96
    %s114 = sphi 0, %s114
    %s116 = sphi 0, %s114
    %s117 = sphi 0, %s116
    %s131 = sphi 0, %s117
    %s135 = sphi 0, %s135
    %s137 = sphi 0, %s135
    %s138 = sphi 0, %s137
    %s152 = sphi 0, %s138
    %s158 = sphi 0, %s160
    %s161 = sphi 0, %s158
    %s162 = sphi 0, %s161
    %s178 = sphi 0, %s162
  $region4: #{resblk_forward.5} parent=0 // loop_header_branch
    %15 = sbr.rel (%p13) target = $region8
  $region5: #{resblk_forward.5} parent=0 // loop_body
    %s17 = ssub.s32 %s12, 1
    %s18 = ssub.s32 %s12, 2
    %s19 = sadd.s32 %s12, 1
    %s20 = ssub.s32 %s12, %s19
    %p21 = scmp.eq.s32.totalorder %s20, 0
    %s23 = sadd.s32 %s22, 1
    %s24 = scalar_select %p21, %s22, %s23
    %p27 = pneg %p21
    %p28 = scmp.eq.s32.totalorder %s12, 1
    %p29 = por %p27, %p28
    %p30 = scmp.ne.s32.totalorder %s22, %s25
    %p31 = scmp.eq.s32.totalorder %s12, 0
    %p32 = por %p30, %p31
    %p33 = scmp.ne.s32.totalorder %s22, %s25
    %p34 = scmp.eq.s32.totalorder %s17, 1
    %p35 = por %p33, %p34
    %p36 = scmp.ne.s32.totalorder %s25, %s26
    %p37 = scmp.eq.s32.totalorder %s17, 0
    %p38 = por %p36, %p37
    %p39 = scmp.ne.s32.totalorder %s25, %s26
    %p40 = scmp.eq.s32.totalorder %s18, 1
    %p41 = por %p39, %p40
    %p43 = scmp.ne.s32.totalorder %s26, %s42
    %p44 = scmp.eq.s32.totalorder %s18, 0
    %p45 = por %p43, %p44
    %s46 = ssub.s32 %s12, %s19
    %p47 = scmp.eq.s32.totalorder %s46, 0
    %s49 = sadd.s32 %s48, 1
    %s50 = scalar_select %p47, %s48, %s49
    %p53 = pneg %p47
    %p54 = scmp.eq.s32.totalorder %s12, 1
    %p55 = por %p53, %p54
    %p56 = scmp.ne.s32.totalorder %s48, %s51
    %p57 = scmp.eq.s32.totalorder %s12, 0
    %p58 = por %p56, %p57
    %p59 = scmp.ne.s32.totalorder %s48, %s51
    %p60 = scmp.eq.s32.totalorder %s17, 1
    %p61 = por %p59, %p60
    %p62 = scmp.ne.s32.totalorder %s51, %s52
    %p63 = scmp.eq.s32.totalorder %s17, 0
    %p64 = por %p62, %p63
    %p65 = scmp.ne.s32.totalorder %s51, %s52
    %p66 = scmp.eq.s32.totalorder %s18, 1
    %p67 = por %p65, %p66
    %p69 = scmp.ne.s32.totalorder %s52, %s68
    %p70 = scmp.eq.s32.totalorder %s18, 0
    %p71 = por %p69, %p70
    %s73 = sadd.s32 %s72, 1
    %p76 = scmp.eq.s32.totalorder %s12, 1
    %p77 = scmp.ne.s32.totalorder %s72, %s74
    %p78 = scmp.eq.s32.totalorder %s12, 0
    %p79 = por %p77, %p78
    %p80 = scmp.ne.s32.totalorder %s72, %s74
    %p81 = scmp.eq.s32.totalorder %s17, 1
    %p82 = por %p80, %p81
    %p83 = scmp.ne.s32.totalorder %s74, %s75
    %p84 = scmp.eq.s32.totalorder %s17, 0
    %p85 = por %p83, %p84
    %p86 = scmp.ne.s32.totalorder %s74, %s75
    %p87 = scmp.eq.s32.totalorder %s18, 1
    %p88 = por %p86, %p87
    %p90 = scmp.ne.s32.totalorder %s75, %s89
    %p91 = scmp.eq.s32.totalorder %s18, 0
    %p92 = por %p90, %p91
    %s94 = sadd.s32 %s93, 1
    %p97 = scmp.eq.s32.totalorder %s12, 1
    %p98 = scmp.ne.s32.totalorder %s93, %s95
    %p99 = scmp.eq.s32.totalorder %s12, 0
    %p100 = por %p98, %p99
    %p101 = scmp.ne.s32.totalorder %s93, %s95
    %p102 = scmp.eq.s32.totalorder %s17, 1
    %p103 = por %p101, %p102
    %p104 = scmp.ne.s32.totalorder %s95, %s96
    %p105 = scmp.eq.s32.totalorder %s17, 0
    %p106 = por %p104, %p105
    %p107 = scmp.ne.s32.totalorder %s95, %s96
    %p108 = scmp.eq.s32.totalorder %s18, 1
    %p109 = por %p107, %p108
    %p111 = scmp.ne.s32.totalorder %s96, %s110
    %p112 = scmp.eq.s32.totalorder %s18, 0
    %p113 = por %p111, %p112
    %s115 = sadd.s32 %s114, 1
    %p118 = scmp.eq.s32.totalorder %s12, 1
    %p119 = scmp.ne.s32.totalorder %s114, %s116
    %p120 = scmp.eq.s32.totalorder %s12, 0
    %p121 = por %p119, %p120
    %p122 = scmp.ne.s32.totalorder %s114, %s116
    %p123 = scmp.eq.s32.totalorder %s17, 1
    %p124 = por %p122, %p123
    %p125 = scmp.ne.s32.totalorder %s116, %s117
    %p126 = scmp.eq.s32.totalorder %s17, 0
    %p127 = por %p125, %p126
    %p128 = scmp.ne.s32.totalorder %s116, %s117
    %p129 = scmp.eq.s32.totalorder %s18, 1
    %p130 = por %p128, %p129
    %p132 = scmp.ne.s32.totalorder %s117, %s131
    %p133 = scmp.eq.s32.totalorder %s18, 0
    %p134 = por %p132, %p133
    %s136 = sadd.s32 %s135, 1
    %p139 = scmp.eq.s32.totalorder %s12, 1
    %p140 = scmp.ne.s32.totalorder %s135, %s137
    %p141 = scmp.eq.s32.totalorder %s12, 0
    %p142 = por %p140, %p141
    %p143 = scmp.ne.s32.totalorder %s135, %s137
    %p144 = scmp.eq.s32.totalorder %s17, 1
    %p145 = por %p143, %p144
    %p146 = scmp.ne.s32.totalorder %s137, %s138
    %p147 = scmp.eq.s32.totalorder %s17, 0
    %p148 = por %p146, %p147
    %p149 = scmp.ne.s32.totalorder %s137, %s138
    %p150 = scmp.eq.s32.totalorder %s18, 1
    %p151 = por %p149, %p150
    %p153 = scmp.ne.s32.totalorder %s138, %s152
    %p154 = scmp.eq.s32.totalorder %s18, 0
    %p155 = por %p153, %p154
    %s156 = ssub.s32 %s12, %s19
    %p157 = scmp.eq.s32.totalorder %s156, 0
    %s159 = sadd.s32 %s158, 1
    %s160 = scalar_select %p157, %s158, %s159
    %p163 = pneg %p157
    %p164 = scmp.eq.s32.totalorder %s12, 1
    %p165 = por %p163, %p164
    %p166 = scmp.ne.s32.totalorder %s158, %s161
    %p167 = scmp.eq.s32.totalorder %s12, 0
    %p168 = por %p166, %p167
    %p169 = scmp.ne.s32.totalorder %s158, %s161
    %p170 = scmp.eq.s32.totalorder %s17, 1
    %p171 = por %p169, %p170
    %p172 = scmp.ne.s32.totalorder %s161, %s162
    %p173 = scmp.eq.s32.totalorder %s17, 0
    %p174 = por %p172, %p173
    %p175 = scmp.ne.s32.totalorder %s161, %s162
    %p176 = scmp.eq.s32.totalorder %s18, 1
    %p177 = por %p175, %p176
    %p179 = scmp.ne.s32.totalorder %s162, %s178
    %p180 = scmp.eq.s32.totalorder %s18, 0
    %p181 = por %p179, %p180
    %p182 = scmp.le.s32.totalorder 1, %s12
    %p183 = scmp.lt.s32.totalorder %s12, 3
    %p184 = pnand %p182, %p183
    %p185 = pneg %p184
    // Predicated region
    $region9: #{resblk_forward.5} parent=5 // pred_check
      _
    $region10: #{resblk_forward.5} parent=5 // pred_check_branch
      %187 = sbr.rel (%p184) target = $region12
    $region11: #{resblk_forward.5} parent=5 // pred_region
      %s188 = ssub.s32 %s12, 1
      // Predicated region
      $region13: #{resblk_forward.5} parent=11 // pred_check
        %p189 = pneg %p85
      $region14: #{resblk_forward.5} parent=11 // pred_check_branch
        %191 = sbr.rel (%p189) target = $region16
      $region15: #{resblk_forward.5} parent=11 // pred_region
        _
      $region16: #{resblk_forward.5} parent=11 // pred_fallthru
        _
      // Predicated region
      $region17: #{resblk_forward.5} parent=11 // pred_check
        %p192 = pneg %p106
      $region18: #{resblk_forward.5} parent=11 // pred_check_branch
        %194 = sbr.rel (%p192) target = $region20
      $region19: #{resblk_forward.5} parent=11 // pred_region
        _
      $region20: #{resblk_forward.5} parent=11 // pred_fallthru
        _
      // Predicated region
      $region21: #{resblk_forward.5} parent=11 // pred_check
        %p195 = pneg %p127
      $region22: #{resblk_forward.5} parent=11 // pred_check_branch
        %197 = sbr.rel (%p195) target = $region24
      $region23: #{resblk_forward.5} parent=11 // pred_region
        _
      $region24: #{resblk_forward.5} parent=11 // pred_fallthru
        _
      // Predicated region
      $region25: #{resblk_forward.5} parent=11 // pred_check
        %p198 = pneg %p148
      $region26: #{resblk_forward.5} parent=11 // pred_check_branch
        %200 = sbr.rel (%p198) target = $region28
      $region27: #{resblk_forward.5} parent=11 // pred_region
        _
      $region28: #{resblk_forward.5} parent=11 // pred_fallthru
        _
    $region12: #{resblk_forward.5} parent=5 // pred_fallthru
      _
    %p201 = scmp.lt.s32.totalorder %s12, 2
    // Predicated region
    $region29: #{resblk_forward.5} parent=5 // pred_check
      %p202 = pneg %p201
    $region30: #{resblk_forward.5} parent=5 // pred_check_branch
      %204 = sbr.rel (%p202) target = $region32
    $region31: #{resblk_forward.5} parent=5 // pred_region
      // Predicated region
      $region33: #{resblk_forward.5} parent=31 // pred_check
        %p205 = pneg %p32
      $region34: #{resblk_forward.5} parent=31 // pred_check_branch
        %207 = sbr.rel (%p205) target = $region36
      $region35: #{resblk_forward.5} parent=31 // pred_region
        %p208 = scmp.lt.s32.totalorder %s12, 1
        %s209 = scalar_select %p208, %s12, 1
        %s210 = smul.addr %s209, 10
        %s211 = smul.addr %s210, 4
        %s212 = scalar_lea.vmem %s0, %s211
      $region36: #{resblk_forward.5} parent=31 // pred_fallthru
        _
      // Predicated region
      $region37: #{resblk_forward.5} parent=31 // pred_check
        %p213 = pneg %p58
      $region38: #{resblk_forward.5} parent=31 // pred_check_branch
        %215 = sbr.rel (%p213) target = $region40
      $region39: #{resblk_forward.5} parent=31 // pred_region
        %p216 = scmp.lt.s32.totalorder %s12, 1
        %s217 = scalar_select %p216, %s12, 1
        %s218 = smul.addr %s217, 10
        %s219 = smul.addr %s218, 4
        %s220 = scalar_lea.vmem %s1, %s219
      $region40: #{resblk_forward.5} parent=31 // pred_fallthru
        _
    $region32: #{resblk_forward.5} parent=5 // pred_fallthru
      _
    %p221 = scmp.le.s32.totalorder 1, %s12
    %p222 = scmp.lt.s32.totalorder %s12, 3
    %p223 = pnand %p221, %p222
    %p224 = pneg %p223
    // Predicated region
    $region41: #{resblk_forward.5} parent=5 // pred_check
      _
    $region42: #{resblk_forward.5} parent=5 // pred_check_branch
      %226 = sbr.rel (%p223) target = $region44
    $region43: #{resblk_forward.5} parent=5 // pred_region
      %s227 = ssub.s32 %s12, 1
      %p228 = scmp.lt.s32.totalorder %s17, 1
      %s229 = scalar_select %p228, %s17, 1
      %s230 = smul.addr %s229, 10
      %s231 = smul.addr %s230, 4
      %s232 = scalar_lea.vmem %s0, %s231
      %p233 = pneg %p38
      %p234 = pneg %p35
      %p235 = scmp.lt.s32.totalorder %s17, 1
      %s236 = scalar_select %p235, %s17, 1
      %s237 = smul.addr %s236, 10
      %s238 = smul.addr %s237, 4
      %s239 = scalar_lea.vmem %s1, %s238
      %p240 = pneg %p64
      %p241 = pneg %p61
      %p242 = pneg %p85
      %p243 = pneg %p82
      %p244 = pneg %p106
      %p245 = pneg %p103
      %p246 = pneg %p127
      %p247 = pneg %p124
      %p248 = pneg %p148
      %p249 = pneg %p145
      %p250 = pneg %p174
      %p251 = pneg %p171
      %p252 = scmp.lt.s32.totalorder %s17, 1
      %s253 = scalar_select %p252, %s17, 1
      %s254 = smul.addr %s253, 10
      %s255 = smul.addr %s254, 8
      %s256 = scalar_lea.vmem %s6, %s255
      %p257 = scmp.lt.s32.totalorder %s17, 1
      %s258 = scalar_select %p257, %s17, 1
      %s259 = smul.addr %s258, 10
      %s260 = smul.addr %s259, 4
      %s261 = scalar_lea.vmem %s0, %s260
      %p262 = scmp.lt.s32.totalorder %s17, 1
      %s263 = scalar_select %p262, %s17, 1
      %s264 = smul.addr %s263, 10
      %s265 = smul.addr %s264, 4
      %s266 = scalar_lea.vmem %s1, %s265
      %p267 = scmp.lt.s32.totalorder %s17, 1
      %s268 = scalar_select %p267, %s17, 1
      %s269 = smul.addr %s268, 10
      %s270 = smul.addr %s269, 8
      %s271 = scalar_lea.vmem %s6, %s270
      %v272 = vld [vmem:[%s261] sm:$0xf]
      %v273 = vld [vmem:[%s261 + $0x4] sm:$0xf]
      %v274 = vld [vmem:[%s261 + $0x8] sm:$0xf]
      %v275 = vld [vmem:[%s261 + $0xc] sm:$0xf]
      %v276 = vld [vmem:[%s261 + $0x10] sm:$0xf]
      %v277 = vld [vmem:[%s261 + $0x14] sm:$0xf]
      %v278 = vld [vmem:[%s261 + $0x18] sm:$0xf]
      %v279 = vld [vmem:[%s261 + $0x1c] sm:$0xf]
      %v280 = vld [vmem:[%s261 + $0x20] sm:$0xf]
      %v281 = vld [vmem:[%s261 + $0x24] sm:$0xf]
      %v282 = vunpack.c.l.bf16 %v272
      %v283 = vunpack.c.l.bf16 %v273
      %v284 = vunpack.c.l.bf16 %v274
      %v285 = vunpack.c.l.bf16 %v275
      %v286 = vunpack.c.l.bf16 %v276
      %v287 = vunpack.c.l.bf16 %v277
      %v288 = vunpack.c.l.bf16 %v278
      %v289 = vunpack.c.l.bf16 %v279
      %v290 = vunpack.c.l.bf16 %v280
      %v291 = vunpack.c.l.bf16 %v281
      %v292 = vld [vmem:[%s2] sm:$0x1]
      %v294 = vlaneseq
      %v295 = vshrl.u32 %v294, 7
      %v296 = vsub.s32 0, %v295
      %v297 = vrot.slane %v292, %v296
      %v299 = vmul.f32 %v282, %v297
      %v300 = vmul.f32 %v283, %v297
      %v301 = vmul.f32 %v284, %v297
      %v302 = vmul.f32 %v285, %v297
      %v303 = vmul.f32 %v286, %v297
      %v304 = vmul.f32 %v287, %v297
      %v305 = vmul.f32 %v288, %v297
      %v306 = vmul.f32 %v289, %v297
      %v307 = vmul.f32 %v290, %v297
      %v308 = vmul.f32 %v291, %v297
      %v309 = vld [vmem:[%s3] sm:$0x1]
      %v311 = vlaneseq
      %v312 = vshrl.u32 %v311, 7
      %v313 = vsub.s32 0, %v312
      %v314 = vrot.slane %v309, %v313
      %v316 = vadd.f32 %v299, %v314
      %v317 = vadd.f32 %v300, %v314
      %v318 = vadd.f32 %v301, %v314
      %v319 = vadd.f32 %v302, %v314
      %v320 = vadd.f32 %v303, %v314
      %v321 = vadd.f32 %v304, %v314
      %v322 = vadd.f32 %v305, %v314
      %v323 = vadd.f32 %v306, %v314
      %v324 = vadd.f32 %v307, %v314
      %v325 = vadd.f32 %v308, %v314
      %v326 = vld [vmem:[%s266] sm:$0xf]
      %v327 = vld [vmem:[%s266 + $0x4] sm:$0xf]
      %v328 = vld [vmem:[%s266 + $0x8] sm:$0xf]
      %v329 = vld [vmem:[%s266 + $0xc] sm:$0xf]
      %v330 = vld [vmem:[%s266 + $0x10] sm:$0xf]
      %v331 = vld [vmem:[%s266 + $0x14] sm:$0xf]
      %v332 = vld [vmem:[%s266 + $0x18] sm:$0xf]
      %v333 = vld [vmem:[%s266 + $0x1c] sm:$0xf]
      %v334 = vld [vmem:[%s266 + $0x20] sm:$0xf]
      %v335 = vld [vmem:[%s266 + $0x24] sm:$0xf]
      %v336 = vunpack.c.l.bf16 %v326
      %v337 = vunpack.c.l.bf16 %v327
      %v338 = vunpack.c.l.bf16 %v328
      %v339 = vunpack.c.l.bf16 %v329
      %v340 = vunpack.c.l.bf16 %v330
      %v341 = vunpack.c.l.bf16 %v331
      %v342 = vunpack.c.l.bf16 %v332
      %v343 = vunpack.c.l.bf16 %v333
      %v344 = vunpack.c.l.bf16 %v334
      %v345 = vunpack.c.l.bf16 %v335
      %v346 = vld [vmem:[%s4] sm:$0x1]
      %v348 = vlaneseq
      %v349 = vshrl.u32 %v348, 7
      %v350 = vsub.s32 0, %v349
      %v351 = vrot.slane %v346, %v350
      %v353 = vmul.f32 %v336, %v351
      %v354 = vmul.f32 %v337, %v351
      %v355 = vmul.f32 %v338, %v351
      %v356 = vmul.f32 %v339, %v351
      %v357 = vmul.f32 %v340, %v351
      %v358 = vmul.f32 %v341, %v351
      %v359 = vmul.f32 %v342, %v351
      %v360 = vmul.f32 %v343, %v351
      %v361 = vmul.f32 %v344, %v351
      %v362 = vmul.f32 %v345, %v351
      %v363 = vld [vmem:[%s5] sm:$0x1]
      %v365 = vlaneseq
      %v366 = vshrl.u32 %v365, 7
      %v367 = vsub.s32 0, %v366
      %v368 = vrot.slane %v363, %v367
      %v370 = vadd.f32 %v353, %v368
      %v371 = vadd.f32 %v354, %v368
      %v372 = vadd.f32 %v355, %v368
      %v373 = vadd.f32 %v356, %v368
      %v374 = vadd.f32 %v357, %v368
      %v375 = vadd.f32 %v358, %v368
      %v376 = vadd.f32 %v359, %v368
      %v377 = vadd.f32 %v360, %v368
      %v378 = vadd.f32 %v361, %v368
      %v379 = vadd.f32 %v362, %v368
      %v380 = vadd.f32 %v316, %v370
      %v381 = vadd.f32 %v317, %v371
      %v382 = vadd.f32 %v318, %v372
      %v383 = vadd.f32 %v319, %v373
      %v384 = vadd.f32 %v320, %v374
      %v385 = vadd.f32 %v321, %v375
      %v386 = vadd.f32 %v322, %v376
      %v387 = vadd.f32 %v323, %v377
      %v388 = vadd.f32 %v324, %v378
      %v389 = vadd.f32 %v325, %v379
      %390 = vst [vmem:[%s271] sm:$0xff] %v380
      %391 = vst [vmem:[%s271 + $0x8] sm:$0xff] %v381
      %392 = vst [vmem:[%s271 + $0x10] sm:$0xff] %v382
      %393 = vst [vmem:[%s271 + $0x18] sm:$0xff] %v383
      %394 = vst [vmem:[%s271 + $0x20] sm:$0xff] %v384
      %395 = vst [vmem:[%s271 + $0x28] sm:$0xff] %v385
      %396 = vst [vmem:[%s271 + $0x30] sm:$0xff] %v386
      %397 = vst [vmem:[%s271 + $0x38] sm:$0xff] %v387
      %398 = vst [vmem:[%s271 + $0x40] sm:$0xff] %v388
      %399 = vst [vmem:[%s271 + $0x48] sm:$0xff] %v389
      %p400 = scmp.lt.s32.totalorder %s17, 1
      %s401 = scalar_select %p400, %s17, 1
      %s402 = smul.addr %s401, 10
      %s403 = smul.addr %s402, 8
      %s404 = scalar_lea.vmem %s6, %s403
      // Predicated region
      $region45: #{resblk_forward.5} parent=43 // pred_check
        %p405 = pneg %p171
      $region46: #{resblk_forward.5} parent=43 // pred_check_branch
        %407 = sbr.rel (%p405) target = $region48
      $region47: #{resblk_forward.5} parent=43 // pred_region
        _
      $region48: #{resblk_forward.5} parent=43 // pred_fallthru
        _
    $region44: #{resblk_forward.5} parent=5 // pred_fallthru
      _
    %p408 = scmp.le.s32.totalorder 2, %s12
    // Predicated region
    $region49: #{resblk_forward.5} parent=5 // pred_check
      %p409 = pneg %p408
    $region50: #{resblk_forward.5} parent=5 // pred_check_branch
      %411 = sbr.rel (%p409) target = $region52
    $region51: #{resblk_forward.5} parent=5 // pred_region
      %s412 = ssub.s32 %s12, 2
      // Predicated region
      $region53: #{resblk_forward.5} parent=51 // pred_check
        %p413 = pneg %p177
      $region54: #{resblk_forward.5} parent=51 // pred_check_branch
        %415 = sbr.rel (%p413) target = $region56
      $region55: #{resblk_forward.5} parent=51 // pred_region
        %p416 = scmp.lt.s32.totalorder %s18, 1
        %s417 = scalar_select %p416, %s18, 1
        %s418 = smul.addr %s417, 10
        %s419 = smul.addr %s418, 8
        %s420 = scalar_lea.vmem %s6, %s419
      $region56: #{resblk_forward.5} parent=51 // pred_fallthru
        _
    $region52: #{resblk_forward.5} parent=5 // pred_fallthru
      _
  $region6: #{resblk_forward.5} parent=0 // loop_footer
    %s16 = sadd.s32 1, %s12
  $region7: #{resblk_forward.5} parent=0 // loop_footer_branch
    %11 = sbr.rel target = $region3
  $region8: #{resblk_forward.5} parent=0 // loop_exit
    _

// kernel: resblk_forward.4
$region0: #{resblk_forward.4}
  #allocation0 [shape = 'u32[]', space=smem, size = 0x4, offset = 0x4, fixed_abs, tag = 'smem constant byte address 0x4 - core index']
  #allocation1 [shape = 'u32[144,128]{1,0:T(1,128)}', space=vmem, size = 0x12000, scoped, tag = 'internal scratch']
  #allocation2 [shape = 'bf16[115,128]{1,0:T(8,128)(2,1)}', space=vmem, size = 0x7800, scoped, tag = 'scratch operand']
  %s0 = inlined_call_operand.vmem [shape: bf16[2,80,128], index: 0, kind: input, shape index: {}]
  %s1 = inlined_call_operand.vmem [shape: f32[1,128], index: 1, kind: input, shape index: {}]
  %s2 = inlined_call_operand.vmem [shape: f32[1,128], index: 2, kind: input, shape index: {}]
  %s3 = inlined_call_operand.vmem [shape: bf16[9,128,128], index: 3, kind: input, shape index: {}]
  %s4 = inlined_call_operand.vmem [shape: bf16[2,80,4], index: 4, kind: input, shape index: {}]
  %s5 = inlined_call_operand.vmem [shape: bf16[4,128], index: 5, kind: input, shape index: {}]
  %s6 = inlined_call_operand.vmem [shape: bf16[2,80,128], index: 6, kind: output, shape index: {0}]
  %s7 = inlined_call_operand.vmem [shape: f32[16,128], index: 7, kind: output, shape index: {1}]
  %s8 = inlined_call_operand.vmem [shape: bf16[2,80,128], index: 8, kind: output, shape index: {2}]
  %s9 = inlined_call_operand.vmem [shape: f32[16,128], index: 9, kind: output, shape index: {3}]
  %10 = xla_tuple %s6, %s7, %s8, %s9
  %s11 = sld [smem:[#allocation0]]
  $region81: #{resblk_forward.4} parent=0
    _
  %s13 = ssub.s32 1, %s11
  %s14 = scalar_select 0, %s13, %s11
  loop: start=0, step=1, limit=4
  $region2: #{resblk_forward.4} parent=0 // loop_pre_header
    _
  $region3: #{resblk_forward.4} parent=0 // loop_header
    %s16 = sphi 0, %s20
    %p17 = scmp.ge.s32.totalorder %s16, 4
    %s26 = sphi 0, %s28
    %s29 = sphi 0, %s26
    %s30 = sphi 0, %s29
    %s46 = sphi 0, %s30
    %s50 = sphi 0, %s50
    %s52 = sphi 0, %s50
    %s53 = sphi 0, %s52
    %s67 = sphi 0, %s53
    %s71 = sphi 0, %s71
    %s73 = sphi 0, %s71
    %s74 = sphi 0, %s73
    %s88 = sphi 0, %s74
    %s92 = sphi 0, %s92
    %s94 = sphi 0, %s92
    %s95 = sphi 0, %s94
    %s109 = sphi 0, %s95
    %s115 = sphi 0, %s117
    %s118 = sphi 0, %s115
    %s119 = sphi 0, %s118
    %s135 = sphi 0, %s119
    %s139 = sphi 0, %s139
    %s141 = sphi 0, %s139
    %s142 = sphi 0, %s141
    %s156 = sphi 0, %s142
    %s162 = sphi 0, %s164
    %s165 = sphi 0, %s162
    %s166 = sphi 0, %s165
    %s182 = sphi 0, %s166
    %s188 = sphi 0, %s190
    %s191 = sphi 0, %s188
    %s192 = sphi 0, %s191
    %s208 = sphi 0, %s192
    %s214 = sphi 0, %s216
    %s217 = sphi 0, %s214
    %s218 = sphi 0, %s217
    %s234 = sphi 0, %s218
    %s240 = sphi 0, %s242
    %s243 = sphi 0, %s240
    %s244 = sphi 0, %s243
    %s260 = sphi 0, %s244
  $region4: #{resblk_forward.4} parent=0 // loop_header_branch
    %19 = sbr.rel (%p17) target = $region8
  $region5: #{resblk_forward.4} parent=0 // loop_body
    %s21 = ssub.s32 %s16, 1
    %s22 = ssub.s32 %s16, 2
    %s23 = sadd.s32 %s16, 1
    %s24 = ssub.s32 %s16, %s23
    %p25 = scmp.eq.s32.totalorder %s24, 0
    %s27 = sadd.s32 %s26, 1
    %s28 = scalar_select %p25, %s26, %s27
    %p31 = pneg %p25
    %p32 = scmp.eq.s32.totalorder %s16, 1
    %p33 = por %p31, %p32
    %p34 = scmp.ne.s32.totalorder %s26, %s29
    %p35 = scmp.eq.s32.totalorder %s16, 0
    %p36 = por %p34, %p35
    %p37 = scmp.ne.s32.totalorder %s26, %s29
    %p38 = scmp.eq.s32.totalorder %s21, 1
    %p39 = por %p37, %p38
    %p40 = scmp.ne.s32.totalorder %s29, %s30
    %p41 = scmp.eq.s32.totalorder %s21, 0
    %p42 = por %p40, %p41
    %p43 = scmp.ne.s32.totalorder %s29, %s30
    %p44 = scmp.eq.s32.totalorder %s22, 1
    %p45 = por %p43, %p44
    %p47 = scmp.ne.s32.totalorder %s30, %s46
    %p48 = scmp.eq.s32.totalorder %s22, 0
    %p49 = por %p47, %p48
    %s51 = sadd.s32 %s50, 1
    %p54 = scmp.eq.s32.totalorder %s16, 1
    %p55 = scmp.ne.s32.totalorder %s50, %s52
    %p56 = scmp.eq.s32.totalorder %s16, 0
    %p57 = por %p55, %p56
    %p58 = scmp.ne.s32.totalorder %s50, %s52
    %p59 = scmp.eq.s32.totalorder %s21, 1
    %p60 = por %p58, %p59
    %p61 = scmp.ne.s32.totalorder %s52, %s53
    %p62 = scmp.eq.s32.totalorder %s21, 0
    %p63 = por %p61, %p62
    %p64 = scmp.ne.s32.totalorder %s52, %s53
    %p65 = scmp.eq.s32.totalorder %s22, 1
    %p66 = por %p64, %p65
    %p68 = scmp.ne.s32.totalorder %s53, %s67
    %p69 = scmp.eq.s32.totalorder %s22, 0
    %p70 = por %p68, %p69
    %s72 = sadd.s32 %s71, 1
    %p75 = scmp.eq.s32.totalorder %s16, 1
    %p76 = scmp.ne.s32.totalorder %s71, %s73
    %p77 = scmp.eq.s32.totalorder %s16, 0
    %p78 = por %p76, %p77
    %p79 = scmp.ne.s32.totalorder %s71, %s73
    %p80 = scmp.eq.s32.totalorder %s21, 1
    %p81 = por %p79, %p80
    %p82 = scmp.ne.s32.totalorder %s73, %s74
    %p83 = scmp.eq.s32.totalorder %s21, 0
    %p84 = por %p82, %p83
    %p85 = scmp.ne.s32.totalorder %s73, %s74
    %p86 = scmp.eq.s32.totalorder %s22, 1
    %p87 = por %p85, %p86
    %p89 = scmp.ne.s32.totalorder %s74, %s88
    %p90 = scmp.eq.s32.totalorder %s22, 0
    %p91 = por %p89, %p90
    %s93 = sadd.s32 %s92, 1
    %p96 = scmp.eq.s32.totalorder %s16, 1
    %p97 = scmp.ne.s32.totalorder %s92, %s94
    %p98 = scmp.eq.s32.totalorder %s16, 0
    %p99 = por %p97, %p98
    %p100 = scmp.ne.s32.totalorder %s92, %s94
    %p101 = scmp.eq.s32.totalorder %s21, 1
    %p102 = por %p100, %p101
    %p103 = scmp.ne.s32.totalorder %s94, %s95
    %p104 = scmp.eq.s32.totalorder %s21, 0
    %p105 = por %p103, %p104
    %p106 = scmp.ne.s32.totalorder %s94, %s95
    %p107 = scmp.eq.s32.totalorder %s22, 1
    %p108 = por %p106, %p107
    %p110 = scmp.ne.s32.totalorder %s95, %s109
    %p111 = scmp.eq.s32.totalorder %s22, 0
    %p112 = por %p110, %p111
    %s113 = ssub.s32 %s16, %s23
    %p114 = scmp.eq.s32.totalorder %s113, 0
    %s116 = sadd.s32 %s115, 1
    %s117 = scalar_select %p114, %s115, %s116
    %p120 = pneg %p114
    %p121 = scmp.eq.s32.totalorder %s16, 1
    %p122 = por %p120, %p121
    %p123 = scmp.ne.s32.totalorder %s115, %s118
    %p124 = scmp.eq.s32.totalorder %s16, 0
    %p125 = por %p123, %p124
    %p126 = scmp.ne.s32.totalorder %s115, %s118
    %p127 = scmp.eq.s32.totalorder %s21, 1
    %p128 = por %p126, %p127
    %p129 = scmp.ne.s32.totalorder %s118, %s119
    %p130 = scmp.eq.s32.totalorder %s21, 0
    %p131 = por %p129, %p130
    %p132 = scmp.ne.s32.totalorder %s118, %s119
    %p133 = scmp.eq.s32.totalorder %s22, 1
    %p134 = por %p132, %p133
    %p136 = scmp.ne.s32.totalorder %s119, %s135
    %p137 = scmp.eq.s32.totalorder %s22, 0
    %p138 = por %p136, %p137
    %s140 = sadd.s32 %s139, 1
    %p143 = scmp.eq.s32.totalorder %s16, 1
    %p144 = scmp.ne.s32.totalorder %s139, %s141
    %p145 = scmp.eq.s32.totalorder %s16, 0
    %p146 = por %p144, %p145
    %p147 = scmp.ne.s32.totalorder %s139, %s141
    %p148 = scmp.eq.s32.totalorder %s21, 1
    %p149 = por %p147, %p148
    %p150 = scmp.ne.s32.totalorder %s141, %s142
    %p151 = scmp.eq.s32.totalorder %s21, 0
    %p152 = por %p150, %p151
    %p153 = scmp.ne.s32.totalorder %s141, %s142
    %p154 = scmp.eq.s32.totalorder %s22, 1
    %p155 = por %p153, %p154
    %p157 = scmp.ne.s32.totalorder %s142, %s156
    %p158 = scmp.eq.s32.totalorder %s22, 0
    %p159 = por %p157, %p158
    %s160 = ssub.s32 %s16, %s23
    %p161 = scmp.eq.s32.totalorder %s160, 0
    %s163 = sadd.s32 %s162, 1
    %s164 = scalar_select %p161, %s162, %s163
    %p167 = pneg %p161
    %p168 = scmp.eq.s32.totalorder %s16, 1
    %p169 = por %p167, %p168
    %p170 = scmp.ne.s32.totalorder %s162, %s165
    %p171 = scmp.eq.s32.totalorder %s16, 0
    %p172 = por %p170, %p171
    %p173 = scmp.ne.s32.totalorder %s162, %s165
    %p174 = scmp.eq.s32.totalorder %s21, 1
    %p175 = por %p173, %p174
    %p176 = scmp.ne.s32.totalorder %s165, %s166
    %p177 = scmp.eq.s32.totalorder %s21, 0
    %p178 = por %p176, %p177
    %p179 = scmp.ne.s32.totalorder %s165, %s166
    %p180 = scmp.eq.s32.totalorder %s22, 1
    %p181 = por %p179, %p180
    %p183 = scmp.ne.s32.totalorder %s166, %s182
    %p184 = scmp.eq.s32.totalorder %s22, 0
    %p185 = por %p183, %p184
    %s186 = ssub.s32 %s16, %s23
    %p187 = scmp.eq.s32.totalorder %s186, 0
    %s189 = sadd.s32 %s188, 1
    %s190 = scalar_select %p187, %s188, %s189
    %p193 = pneg %p187
    %p194 = scmp.eq.s32.totalorder %s16, 1
    %p195 = por %p193, %p194
    %p196 = scmp.ne.s32.totalorder %s188, %s191
    %p197 = scmp.eq.s32.totalorder %s16, 0
    %p198 = por %p196, %p197
    %p199 = scmp.ne.s32.totalorder %s188, %s191
    %p200 = scmp.eq.s32.totalorder %s21, 1
    %p201 = por %p199, %p200
    %p202 = scmp.ne.s32.totalorder %s191, %s192
    %p203 = scmp.eq.s32.totalorder %s21, 0
    %p204 = por %p202, %p203
    %p205 = scmp.ne.s32.totalorder %s191, %s192
    %p206 = scmp.eq.s32.totalorder %s22, 1
    %p207 = por %p205, %p206
    %p209 = scmp.ne.s32.totalorder %s192, %s208
    %p210 = scmp.eq.s32.totalorder %s22, 0
    %p211 = por %p209, %p210
    %s212 = ssub.s32 %s16, %s23
    %p213 = scmp.eq.s32.totalorder %s212, 0
    %s215 = sadd.s32 %s214, 1
    %s216 = scalar_select %p213, %s214, %s215
    %p219 = pneg %p213
    %p220 = scmp.eq.s32.totalorder %s16, 1
    %p221 = por %p219, %p220
    %p222 = scmp.ne.s32.totalorder %s214, %s217
    %p223 = scmp.eq.s32.totalorder %s16, 0
    %p224 = por %p222, %p223
    %p225 = scmp.ne.s32.totalorder %s214, %s217
    %p226 = scmp.eq.s32.totalorder %s21, 1
    %p227 = por %p225, %p226
    %p228 = scmp.ne.s32.totalorder %s217, %s218
    %p229 = scmp.eq.s32.totalorder %s21, 0
    %p230 = por %p228, %p229
    %p231 = scmp.ne.s32.totalorder %s217, %s218
    %p232 = scmp.eq.s32.totalorder %s22, 1
    %p233 = por %p231, %p232
    %p235 = scmp.ne.s32.totalorder %s218, %s234
    %p236 = scmp.eq.s32.totalorder %s22, 0
    %p237 = por %p235, %p236
    %s238 = ssub.s32 %s16, %s23
    %p239 = scmp.eq.s32.totalorder %s238, 0
    %s241 = sadd.s32 %s240, 1
    %s242 = scalar_select %p239, %s240, %s241
    %p245 = pneg %p239
    %p246 = scmp.eq.s32.totalorder %s16, 1
    %p247 = por %p245, %p246
    %p248 = scmp.ne.s32.totalorder %s240, %s243
    %p249 = scmp.eq.s32.totalorder %s16, 0
    %p250 = por %p248, %p249
    %p251 = scmp.ne.s32.totalorder %s240, %s243
    %p252 = scmp.eq.s32.totalorder %s21, 1
    %p253 = por %p251, %p252
    %p254 = scmp.ne.s32.totalorder %s243, %s244
    %p255 = scmp.eq.s32.totalorder %s21, 0
    %p256 = por %p254, %p255
    %p257 = scmp.ne.s32.totalorder %s243, %s244
    %p258 = scmp.eq.s32.totalorder %s22, 1
    %p259 = por %p257, %p258
    %p261 = scmp.ne.s32.totalorder %s244, %s260
    %p262 = scmp.eq.s32.totalorder %s22, 0
    %p263 = por %p261, %p262
    %p264 = scmp.le.s32.totalorder 1, %s16
    %p265 = scmp.lt.s32.totalorder %s16, 3
    %p266 = pnand %p264, %p265
    %p267 = pneg %p266
    // Predicated region
    $region9: #{resblk_forward.4} parent=5 // pred_check
      _
    $region10: #{resblk_forward.4} parent=5 // pred_check_branch
      %269 = sbr.rel (%p266) target = $region12
    $region11: #{resblk_forward.4} parent=5 // pred_region
      %s270 = ssub.s32 %s16, 1
      // Predicated region
      $region13: #{resblk_forward.4} parent=11 // pred_check
        %p271 = pneg %p63
      $region14: #{resblk_forward.4} parent=11 // pred_check_branch
        %273 = sbr.rel (%p271) target = $region16
      $region15: #{resblk_forward.4} parent=11 // pred_region
        _
      $region16: #{resblk_forward.4} parent=11 // pred_fallthru
        _
      // Predicated region
      $region17: #{resblk_forward.4} parent=11 // pred_check
        %p274 = pneg %p84
      $region18: #{resblk_forward.4} parent=11 // pred_check_branch
        %276 = sbr.rel (%p274) target = $region20
      $region19: #{resblk_forward.4} parent=11 // pred_region
        _
      $region20: #{resblk_forward.4} parent=11 // pred_fallthru
        _
      // Predicated region
      $region21: #{resblk_forward.4} parent=11 // pred_check
        %p277 = pneg %p105
      $region22: #{resblk_forward.4} parent=11 // pred_check_branch
        %279 = sbr.rel (%p277) target = $region24
      $region23: #{resblk_forward.4} parent=11 // pred_region
        _
      $region24: #{resblk_forward.4} parent=11 // pred_fallthru
        _
      // Predicated region
      $region25: #{resblk_forward.4} parent=11 // pred_check
        %p280 = pneg %p152
      $region26: #{resblk_forward.4} parent=11 // pred_check_branch
        %282 = sbr.rel (%p280) target = $region28
      $region27: #{resblk_forward.4} parent=11 // pred_region
        _
      $region28: #{resblk_forward.4} parent=11 // pred_fallthru
        _
    $region12: #{resblk_forward.4} parent=5 // pred_fallthru
      _
    %p283 = scmp.lt.s32.totalorder %s16, 2
    // Predicated region
    $region29: #{resblk_forward.4} parent=5 // pred_check
      %p284 = pneg %p283
    $region30: #{resblk_forward.4} parent=5 // pred_check_branch
      %286 = sbr.rel (%p284) target = $region32
    $region31: #{resblk_forward.4} parent=5 // pred_region
      // Predicated region
      $region33: #{resblk_forward.4} parent=31 // pred_check
        %p287 = pneg %p36
      $region34: #{resblk_forward.4} parent=31 // pred_check_branch
        %289 = sbr.rel (%p287) target = $region36
      $region35: #{resblk_forward.4} parent=31 // pred_region
        %p290 = scmp.lt.s32.totalorder %s16, 1
        %s291 = scalar_select %p290, %s16, 1
        %s292 = smul.addr %s291, 10
        %s293 = smul.addr %s292, 4
        %s294 = scalar_lea.vmem %s0, %s293
      $region36: #{resblk_forward.4} parent=31 // pred_fallthru
        _
      // Predicated region
      $region37: #{resblk_forward.4} parent=31 // pred_check
        %p295 = pneg %p125
      $region38: #{resblk_forward.4} parent=31 // pred_check_branch
        %297 = sbr.rel (%p295) target = $region40
      $region39: #{resblk_forward.4} parent=31 // pred_region
        %p298 = scmp.lt.s32.totalorder %s16, 1
        %s299 = scalar_select %p298, %s16, 1
        %s300 = smul.addr %s299, 10
        %s301 = smul.addr %s300, 4
        %s302 = scalar_lea.vmem %s4, %s301
      $region40: #{resblk_forward.4} parent=31 // pred_fallthru
        _
    $region32: #{resblk_forward.4} parent=5 // pred_fallthru
      _
    %p303 = scmp.le.s32.totalorder 1, %s16
    %p304 = scmp.lt.s32.totalorder %s16, 3
    %p305 = pnand %p303, %p304
    %p306 = pneg %p305
    // Predicated region
    $region41: #{resblk_forward.4} parent=5 // pred_check
      _
    $region42: #{resblk_forward.4} parent=5 // pred_check_branch
      %308 = sbr.rel (%p305) target = $region44
    $region43: #{resblk_forward.4} parent=5 // pred_region
      %s309 = ssub.s32 %s16, 1
      %p310 = scmp.lt.s32.totalorder %s21, 1
      %s311 = scalar_select %p310, %s21, 1
      %s312 = smul.addr %s311, 10
      %s313 = smul.addr %s312, 4
      %s314 = scalar_lea.vmem %s0, %s313
      %p315 = pneg %p42
      %p316 = pneg %p39
      %p317 = pneg %p63
      %p318 = pneg %p60
      %p319 = pneg %p84
      %p320 = pneg %p81
      %p321 = pneg %p105
      %p322 = pneg %p102
      %p323 = scmp.lt.s32.totalorder %s21, 1
      %s324 = scalar_select %p323, %s21, 1
      %s325 = smul.addr %s324, 10
      %s326 = smul.addr %s325, 4
      %s327 = scalar_lea.vmem %s4, %s326
      %p328 = pneg %p131
      %p329 = pneg %p128
      %p330 = pneg %p152
      %p331 = pneg %p149
      %p332 = pneg %p178
      %p333 = pneg %p175
      %p334 = scmp.lt.s32.totalorder %s21, 1
      %s335 = scalar_select %p334, %s21, 1
      %s336 = smul.addr %s335, 10
      %s337 = smul.addr %s336, 4
      %s338 = scalar_lea.vmem %s6, %s337
      %p339 = pneg %p204
      %p340 = pneg %p201
      %p341 = scmp.lt.s32.totalorder %s21, 1
      %s342 = scalar_select %p341, %s21, 1
      %s343 = smul.addr %s342, 8
      %s344 = scalar_lea.vmem %s7, %s343
      %p345 = pneg %p230
      %p346 = pneg %p227
      %p347 = scmp.lt.s32.totalorder %s21, 1
      %s348 = scalar_select %p347, %s21, 1
      %s349 = smul.addr %s348, 10
      %s350 = smul.addr %s349, 4
      %s351 = scalar_lea.vmem %s8, %s350
      %p352 = pneg %p256
      %p353 = pneg %p253
      %p354 = scmp.lt.s32.totalorder %s21, 1
      %s355 = scalar_select %p354, %s21, 1
      %s356 = smul.addr %s355, 8
      %s357 = scalar_lea.vmem %s9, %s356
      %p358 = scmp.lt.s32.totalorder %s21, 1
      %s359 = scalar_select %p358, %s21, 1
      %s360 = smul.addr %s359, 10
      %s361 = smul.addr %s360, 4
      %s362 = scalar_lea.vmem %s0, %s361
      %p363 = scmp.lt.s32.totalorder %s21, 1
      %s364 = scalar_select %p363, %s21, 1
      %s365 = smul.addr %s364, 10
      %s366 = smul.addr %s365, 4
      %s367 = scalar_lea.vmem %s4, %s366
      %p368 = scmp.lt.s32.totalorder %s21, 1
      %s369 = scalar_select %p368, %s21, 1
      %s370 = smul.addr %s369, 10
      %s371 = smul.addr %s370, 4
      %s372 = scalar_lea.vmem %s6, %s371
      %p373 = scmp.lt.s32.totalorder %s21, 1
      %s374 = scalar_select %p373, %s21, 1
      %s375 = smul.addr %s374, 8
      %s376 = scalar_lea.vmem %s7, %s375
      %p377 = scmp.lt.s32.totalorder %s21, 1
      %s378 = scalar_select %p377, %s21, 1
      %s379 = smul.addr %s378, 10
      %s380 = smul.addr %s379, 4
      %s381 = scalar_lea.vmem %s8, %s380
      %p382 = scmp.lt.s32.totalorder %s21, 1
      %s383 = scalar_select %p382, %s21, 1
      %s384 = smul.addr %s383, 8
      %s385 = scalar_lea.vmem %s9, %s384
      %v387 = vlaneseq
      %v388 = vshrl.u32 %v387, 7
      %v389 = vadd.s32 %v388, 8
      %v390 = vadd.s32 %v388, 16
      %v391 = vadd.s32 %v388, 24
      %v392 = vadd.s32 %v388, 32
      %v393 = vadd.s32 %v388, 40
      %v394 = vadd.s32 %v388, 48
      %v395 = vadd.s32 %v388, 56
      %v396 = vadd.s32 %v388, 64
      %v397 = vadd.s32 %v388, 72
      %v398 = vcvt.s32.f32 %v388
      %v399 = vcvt.s32.f32 %v389
      %v400 = vcvt.s32.f32 %v390
      %v401 = vcvt.s32.f32 %v391
      %v402 = vcvt.s32.f32 %v392
      %v403 = vcvt.s32.f32 %v393
      %v404 = vcvt.s32.f32 %v394
      %v405 = vcvt.s32.f32 %v395
      %v406 = vcvt.s32.f32 %v396
      %v407 = vcvt.s32.f32 %v397
      %v408 = vadd.f32 %v398, 0.5
      %v409 = vadd.f32 %v399, 0.5
      %v410 = vadd.f32 %v400, 0.5
      %v411 = vadd.f32 %v401, 0.5
      %v412 = vadd.f32 %v402, 0.5
      %v413 = vadd.f32 %v403, 0.5
      %v414 = vadd.f32 %v404, 0.5
      %v415 = vadd.f32 %v405, 0.5
      %v416 = vadd.f32 %v406, 0.5
      %v417 = vadd.f32 %v407, 0.5
      %v418 = vmul.f32 %v408, 0.1
      %v419 = vmul.f32 %v409, 0.1
      %v420 = vmul.f32 %v410, 0.1
      %v421 = vmul.f32 %v411, 0.1
      %v422 = vmul.f32 %v412, 0.1
      %v423 = vmul.f32 %v413, 0.1
      %v424 = vmul.f32 %v414, 0.1
      %v425 = vmul.f32 %v415, 0.1
      %v426 = vmul.f32 %v416, 0.1
      %v427 = vmul.f32 %v417, 0.1
      %v428 = vfloor.f32 %v418
      %v429 = vfloor.f32 %v419
      %v430 = vfloor.f32 %v420
      %v431 = vfloor.f32 %v421
      %v432 = vfloor.f32 %v422
      %v433 = vfloor.f32 %v423
      %v434 = vfloor.f32 %v424
      %v435 = vfloor.f32 %v425
      %v436 = vfloor.f32 %v426
      %v437 = vfloor.f32 %v427
      %v438 = vmul.f32 %v428, 10.0
      %v439 = vmul.f32 %v429, 10.0
      %v440 = vmul.f32 %v430, 10.0
      %v441 = vmul.f32 %v431, 10.0
      %v442 = vmul.f32 %v432, 10.0
      %v443 = vmul.f32 %v433, 10.0
      %v444 = vmul.f32 %v434, 10.0
      %v445 = vmul.f32 %v435, 10.0
      %v446 = vmul.f32 %v436, 10.0
      %v447 = vmul.f32 %v437, 10.0
      %v448 = vsub.f32 %v398, %v438
      %v449 = vsub.f32 %v399, %v439
      %v450 = vsub.f32 %v400, %v440
      %v451 = vsub.f32 %v401, %v441
      %v452 = vsub.f32 %v402, %v442
      %v453 = vsub.f32 %v403, %v443
      %v454 = vsub.f32 %v404, %v444
      %v455 = vsub.f32 %v405, %v445
      %v456 = vsub.f32 %v406, %v446
      %v457 = vsub.f32 %v407, %v447
      %vm458 = vcmp.lt.f32.partialorder %v448, 7.5
      %vm459 = vcmp.lt.f32.partialorder %v449, 7.5
      %vm460 = vcmp.lt.f32.partialorder %v450, 7.5
      %vm461 = vcmp.lt.f32.partialorder %v451, 7.5
      %vm462 = vcmp.lt.f32.partialorder %v452, 7.5
      %vm463 = vcmp.lt.f32.partialorder %v453, 7.5
      %vm464 = vcmp.lt.f32.partialorder %v454, 7.5
      %vm465 = vcmp.lt.f32.partialorder %v455, 7.5
      %vm466 = vcmp.lt.f32.partialorder %v456, 7.5
      %vm467 = vcmp.lt.f32.partialorder %v457, 7.5
      %v468 = vld [vmem:[%s362] sm:$0xf]
      %v469 = vld [vmem:[%s362 + $0x4] sm:$0xf]
      %v470 = vld [vmem:[%s362 + $0x8] sm:$0xf]
      %v471 = vld [vmem:[%s362 + $0xc] sm:$0xf]
      %v472 = vld [vmem:[%s362 + $0x10] sm:$0xf]
      %v473 = vld [vmem:[%s362 + $0x14] sm:$0xf]
      %v474 = vld [vmem:[%s362 + $0x18] sm:$0xf]
      %v475 = vld [vmem:[%s362 + $0x1c] sm:$0xf]
      %v476 = vld [vmem:[%s362 + $0x20] sm:$0xf]
      %v477 = vld [vmem:[%s362 + $0x24] sm:$0xf]
      %v478 = vunpack.c.l.bf16 %v468
      %v479 = vunpack.c.l.bf16 %v469
      %v480 = vunpack.c.l.bf16 %v470
      %v481 = vunpack.c.l.bf16 %v471
      %v482 = vunpack.c.l.bf16 %v472
      %v483 = vunpack.c.l.bf16 %v473
      %v484 = vunpack.c.l.bf16 %v474
      %v485 = vunpack.c.l.bf16 %v475
      %v486 = vunpack.c.l.bf16 %v476
      %v487 = vunpack.c.l.bf16 %v477
      %v488 = vld [vmem:[%s1] sm:$0x1]
      %v490 = vlaneseq
      %v491 = vshrl.u32 %v490, 7
      %v492 = vsub.s32 0, %v491
      %v493 = vrot.slane %v488, %v492
      %v495 = vmul.f32 %v478, %v493
      %v496 = vmul.f32 %v479, %v493
      %v497 = vmul.f32 %v480, %v493
      %v498 = vmul.f32 %v481, %v493
      %v499 = vmul.f32 %v482, %v493
      %v500 = vmul.f32 %v483, %v493
      %v501 = vmul.f32 %v484, %v493
      %v502 = vmul.f32 %v485, %v493
      %v503 = vmul.f32 %v486, %v493
      %v504 = vmul.f32 %v487, %v493
      %v505 = vld [vmem:[%s2] sm:$0x1]
      %v507 = vlaneseq
      %v508 = vshrl.u32 %v507, 7
      %v509 = vsub.s32 0, %v508
      %v510 = vrot.slane %v505, %v509
      %v512 = vadd.f32 %v495, %v510
      %v513 = vadd.f32 %v496, %v510
      %v514 = vadd.f32 %v497, %v510
      %v515 = vadd.f32 %v498, %v510
      %v516 = vadd.f32 %v499, %v510
      %v517 = vadd.f32 %v500, %v510
      %v518 = vadd.f32 %v501, %v510
      %v519 = vadd.f32 %v502, %v510
      %v520 = vadd.f32 %v503, %v510
      %v521 = vadd.f32 %v504, %v510
      %v522 = vmax.f32 %v512, 0.0
      %v523 = vmax.f32 %v513, 0.0
      %v524 = vmax.f32 %v514, 0.0
      %v525 = vmax.f32 %v515, 0.0
      %v526 = vmax.f32 %v516, 0.0
      %v527 = vmax.f32 %v517, 0.0
      %v528 = vmax.f32 %v518, 0.0
      %v529 = vmax.f32 %v519, 0.0
      %v530 = vmax.f32 %v520, 0.0
      %v531 = vmax.f32 %v521, 0.0
      %v532 = vsel %vm458, 1, 0
      %v533 = vsel %vm459, 1, 0
      %v534 = vsel %vm460, 1, 0
      %v535 = vsel %vm461, 1, 0
      %v536 = vsel %vm462, 1, 0
      %v537 = vsel %vm463, 1, 0
      %v538 = vsel %vm464, 1, 0
      %v539 = vsel %vm465, 1, 0
      %v540 = vsel %vm466, 1, 0
      %v541 = vsel %vm467, 1, 0
      %vm542 = vcmp.eq.s32.totalorder %v532, 1
      %vm543 = vcmp.eq.s32.totalorder %v533, 1
      %vm544 = vcmp.eq.s32.totalorder %v534, 1
      %vm545 = vcmp.eq.s32.totalorder %v535, 1
      %vm546 = vcmp.eq.s32.totalorder %v536, 1
      %vm547 = vcmp.eq.s32.totalorder %v537, 1
      %vm548 = vcmp.eq.s32.totalorder %v538, 1
      %vm549 = vcmp.eq.s32.totalorder %v539, 1
      %vm550 = vcmp.eq.s32.totalorder %v540, 1
      %vm551 = vcmp.eq.s32.totalorder %v541, 1
      %v552 = vsel %vm542, %v522, 0.0
      %v553 = vsel %vm543, %v523, 0.0
      %v554 = vsel %vm544, %v524, 0.0
      %v555 = vsel %vm545, %v525, 0.0
      %v556 = vsel %vm546, %v526, 0.0
      %v557 = vsel %vm547, %v527, 0.0
      %v558 = vsel %vm548, %v528, 0.0
      %v559 = vsel %vm549, %v529, 0.0
      %v560 = vsel %vm550, %v530, 0.0
      %v561 = vsel %vm551, %v531, 0.0
      %v562 = vpack.c.bf16 %v553, %v552
      %v563 = vpack.c.bf16 %v555, %v554
      %v564 = vpack.c.bf16 %v557, %v556
      %v565 = vpack.c.bf16 %v559, %v558
      %v566 = vpack.c.bf16 %v561, %v560
      %567 = vst [vmem:[#allocation2] sm:$0xf] 0
      %568 = vst [vmem:[#allocation2 + $0x4] sm:$0xf] 0
      %569 = vst [vmem:[#allocation2 + $0x8] sm:$0xf] 0
      %570 = vst [vmem:[#allocation2 + $0xc] sm:$0xf] 0
      %571 = vst [vmem:[#allocation2 + $0x10] sm:$0xf] 0
      %572 = vst [vmem:[#allocation2 + $0x14] sm:$0xf] 0
      %573 = vst [vmem:[#allocation2 + $0x18] sm:$0xf] 0
      %574 = vst [vmem:[#allocation2 + $0x1c] sm:$0xf] 0
      %575 = vst [vmem:[#allocation2 + $0x20] sm:$0xf] 0
      %576 = vst [vmem:[#allocation2 + $0x24] sm:$0xf] 0
      %577 = vst [vmem:[#allocation2 + $0x28] sm:$0xf] 0
      %578 = vst [vmem:[#allocation2 + $0x2c] sm:$0xf] 0
      %579 = vst [vmem:[#allocation2 + $0x30] sm:$0xf] 0
      %580 = vst [vmem:[#allocation2 + $0x34] sm:$0xf] 0
      %vm581 = vcmask 1041408
      %vm582 = vsmask.f32 1280
      %vm583 = vmand %vm581, %vm582
      %v584 = vld [vmem:[#allocation2 + $0x38] sm:$0x3]
      %v585 = vsel %vm583, 0, %v584
      %586 = vst [vmem:[#allocation2 + $0x38] sm:$0x3] %v585
      %v592 = vunpack.c.l.b16 %v562
      %v593 = vunpack.c.h.b16 %v562
      %v594 = vunpack.c.l.b16 %v563
      %v595 = vunpack.c.h.b16 %v563
      %v596 = vunpack.c.l.b16 %v564
      %v597 = vunpack.c.h.b16 %v564
      %v598 = vunpack.c.l.b16 %v565
      %v599 = vunpack.c.h.b16 %v565
      %v600 = vunpack.c.l.b16 %v566
      %v601 = vunpack.c.h.b16 %v566
      %v602 = vpack.c.b16 %v592, %v592
      %v603 = vpack.c.b16 %v593, %v593
      %v604 = vpack.c.b16 %v594, %v594
      %v605 = vpack.c.b16 %v595, %v595
      %v606 = vpack.c.b16 %v596, %v596
      %v607 = vpack.c.b16 %v597, %v597
      %v608 = vpack.c.b16 %v598, %v598
      %v609 = vpack.c.b16 %v599, %v599
      %v610 = vpack.c.b16 %v600, %v600
      %v611 = vpack.c.b16 %v601, %v601
      %622 = vst [vmem:[#allocation2 + $0x8] sm:$0xf] %v602
      %623 = vst [vmem:[#allocation2 + $0xc] sm:$0xf] %v603
      %624 = vst [vmem:[#allocation2 + $0x10] sm:$0xf] %v604
      %625 = vst [vmem:[#allocation2 + $0x14] sm:$0xf] %v605
      %626 = vst [vmem:[#allocation2 + $0x18] sm:$0xf] %v606
      %627 = vst [vmem:[#allocation2 + $0x1c] sm:$0xf] %v607
      %628 = vst [vmem:[#allocation2 + $0x20] sm:$0xf] %v608
      %629 = vst [vmem:[#allocation2 + $0x24] sm:$0xf] %v609
      %630 = vst [vmem:[#allocation2 + $0x28] sm:$0xf] %v610
      %631 = vst [vmem:[#allocation2 + $0x2c] sm:$0xf] %v611
      %v632 = vld [vmem:[#allocation2] sm:$0xc]
      %v633 = vld [vmem:[#allocation2 + $0x4] sm:$0xf]
      %v634 = vld [vmem:[#allocation2 + $0x8] sm:$0xf]
      %v635 = vld [vmem:[#allocation2 + $0xc] sm:$0xf]
      %v636 = vld [vmem:[#allocation2 + $0x10] sm:$0xf]
      %v637 = vld [vmem:[#allocation2 + $0x14] sm:$0xf]
      %v638 = vld [vmem:[#allocation2 + $0x18] sm:$0xf]
      %v639 = vld [vmem:[#allocation2 + $0x1c] sm:$0xf]
      %v640 = vld [vmem:[#allocation2 + $0x20] sm:$0xf]
      %v641 = vld [vmem:[#allocation2 + $0x24] sm:$0xf]
      %v642 = vld [vmem:[#allocation2 + $0x28] sm:$0x7]
      %v643 = vld [vmem:[%s3] sm:$0xf]
      %v644 = vld [vmem:[%s3 + $0x4] sm:$0xf]
      %v645 = vld [vmem:[%s3 + $0x8] sm:$0xf]
      %v646 = vld [vmem:[%s3 + $0xc] sm:$0xf]
      %v647 = vld [vmem:[%s3 + $0x10] sm:$0xf]
      %v648 = vld [vmem:[%s3 + $0x14] sm:$0xf]
      %v649 = vld [vmem:[%s3 + $0x18] sm:$0xf]
      %v650 = vld [vmem:[%s3 + $0x1c] sm:$0xf]
      %v651 = vld [vmem:[%s3 + $0x20] sm:$0xf]
      %v652 = vld [vmem:[%s3 + $0x24] sm:$0xf]
      %v653 = vld [vmem:[%s3 + $0x28] sm:$0xf]
      %v654 = vld [vmem:[%s3 + $0x2c] sm:$0xf]
      %v655 = vld [vmem:[%s3 + $0x30] sm:$0xf]
      %v656 = vld [vmem:[%s3 + $0x34] sm:$0xf]
      %v657 = vld [vmem:[%s3 + $0x38] sm:$0xf]
      %v658 = vld [vmem:[%s3 + $0x3c] sm:$0xf]
      %v659 = vld [vmem:[#allocation2] sm:$0x8]
      %s660 = scalar_lea.vmem %s3, 64
      %v661 = vld [vmem:[%s660] sm:$0xf]
      %v662 = vld [vmem:[%s660 + $0x4] sm:$0xf]
      %v663 = vld [vmem:[%s660 + $0x8] sm:$0xf]
      %v664 = vld [vmem:[%s660 + $0xc] sm:$0xf]
      %v665 = vld [vmem:[%s660 + $0x10] sm:$0xf]
      %v666 = vld [vmem:[%s660 + $0x14] sm:$0xf]
      %v667 = vld [vmem:[%s660 + $0x18] sm:$0xf]
      %v668 = vld [vmem:[%s660 + $0x1c] sm:$0xf]
      %v669 = vld [vmem:[%s660 + $0x20] sm:$0xf]
      %v670 = vld [vmem:[%s660 + $0x24] sm:$0xf]
      %v671 = vld [vmem:[%s660 + $0x28] sm:$0xf]
      %v672 = vld [vmem:[%s660 + $0x2c] sm:$0xf]
      %v673 = vld [vmem:[%s660 + $0x30] sm:$0xf]
      %v674 = vld [vmem:[%s660 + $0x34] sm:$0xf]
      %v675 = vld [vmem:[%s660 + $0x38] sm:$0xf]
      %v676 = vld [vmem:[%s660 + $0x3c] sm:$0xf]
      %v688 = vunpack.c.l.b16 %v659
      %v689 = vunpack.c.l.b16 %v633
      %v690 = vunpack.c.l.b16 %v634
      %v691 = vunpack.c.l.b16 %v635
      %v692 = vunpack.c.l.b16 %v636
      %v693 = vunpack.c.l.b16 %v637
      %v694 = vunpack.c.l.b16 %v638
      %v695 = vunpack.c.l.b16 %v639
      %v696 = vunpack.c.l.b16 %v640
      %v697 = vunpack.c.l.b16 %v641
      %v698 = vunpack.c.l.b16 %v642
      %v699 = vpack.c.b16 %v689, %v688
      %v700 = vpack.c.b16 %v691, %v690
      %v701 = vpack.c.b16 %v693, %v692
      %v702 = vpack.c.b16 %v695, %v694
      %v703 = vpack.c.b16 %v697, %v696
      %v704 = vpack.c.b16 %v698, %v698
      %vm705 = vcmask 1044480
      %v706 = vrot.slane %v699, 3
      %v707 = vrot.slane %v700, 3
      %v708 = vsel %vm705, %v706, %v707
      %v709 = vrot.slane %v701, 3
      %v710 = vsel %vm705, %v707, %v709
      %v711 = vrot.slane %v702, 3
      %v712 = vsel %vm705, %v709, %v711
      %v713 = vrot.slane %v703, 3
      %v714 = vsel %vm705, %v711, %v713
      %v715 = vrot.slane %v704, 3
      %v716 = vsel %vm705, %v713, %v715
      %v738 = vunpack.c.l.b16 %v661
      %v739 = vunpack.c.l.b16 %v662
      %v740 = vunpack.c.l.b16 %v663
      %v741 = vunpack.c.l.b16 %v664
      %v742 = vunpack.c.l.b16 %v665
      %v743 = vunpack.c.l.b16 %v666
      %v744 = vunpack.c.l.b16 %v667
      %v745 = vunpack.c.l.b16 %v668
      %v746 = vunpack.c.l.b16 %v669
      %v747 = vunpack.c.l.b16 %v670
      %v748 = vunpack.c.l.b16 %v671
      %v749 = vunpack.c.l.b16 %v672
      %v750 = vunpack.c.l.b16 %v673
      %v751 = vunpack.c.l.b16 %v674
      %v752 = vunpack.c.l.b16 %v675
      %v753 = vunpack.c.l.b16 %v676
      %v754 = vpack.c.b16 %v739, %v738
      %v755 = vpack.c.b16 %v741, %v740
      %v756 = vpack.c.b16 %v743, %v742
      %v757 = vpack.c.b16 %v745, %v744
      %v758 = vpack.c.b16 %v747, %v746
      %v759 = vpack.c.b16 %v749, %v748
      %v760 = vpack.c.b16 %v751, %v750
      %v761 = vpack.c.b16 %v753, %v752
      %770 = vmatprep.subr.bf16.mxu0 0
      %771 = vmatpush1.bf16.msra.mxu0 %v761
      %772 = vmatprep.subr.bf16.mxu0 0
      %773 = vmatpush1.bf16.msra.mxu0 %v760
      %774 = vmatprep.subr.bf16.mxu0 0
      %775 = vmatpush1.bf16.msra.mxu0 %v759
      %776 = vmatprep.subr.bf16.mxu0 0
      %777 = vmatpush1.bf16.msra.mxu0 %v758
      %778 = vmatprep.subr.bf16.mxu0 0
      %779 = vmatpush1.bf16.msra.mxu0 %v757
      %780 = vmatprep.subr.bf16.mxu0 0
      %781 = vmatpush1.bf16.msra.mxu0 %v756
      %782 = vmatprep.subr.bf16.mxu0 0
      %783 = vmatpush1.bf16.msra.mxu0 %v755
      %784 = vmatprep.subr.bf16.mxu0 0
      %785 = vmatpush1.bf16.msra.mxu0 %v754
      %786 = vmatprep.subr.bf16.mxu0 0
      %787 = vmatpush2.bf16.msra.mxu0 0
      %788 = vmatprep.subr.bf16.mxu0 0
      %789 = vmatpush2.bf16.msra.mxu0 0
      %790 = vmatprep.subr.bf16.mxu0 0
      %791 = vmatpush2.bf16.msra.mxu0 0
      %792 = vmatprep.subr.bf16.mxu0 0
      %793 = vmatpush2.bf16.msra.mxu0 0
      %794 = vmatprep.subr.bf16.mxu0 0
      %795 = vmatpush2.bf16.msra.mxu0 0
      %796 = vmatprep.subr.bf16.mxu0 0
      %797 = vmatpush2.bf16.msra.mxu0 0
      %798 = vmatprep.subr.bf16.mxu0 0
      %799 = vmatpush2.bf16.msra.mxu0 0
      %800 = vmatprep.subr.bf16.mxu0 0
      %801 = vmatpush2.bf16.msra.mxu0 0
      %802 = vmatprep.mubr.bf16.mxu0 0
      %803 = vmatmul.mubr.bf16.gmra.mxu0 %v708
      %v804 = vpop.f32.mrf.mxu0
      %v805 = vadd.f32 0.0, %v804
      %v806 = vpop.f32.mrf.mxu0
      %v807 = vpop.f32.mrf.mxu0
      %v808 = vadd.f32 0.0, %v807
      %v809 = vpop.f32.mrf.mxu0
      %810 = vmatprep.mubr.bf16.mxu0 0
      %811 = vmatmul.mubr.bf16.gmra.mxu0 %v710
      %v812 = vpop.f32.mrf.mxu0
      %v813 = vadd.f32 0.0, %v812
      %v814 = vpop.f32.mrf.mxu0
      %v815 = vpop.f32.mrf.mxu0
      %v816 = vadd.f32 0.0, %v815
      %v817 = vpop.f32.mrf.mxu0
      %818 = vmatprep.mubr.bf16.mxu0 0
      %819 = vmatmul.mubr.bf16.gmra.mxu0 %v712
      %v820 = vpop.f32.mrf.mxu0
      %v821 = vadd.f32 0.0, %v820
      %v822 = vpop.f32.mrf.mxu0
      %v823 = vpop.f32.mrf.mxu0
      %v824 = vadd.f32 0.0, %v823
      %v825 = vpop.f32.mrf.mxu0
      %826 = vmatprep.mubr.bf16.mxu0 0
      %827 = vmatmul.mubr.bf16.gmra.mxu0 %v714
      %v828 = vpop.f32.mrf.mxu0
      %v829 = vadd.f32 0.0, %v828
      %v830 = vpop.f32.mrf.mxu0
      %v831 = vpop.f32.mrf.mxu0
      %v832 = vadd.f32 0.0, %v831
      %v833 = vpop.f32.mrf.mxu0
      %834 = vmatprep.mubr.bf16.mxu0 0
      %835 = vmatmul.mubr.bf16.gmra.mxu0 %v716
      %v836 = vpop.f32.mrf.mxu0
      %v837 = vadd.f32 0.0, %v836
      %v838 = vpop.f32.mrf.mxu0
      %v839 = vpop.f32.mrf.mxu0
      %v840 = vadd.f32 0.0, %v839
      %v841 = vpop.f32.mrf.mxu0
      %842 = vdwg.mxu0
      %v844 = vunpack.c.l.b16 %v632
      %v845 = vpack.c.b16 %v689, %v844
      %vm846 = vsmask.f32 5376
      %v848 = vshrl.u32 %v845, 16
      %v850 = vrot.slane %v848, 2
      %v851 = vshll.u32 %v845, 16
      %v853 = vrot.slane %v851, 3
      %v854 = vor.u32 %v850, %v853
      %v856 = vshrl.u32 %v700, 16
      %v858 = vrot.slane %v856, 2
      %v859 = vshll.u32 %v700, 16
      %v861 = vrot.slane %v859, 3
      %v862 = vor.u32 %v858, %v861
      %v863 = vsel %vm846, %v854, %v862
      %v865 = vshrl.u32 %v701, 16
      %v867 = vrot.slane %v865, 2
      %v868 = vshll.u32 %v701, 16
      %v870 = vrot.slane %v868, 3
      %v871 = vor.u32 %v867, %v870
      %v872 = vsel %vm846, %v862, %v871
      %v874 = vshrl.u32 %v702, 16
      %v876 = vrot.slane %v874, 2
      %v877 = vshll.u32 %v702, 16
      %v879 = vrot.slane %v877, 3
      %v880 = vor.u32 %v876, %v879
      %v881 = vsel %vm846, %v871, %v880
      %v883 = vshrl.u32 %v703, 16
      %v885 = vrot.slane %v883, 2
      %v886 = vshll.u32 %v703, 16
      %v888 = vrot.slane %v886, 3
      %v889 = vor.u32 %v885, %v888
      %v890 = vsel %vm846, %v880, %v889
      %v892 = vshrl.u32 %v704, 16
      %v894 = vrot.slane %v892, 2
      %v895 = vshll.u32 %v704, 16
      %v897 = vrot.slane %v895, 3
      %v898 = vor.u32 %v894, %v897
      %v899 = vsel %vm846, %v889, %v898
      %v921 = vunpack.c.l.b16 %v643
      %v922 = vunpack.c.l.b16 %v644
      %v923 = vunpack.c.l.b16 %v645
      %v924 = vunpack.c.l.b16 %v646
      %v925 = vunpack.c.l.b16 %v647
      %v926 = vunpack.c.l.b16 %v648
      %v927 = vunpack.c.l.b16 %v649
      %v928 = vunpack.c.l.b16 %v650
      %v929 = vunpack.c.l.b16 %v651
      %v930 = vunpack.c.l.b16 %v652
      %v931 = vunpack.c.l.b16 %v653
      %v932 = vunpack.c.l.b16 %v654
      %v933 = vunpack.c.l.b16 %v655
      %v934 = vunpack.c.l.b16 %v656
      %v935 = vunpack.c.l.b16 %v657
      %v936 = vunpack.c.l.b16 %v658
      %v937 = vpack.c.b16 %v922, %v921
      %v938 = vpack.c.b16 %v924, %v923
      %v939 = vpack.c.b16 %v926, %v925
      %v940 = vpack.c.b16 %v928, %v927
      %v941 = vpack.c.b16 %v930, %v929
      %v942 = vpack.c.b16 %v932, %v931
      %v943 = vpack.c.b16 %v934, %v933
      %v944 = vpack.c.b16 %v936, %v935
      %953 = vmatprep.subr.bf16.mxu0 0
      %954 = vmatpush1.bf16.msra.mxu0 %v944
      %955 = vmatprep.subr.bf16.mxu0 0
      %956 = vmatpush1.bf16.msra.mxu0 %v943
      %957 = vmatprep.subr.bf16.mxu0 0
      %958 = vmatpush1.bf16.msra.mxu0 %v942
      %959 = vmatprep.subr.bf16.mxu0 0
      %960 = vmatpush1.bf16.msra.mxu0 %v941
      %961 = vmatprep.subr.bf16.mxu0 0
      %962 = vmatpush1.bf16.msra.mxu0 %v940
      %963 = vmatprep.subr.bf16.mxu0 0
      %964 = vmatpush1.bf16.msra.mxu0 %v939
      %965 = vmatprep.subr.bf16.mxu0 0
      %966 = vmatpush1.bf16.msra.mxu0 %v938
      %967 = vmatprep.subr.bf16.mxu0 0
      %968 = vmatpush1.bf16.msra.mxu0 %v937
      %969 = vmatprep.subr.bf16.mxu0 0
      %970 = vmatpush2.bf16.msra.mxu0 0
      %971 = vmatprep.subr.bf16.mxu0 0
      %972 = vmatpush2.bf16.msra.mxu0 0
      %973 = vmatprep.subr.bf16.mxu0 0
      %974 = vmatpush2.bf16.msra.mxu0 0
      %975 = vmatprep.subr.bf16.mxu0 0
      %976 = vmatpush2.bf16.msra.mxu0 0
      %977 = vmatprep.subr.bf16.mxu0 0
      %978 = vmatpush2.bf16.msra.mxu0 0
      %979 = vmatprep.subr.bf16.mxu0 0
      %980 = vmatpush2.bf16.msra.mxu0 0
      %981 = vmatprep.subr.bf16.mxu0 0
      %982 = vmatpush2.bf16.msra.mxu0 0
      %983 = vmatprep.subr.bf16.mxu0 0
      %984 = vmatpush2.bf16.msra.mxu0 0
      %985 = vmatprep.mubr.bf16.mxu0 0
      %986 = vmatmul.mubr.bf16.gmra.mxu0 %v863
      %v987 = vpop.f32.mrf.mxu0
      %v988 = vadd.f32 %v805, %v987
      %v989 = vpop.f32.mrf.mxu0
      %v990 = vpop.f32.mrf.mxu0
      %v991 = vadd.f32 %v808, %v990
      %v992 = vpop.f32.mrf.mxu0
      %993 = vmatprep.mubr.bf16.mxu0 0
      %994 = vmatmul.mubr.bf16.gmra.mxu0 %v872
      %v995 = vpop.f32.mrf.mxu0
      %v996 = vadd.f32 %v813, %v995
      %v997 = vpop.f32.mrf.mxu0
      %v998 = vpop.f32.mrf.mxu0
      %v999 = vadd.f32 %v816, %v998
      %v1000 = vpop.f32.mrf.mxu0
      %1001 = vmatprep.mubr.bf16.mxu0 0
      %1002 = vmatmul.mubr.bf16.gmra.mxu0 %v881
      %v1003 = vpop.f32.mrf.mxu0
      %v1004 = vadd.f32 %v821, %v1003
      %v1005 = vpop.f32.mrf.mxu0
      %v1006 = vpop.f32.mrf.mxu0
      %v1007 = vadd.f32 %v824, %v1006
      %v1008 = vpop.f32.mrf.mxu0
      %1009 = vmatprep.mubr.bf16.mxu0 0
      %1010 = vmatmul.mubr.bf16.gmra.mxu0 %v890
      %v1011 = vpop.f32.mrf.mxu0
      %v1012 = vadd.f32 %v829, %v1011
      %v1013 = vpop.f32.mrf.mxu0
      %v1014 = vpop.f32.mrf.mxu0
      %v1015 = vadd.f32 %v832, %v1014
      %v1016 = vpop.f32.mrf.mxu0
      %1017 = vmatprep.mubr.bf16.mxu0 0
      %1018 = vmatmul.mubr.bf16.gmra.mxu0 %v899
      %v1019 = vpop.f32.mrf.mxu0
      %v1020 = vadd.f32 %v837, %v1019
      %v1021 = vpop.f32.mrf.mxu0
      %v1022 = vpop.f32.mrf.mxu0
      %v1023 = vadd.f32 %v840, %v1022
      %v1024 = vpop.f32.mrf.mxu0
      %1025 = vdwg.mxu0
      %v1026 = vld [vmem:[#allocation2 + $0x28] sm:$0xf]
      %s1027 = scalar_lea.vmem %s3, 128
      %v1028 = vld [vmem:[%s1027] sm:$0xf]
      %v1029 = vld [vmem:[%s1027 + $0x4] sm:$0xf]
      %v1030 = vld [vmem:[%s1027 + $0x8] sm:$0xf]
      %v1031 = vld [vmem:[%s1027 + $0xc] sm:$0xf]
      %v1032 = vld [vmem:[%s1027 + $0x10] sm:$0xf]
      %v1033 = vld [vmem:[%s1027 + $0x14] sm:$0xf]
      %v1034 = vld [vmem:[%s1027 + $0x18] sm:$0xf]
      %v1035 = vld [vmem:[%s1027 + $0x1c] sm:$0xf]
      %v1036 = vld [vmem:[%s1027 + $0x20] sm:$0xf]
      %v1037 = vld [vmem:[%s1027 + $0x24] sm:$0xf]
      %v1038 = vld [vmem:[%s1027 + $0x28] sm:$0xf]
      %v1039 = vld [vmem:[%s1027 + $0x2c] sm:$0xf]
      %v1040 = vld [vmem:[%s1027 + $0x30] sm:$0xf]
      %v1041 = vld [vmem:[%s1027 + $0x34] sm:$0xf]
      %v1042 = vld [vmem:[%s1027 + $0x38] sm:$0xf]
      %v1043 = vld [vmem:[%s1027 + $0x3c] sm:$0xf]
      %v1045 = vunpack.c.l.b16 %v1026
      %v1046 = vpack.c.b16 %v1045, %v1045
      %vm1047 = vsmask.f32 4352
      %v1049 = vshrl.u32 %v699, 16
      %v1051 = vrot.slane %v1049, 3
      %v1052 = vshll.u32 %v699, 16
      %v1054 = vrot.slane %v1052, 4
      %v1055 = vor.u32 %v1051, %v1054
      %v1056 = vrot.slane %v856, 3
      %v1057 = vrot.slane %v859, 4
      %v1058 = vor.u32 %v1056, %v1057
      %v1059 = vsel %vm1047, %v1055, %v1058
      %v1060 = vrot.slane %v865, 3
      %v1061 = vrot.slane %v868, 4
      %v1062 = vor.u32 %v1060, %v1061
      %v1063 = vsel %vm1047, %v1058, %v1062
      %v1064 = vrot.slane %v874, 3
      %v1065 = vrot.slane %v877, 4
      %v1066 = vor.u32 %v1064, %v1065
      %v1067 = vsel %vm1047, %v1062, %v1066
      %v1068 = vrot.slane %v883, 3
      %v1069 = vrot.slane %v886, 4
      %v1070 = vor.u32 %v1068, %v1069
      %v1071 = vsel %vm1047, %v1066, %v1070
      %v1073 = vshrl.u32 %v1046, 16
      %v1075 = vrot.slane %v1073, 3
      %v1076 = vshll.u32 %v1046, 16
      %v1078 = vrot.slane %v1076, 4
      %v1079 = vor.u32 %v1075, %v1078
      %v1080 = vsel %vm1047, %v1070, %v1079
      %v1102 = vunpack.c.l.b16 %v1028
      %v1103 = vunpack.c.l.b16 %v1029
      %v1104 = vunpack.c.l.b16 %v1030
      %v1105 = vunpack.c.l.b16 %v1031
      %v1106 = vunpack.c.l.b16 %v1032
      %v1107 = vunpack.c.l.b16 %v1033
      %v1108 = vunpack.c.l.b16 %v1034
      %v1109 = vunpack.c.l.b16 %v1035
      %v1110 = vunpack.c.l.b16 %v1036
      %v1111 = vunpack.c.l.b16 %v1037
      %v1112 = vunpack.c.l.b16 %v1038
      %v1113 = vunpack.c.l.b16 %v1039
      %v1114 = vunpack.c.l.b16 %v1040
      %v1115 = vunpack.c.l.b16 %v1041
      %v1116 = vunpack.c.l.b16 %v1042
      %v1117 = vunpack.c.l.b16 %v1043
      %v1118 = vpack.c.b16 %v1103, %v1102
      %v1119 = vpack.c.b16 %v1105, %v1104
      %v1120 = vpack.c.b16 %v1107, %v1106
      %v1121 = vpack.c.b16 %v1109, %v1108
      %v1122 = vpack.c.b16 %v1111, %v1110
      %v1123 = vpack.c.b16 %v1113, %v1112
      %v1124 = vpack.c.b16 %v1115, %v1114
      %v1125 = vpack.c.b16 %v1117, %v1116
      %1134 = vmatprep.subr.bf16.mxu0 0
      %1135 = vmatpush1.bf16.msra.mxu0 %v1125
      %1136 = vmatprep.subr.bf16.mxu0 0
      %1137 = vmatpush1.bf16.msra.mxu0 %v1124
      %1138 = vmatprep.subr.bf16.mxu0 0
      %1139 = vmatpush1.bf16.msra.mxu0 %v1123
      %1140 = vmatprep.subr.bf16.mxu0 0
      %1141 = vmatpush1.bf16.msra.mxu0 %v1122
      %1142 = vmatprep.subr.bf16.mxu0 0
      %1143 = vmatpush1.bf16.msra.mxu0 %v1121
      %1144 = vmatprep.subr.bf16.mxu0 0
      %1145 = vmatpush1.bf16.msra.mxu0 %v1120
      %1146 = vmatprep.subr.bf16.mxu0 0
      %1147 = vmatpush1.bf16.msra.mxu0 %v1119
      %1148 = vmatprep.subr.bf16.mxu0 0
      %1149 = vmatpush1.bf16.msra.mxu0 %v1118
      %1150 = vmatprep.subr.bf16.mxu0 0
      %1151 = vmatpush2.bf16.msra.mxu0 0
      %1152 = vmatprep.subr.bf16.mxu0 0
      %1153 = vmatpush2.bf16.msra.mxu0 0
      %1154 = vmatprep.subr.bf16.mxu0 0
      %1155 = vmatpush2.bf16.msra.mxu0 0
      %1156 = vmatprep.subr.bf16.mxu0 0
      %1157 = vmatpush2.bf16.msra.mxu0 0
      %1158 = vmatprep.subr.bf16.mxu0 0
      %1159 = vmatpush2.bf16.msra.mxu0 0
      %1160 = vmatprep.subr.bf16.mxu0 0
      %1161 = vmatpush2.bf16.msra.mxu0 0
      %1162 = vmatprep.subr.bf16.mxu0 0
      %1163 = vmatpush2.bf16.msra.mxu0 0
      %1164 = vmatprep.subr.bf16.mxu0 0
      %1165 = vmatpush2.bf16.msra.mxu0 0
      %1166 = vmatprep.mubr.bf16.mxu0 0
      %1167 = vmatmul.mubr.bf16.gmra.mxu0 %v1059
      %v1168 = vpop.f32.mrf.mxu0
      %v1169 = vadd.f32 0.0, %v1168
      %v1170 = vpop.f32.mrf.mxu0
      %v1171 = vpop.f32.mrf.mxu0
      %v1172 = vadd.f32 0.0, %v1171
      %v1173 = vpop.f32.mrf.mxu0
      %1174 = vmatprep.mubr.bf16.mxu0 0
      %1175 = vmatmul.mubr.bf16.gmra.mxu0 %v1063
      %v1176 = vpop.f32.mrf.mxu0
      %v1177 = vadd.f32 0.0, %v1176
      %v1178 = vpop.f32.mrf.mxu0
      %v1179 = vpop.f32.mrf.mxu0
      %v1180 = vadd.f32 0.0, %v1179
      %v1181 = vpop.f32.mrf.mxu0
      %1182 = vmatprep.mubr.bf16.mxu0 0
      %1183 = vmatmul.mubr.bf16.gmra.mxu0 %v1067
      %v1184 = vpop.f32.mrf.mxu0
      %v1185 = vadd.f32 0.0, %v1184
      %v1186 = vpop.f32.mrf.mxu0
      %v1187 = vpop.f32.mrf.mxu0
      %v1188 = vadd.f32 0.0, %v1187
      %v1189 = vpop.f32.mrf.mxu0
      %1190 = vmatprep.mubr.bf16.mxu0 0
      %1191 = vmatmul.mubr.bf16.gmra.mxu0 %v1071
      %v1192 = vpop.f32.mrf.mxu0
      %v1193 = vadd.f32 0.0, %v1192
      %v1194 = vpop.f32.mrf.mxu0
      %v1195 = vpop.f32.mrf.mxu0
      %v1196 = vadd.f32 0.0, %v1195
      %v1197 = vpop.f32.mrf.mxu0
      %1198 = vmatprep.mubr.bf16.mxu0 0
      %1199 = vmatmul.mubr.bf16.gmra.mxu0 %v1080
      %v1200 = vpop.f32.mrf.mxu0
      %v1201 = vadd.f32 0.0, %v1200
      %v1202 = vpop.f32.mrf.mxu0
      %v1203 = vpop.f32.mrf.mxu0
      %v1204 = vadd.f32 0.0, %v1203
      %v1205 = vpop.f32.mrf.mxu0
      %1206 = vdwg.mxu0
      %v1207 = vadd.f32 %v988, %v1169
      %v1208 = vadd.f32 %v991, %v1172
      %v1209 = vadd.f32 %v996, %v1177
      %v1210 = vadd.f32 %v999, %v1180
      %v1211 = vadd.f32 %v1004, %v1185
      %v1212 = vadd.f32 %v1007, %v1188
      %v1213 = vadd.f32 %v1012, %v1193
      %v1214 = vadd.f32 %v1015, %v1196
      %v1215 = vadd.f32 %v1020, %v1201
      %v1216 = vadd.f32 %v1023, %v1204
      %v1217 = vld [vmem:[#allocation2 + $0x4] sm:$0x8]
      %v1218 = vld [vmem:[#allocation2 + $0x8] sm:$0xf]
      %v1219 = vld [vmem:[#allocation2 + $0xc] sm:$0xf]
      %v1220 = vld [vmem:[#allocation2 + $0x10] sm:$0xf]
      %v1221 = vld [vmem:[#allocation2 + $0x14] sm:$0xf]
      %v1222 = vld [vmem:[#allocation2 + $0x18] sm:$0xf]
      %v1223 = vld [vmem:[#allocation2 + $0x1c] sm:$0xf]
      %v1224 = vld [vmem:[#allocation2 + $0x20] sm:$0xf]
      %v1225 = vld [vmem:[#allocation2 + $0x24] sm:$0xf]
      %v1226 = vld [vmem:[#allocation2 + $0x28] sm:$0xf]
      %v1227 = vld [vmem:[#allocation2 + $0x2c] sm:$0xf]
      %s1228 = scalar_lea.vmem %s3, 192
      %v1229 = vld [vmem:[%s1228] sm:$0xf]
      %v1230 = vld [vmem:[%s1228 + $0x4] sm:$0xf]
      %v1231 = vld [vmem:[%s1228 + $0x8] sm:$0xf]
      %v1232 = vld [vmem:[%s1228 + $0xc] sm:$0xf]
      %v1233 = vld [vmem:[%s1228 + $0x10] sm:$0xf]
      %v1234 = vld [vmem:[%s1228 + $0x14] sm:$0xf]
      %v1235 = vld [vmem:[%s1228 + $0x18] sm:$0xf]
      %v1236 = vld [vmem:[%s1228 + $0x1c] sm:$0xf]
      %v1237 = vld [vmem:[%s1228 + $0x20] sm:$0xf]
      %v1238 = vld [vmem:[%s1228 + $0x24] sm:$0xf]
      %v1239 = vld [vmem:[%s1228 + $0x28] sm:$0xf]
      %v1240 = vld [vmem:[%s1228 + $0x2c] sm:$0xf]
      %v1241 = vld [vmem:[%s1228 + $0x30] sm:$0xf]
      %v1242 = vld [vmem:[%s1228 + $0x34] sm:$0xf]
      %v1243 = vld [vmem:[%s1228 + $0x38] sm:$0xf]
      %v1244 = vld [vmem:[%s1228 + $0x3c] sm:$0xf]
      %v1256 = vunpack.c.l.b16 %v1217
      %v1257 = vunpack.c.l.b16 %v1218
      %v1258 = vunpack.c.l.b16 %v1219
      %v1259 = vunpack.c.l.b16 %v1220
      %v1260 = vunpack.c.l.b16 %v1221
      %v1261 = vunpack.c.l.b16 %v1222
      %v1262 = vunpack.c.l.b16 %v1223
      %v1263 = vunpack.c.l.b16 %v1224
      %v1264 = vunpack.c.l.b16 %v1225
      %v1265 = vunpack.c.l.b16 %v1226
      %v1266 = vunpack.c.l.b16 %v1227
      %v1267 = vpack.c.b16 %v1257, %v1256
      %v1268 = vpack.c.b16 %v1259, %v1258
      %v1269 = vpack.c.b16 %v1261, %v1260
      %v1270 = vpack.c.b16 %v1263, %v1262
      %v1271 = vpack.c.b16 %v1265, %v1264
      %v1272 = vpack.c.b16 %v1266, %v1266
      %v1274 = vshrl.u32 %v1267, 16
      %v1276 = vrot.slane %v1274, 3
      %v1277 = vshll.u32 %v1267, 16
      %v1279 = vrot.slane %v1277, 4
      %v1280 = vor.u32 %v1276, %v1279
      %v1282 = vshrl.u32 %v1268, 16
      %v1284 = vrot.slane %v1282, 3
      %v1285 = vshll.u32 %v1268, 16
      %v1287 = vrot.slane %v1285, 4
      %v1288 = vor.u32 %v1284, %v1287
      %v1289 = vsel %vm1047, %v1280, %v1288
      %v1291 = vshrl.u32 %v1269, 16
      %v1293 = vrot.slane %v1291, 3
      %v1294 = vshll.u32 %v1269, 16
      %v1296 = vrot.slane %v1294, 4
      %v1297 = vor.u32 %v1293, %v1296
      %v1298 = vsel %vm1047, %v1288, %v1297
      %v1300 = vshrl.u32 %v1270, 16
      %v1302 = vrot.slane %v1300, 3
      %v1303 = vshll.u32 %v1270, 16
      %v1305 = vrot.slane %v1303, 4
      %v1306 = vor.u32 %v1302, %v1305
      %v1307 = vsel %vm1047, %v1297, %v1306
      %v1309 = vshrl.u32 %v1271, 16
      %v1311 = vrot.slane %v1309, 3
      %v1312 = vshll.u32 %v1271, 16
      %v1314 = vrot.slane %v1312, 4
      %v1315 = vor.u32 %v1311, %v1314
      %v1316 = vsel %vm1047, %v1306, %v1315
      %v1318 = vshrl.u32 %v1272, 16
      %v1320 = vrot.slane %v1318, 3
      %v1321 = vshll.u32 %v1272, 16
      %v1323 = vrot.slane %v1321, 4
      %v1324 = vor.u32 %v1320, %v1323
      %v1325 = vsel %vm1047, %v1315, %v1324
      %v1347 = vunpack.c.l.b16 %v1229
      %v1348 = vunpack.c.l.b16 %v1230
      %v1349 = vunpack.c.l.b16 %v1231
      %v1350 = vunpack.c.l.b16 %v1232
      %v1351 = vunpack.c.l.b16 %v1233
      %v1352 = vunpack.c.l.b16 %v1234
      %v1353 = vunpack.c.l.b16 %v1235
      %v1354 = vunpack.c.l.b16 %v1236
      %v1355 = vunpack.c.l.b16 %v1237
      %v1356 = vunpack.c.l.b16 %v1238
      %v1357 = vunpack.c.l.b16 %v1239
      %v1358 = vunpack.c.l.b16 %v1240
      %v1359 = vunpack.c.l.b16 %v1241
      %v1360 = vunpack.c.l.b16 %v1242
      %v1361 = vunpack.c.l.b16 %v1243
      %v1362 = vunpack.c.l.b16 %v1244
      %v1363 = vpack.c.b16 %v1348, %v1347
      %v1364 = vpack.c.b16 %v1350, %v1349
      %v1365 = vpack.c.b16 %v1352, %v1351
      %v1366 = vpack.c.b16 %v1354, %v1353
      %v1367 = vpack.c.b16 %v1356, %v1355
      %v1368 = vpack.c.b16 %v1358, %v1357
      %v1369 = vpack.c.b16 %v1360, %v1359
      %v1370 = vpack.c.b16 %v1362, %v1361
      %1379 = vmatprep.subr.bf16.mxu0 0
      %1380 = vmatpush1.bf16.msra.mxu0 %v1370
      %1381 = vmatprep.subr.bf16.mxu0 0
      %1382 = vmatpush1.bf16.msra.mxu0 %v1369
      %1383 = vmatprep.subr.bf16.mxu0 0
      %1384 = vmatpush1.bf16.msra.mxu0 %v1368
      %1385 = vmatprep.subr.bf16.mxu0 0
      %1386 = vmatpush1.bf16.msra.mxu0 %v1367
      %1387 = vmatprep.subr.bf16.mxu0 0
      %1388 = vmatpush1.bf16.msra.mxu0 %v1366
      %1389 = vmatprep.subr.bf16.mxu0 0
      %1390 = vmatpush1.bf16.msra.mxu0 %v1365
      %1391 = vmatprep.subr.bf16.mxu0 0
      %1392 = vmatpush1.bf16.msra.mxu0 %v1364
      %1393 = vmatprep.subr.bf16.mxu0 0
      %1394 = vmatpush1.bf16.msra.mxu0 %v1363
      %1395 = vmatprep.subr.bf16.mxu0 0
      %1396 = vmatpush2.bf16.msra.mxu0 0
      %1397 = vmatprep.subr.bf16.mxu0 0
      %1398 = vmatpush2.bf16.msra.mxu0 0
      %1399 = vmatprep.subr.bf16.mxu0 0
      %1400 = vmatpush2.bf16.msra.mxu0 0
      %1401 = vmatprep.subr.bf16.mxu0 0
      %1402 = vmatpush2.bf16.msra.mxu0 0
      %1403 = vmatprep.subr.bf16.mxu0 0
      %1404 = vmatpush2.bf16.msra.mxu0 0
      %1405 = vmatprep.subr.bf16.mxu0 0
      %1406 = vmatpush2.bf16.msra.mxu0 0
      %1407 = vmatprep.subr.bf16.mxu0 0
      %1408 = vmatpush2.bf16.msra.mxu0 0
      %1409 = vmatprep.subr.bf16.mxu0 0
      %1410 = vmatpush2.bf16.msra.mxu0 0
      %1411 = vmatprep.mubr.bf16.mxu0 0
      %1412 = vmatmul.mubr.bf16.gmra.mxu0 %v1289
      %v1413 = vpop.f32.mrf.mxu0
      %v1414 = vadd.f32 0.0, %v1413
      %v1415 = vpop.f32.mrf.mxu0
      %v1416 = vpop.f32.mrf.mxu0
      %v1417 = vadd.f32 0.0, %v1416
      %v1418 = vpop.f32.mrf.mxu0
      %1419 = vmatprep.mubr.bf16.mxu0 0
      %1420 = vmatmul.mubr.bf16.gmra.mxu0 %v1298
      %v1421 = vpop.f32.mrf.mxu0
      %v1422 = vadd.f32 0.0, %v1421
      %v1423 = vpop.f32.mrf.mxu0
      %v1424 = vpop.f32.mrf.mxu0
      %v1425 = vadd.f32 0.0, %v1424
      %v1426 = vpop.f32.mrf.mxu0
      %1427 = vmatprep.mubr.bf16.mxu0 0
      %1428 = vmatmul.mubr.bf16.gmra.mxu0 %v1307
      %v1429 = vpop.f32.mrf.mxu0
      %v1430 = vadd.f32 0.0, %v1429
      %v1431 = vpop.f32.mrf.mxu0
      %v1432 = vpop.f32.mrf.mxu0
      %v1433 = vadd.f32 0.0, %v1432
      %v1434 = vpop.f32.mrf.mxu0
      %1435 = vmatprep.mubr.bf16.mxu0 0
      %1436 = vmatmul.mubr.bf16.gmra.mxu0 %v1316
      %v1437 = vpop.f32.mrf.mxu0
      %v1438 = vadd.f32 0.0, %v1437
      %v1439 = vpop.f32.mrf.mxu0
      %v1440 = vpop.f32.mrf.mxu0
      %v1441 = vadd.f32 0.0, %v1440
      %v1442 = vpop.f32.mrf.mxu0
      %1443 = vmatprep.mubr.bf16.mxu0 0
      %1444 = vmatmul.mubr.bf16.gmra.mxu0 %v1325
      %v1445 = vpop.f32.mrf.mxu0
      %v1446 = vadd.f32 0.0, %v1445
      %v1447 = vpop.f32.mrf.mxu0
      %v1448 = vpop.f32.mrf.mxu0
      %v1449 = vadd.f32 0.0, %v1448
      %v1450 = vpop.f32.mrf.mxu0
      %1451 = vdwg.mxu0
      %v1452 = vadd.f32 %v1207, %v1414
      %v1453 = vadd.f32 %v1208, %v1417
      %v1454 = vadd.f32 %v1209, %v1422
      %v1455 = vadd.f32 %v1210, %v1425
      %v1456 = vadd.f32 %v1211, %v1430
      %v1457 = vadd.f32 %v1212, %v1433
      %v1458 = vadd.f32 %v1213, %v1438
      %v1459 = vadd.f32 %v1214, %v1441
      %v1460 = vadd.f32 %v1215, %v1446
      %v1461 = vadd.f32 %v1216, %v1449
      %s1462 = scalar_lea.vmem %s3, 256
      %v1463 = vld [vmem:[%s1462] sm:$0xf]
      %v1464 = vld [vmem:[%s1462 + $0x4] sm:$0xf]
      %v1465 = vld [vmem:[%s1462 + $0x8] sm:$0xf]
      %v1466 = vld [vmem:[%s1462 + $0xc] sm:$0xf]
      %v1467 = vld [vmem:[%s1462 + $0x10] sm:$0xf]
      %v1468 = vld [vmem:[%s1462 + $0x14] sm:$0xf]
      %v1469 = vld [vmem:[%s1462 + $0x18] sm:$0xf]
      %v1470 = vld [vmem:[%s1462 + $0x1c] sm:$0xf]
      %v1471 = vld [vmem:[%s1462 + $0x20] sm:$0xf]
      %v1472 = vld [vmem:[%s1462 + $0x24] sm:$0xf]
      %v1473 = vld [vmem:[%s1462 + $0x28] sm:$0xf]
      %v1474 = vld [vmem:[%s1462 + $0x2c] sm:$0xf]
      %v1475 = vld [vmem:[%s1462 + $0x30] sm:$0xf]
      %v1476 = vld [vmem:[%s1462 + $0x34] sm:$0xf]
      %v1477 = vld [vmem:[%s1462 + $0x38] sm:$0xf]
      %v1478 = vld [vmem:[%s1462 + $0x3c] sm:$0xf]
      %v1479 = vpack.c.b16 %v1258, %v1257
      %v1480 = vpack.c.b16 %v1260, %v1259
      %v1481 = vpack.c.b16 %v1262, %v1261
      %v1482 = vpack.c.b16 %v1264, %v1263
      %v1483 = vpack.c.b16 %v1266, %v1265
      %v1505 = vunpack.c.l.b16 %v1463
      %v1506 = vunpack.c.l.b16 %v1464
      %v1507 = vunpack.c.l.b16 %v1465
      %v1508 = vunpack.c.l.b16 %v1466
      %v1509 = vunpack.c.l.b16 %v1467
      %v1510 = vunpack.c.l.b16 %v1468
      %v1511 = vunpack.c.l.b16 %v1469
      %v1512 = vunpack.c.l.b16 %v1470
      %v1513 = vunpack.c.l.b16 %v1471
      %v1514 = vunpack.c.l.b16 %v1472
      %v1515 = vunpack.c.l.b16 %v1473
      %v1516 = vunpack.c.l.b16 %v1474
      %v1517 = vunpack.c.l.b16 %v1475
      %v1518 = vunpack.c.l.b16 %v1476
      %v1519 = vunpack.c.l.b16 %v1477
      %v1520 = vunpack.c.l.b16 %v1478
      %v1521 = vpack.c.b16 %v1506, %v1505
      %v1522 = vpack.c.b16 %v1508, %v1507
      %v1523 = vpack.c.b16 %v1510, %v1509
      %v1524 = vpack.c.b16 %v1512, %v1511
      %v1525 = vpack.c.b16 %v1514, %v1513
      %v1526 = vpack.c.b16 %v1516, %v1515
      %v1527 = vpack.c.b16 %v1518, %v1517
      %v1528 = vpack.c.b16 %v1520, %v1519
      %1537 = vmatprep.subr.bf16.mxu0 0
      %1538 = vmatpush1.bf16.msra.mxu0 %v1528
      %1539 = vmatprep.subr.bf16.mxu0 0
      %1540 = vmatpush1.bf16.msra.mxu0 %v1527
      %1541 = vmatprep.subr.bf16.mxu0 0
      %1542 = vmatpush1.bf16.msra.mxu0 %v1526
      %1543 = vmatprep.subr.bf16.mxu0 0
      %1544 = vmatpush1.bf16.msra.mxu0 %v1525
      %1545 = vmatprep.subr.bf16.mxu0 0
      %1546 = vmatpush1.bf16.msra.mxu0 %v1524
      %1547 = vmatprep.subr.bf16.mxu0 0
      %1548 = vmatpush1.bf16.msra.mxu0 %v1523
      %1549 = vmatprep.subr.bf16.mxu0 0
      %1550 = vmatpush1.bf16.msra.mxu0 %v1522
      %1551 = vmatprep.subr.bf16.mxu0 0
      %1552 = vmatpush1.bf16.msra.mxu0 %v1521
      %1553 = vmatprep.subr.bf16.mxu0 0
      %1554 = vmatpush2.bf16.msra.mxu0 0
      %1555 = vmatprep.subr.bf16.mxu0 0
      %1556 = vmatpush2.bf16.msra.mxu0 0
      %1557 = vmatprep.subr.bf16.mxu0 0
      %1558 = vmatpush2.bf16.msra.mxu0 0
      %1559 = vmatprep.subr.bf16.mxu0 0
      %1560 = vmatpush2.bf16.msra.mxu0 0
      %1561 = vmatprep.subr.bf16.mxu0 0
      %1562 = vmatpush2.bf16.msra.mxu0 0
      %1563 = vmatprep.subr.bf16.mxu0 0
      %1564 = vmatpush2.bf16.msra.mxu0 0
      %1565 = vmatprep.subr.bf16.mxu0 0
      %1566 = vmatpush2.bf16.msra.mxu0 0
      %1567 = vmatprep.subr.bf16.mxu0 0
      %1568 = vmatpush2.bf16.msra.mxu0 0
      %1569 = vmatprep.mubr.bf16.mxu0 0
      %1570 = vmatmul.mubr.bf16.gmra.mxu0 %v1479
      %v1571 = vpop.f32.mrf.mxu0
      %v1572 = vadd.f32 0.0, %v1571
      %v1573 = vpop.f32.mrf.mxu0
      %v1574 = vpop.f32.mrf.mxu0
      %v1575 = vadd.f32 0.0, %v1574
      %v1576 = vpop.f32.mrf.mxu0
      %1577 = vmatprep.mubr.bf16.mxu0 0
      %1578 = vmatmul.mubr.bf16.gmra.mxu0 %v1480
      %v1579 = vpop.f32.mrf.mxu0
      %v1580 = vadd.f32 0.0, %v1579
      %v1581 = vpop.f32.mrf.mxu0
      %v1582 = vpop.f32.mrf.mxu0
      %v1583 = vadd.f32 0.0, %v1582
      %v1584 = vpop.f32.mrf.mxu0
      %1585 = vmatprep.mubr.bf16.mxu0 0
      %1586 = vmatmul.mubr.bf16.gmra.mxu0 %v1481
      %v1587 = vpop.f32.mrf.mxu0
      %v1588 = vadd.f32 0.0, %v1587
      %v1589 = vpop.f32.mrf.mxu0
      %v1590 = vpop.f32.mrf.mxu0
      %v1591 = vadd.f32 0.0, %v1590
      %v1592 = vpop.f32.mrf.mxu0
      %1593 = vmatprep.mubr.bf16.mxu0 0
      %1594 = vmatmul.mubr.bf16.gmra.mxu0 %v1482
      %v1595 = vpop.f32.mrf.mxu0
      %v1596 = vadd.f32 0.0, %v1595
      %v1597 = vpop.f32.mrf.mxu0
      %v1598 = vpop.f32.mrf.mxu0
      %v1599 = vadd.f32 0.0, %v1598
      %v1600 = vpop.f32.mrf.mxu0
      %1601 = vmatprep.mubr.bf16.mxu0 0
      %1602 = vmatmul.mubr.bf16.gmra.mxu0 %v1483
      %v1603 = vpop.f32.mrf.mxu0
      %v1604 = vadd.f32 0.0, %v1603
      %v1605 = vpop.f32.mrf.mxu0
      %v1606 = vpop.f32.mrf.mxu0
      %v1607 = vadd.f32 0.0, %v1606
      %v1608 = vpop.f32.mrf.mxu0
      %1609 = vdwg.mxu0
      %v1610 = vadd.f32 %v1452, %v1572
      %v1611 = vadd.f32 %v1453, %v1575
      %v1612 = vadd.f32 %v1454, %v1580
      %v1613 = vadd.f32 %v1455, %v1583
      %v1614 = vadd.f32 %v1456, %v1588
      %v1615 = vadd.f32 %v1457, %v1591
      %v1616 = vadd.f32 %v1458, %v1596
      %v1617 = vadd.f32 %v1459, %v1599
      %v1618 = vadd.f32 %v1460, %v1604
      %v1619 = vadd.f32 %v1461, %v1607
      %v1620 = vld [vmem:[#allocation2 + $0x8] sm:$0xf]
      %v1621 = vld [vmem:[#allocation2 + $0xc] sm:$0xf]
      %v1622 = vld [vmem:[#allocation2 + $0x10] sm:$0xf]
      %v1623 = vld [vmem:[#allocation2 + $0x14] sm:$0xf]
      %v1624 = vld [vmem:[#allocation2 + $0x18] sm:$0xf]
      %v1625 = vld [vmem:[#allocation2 + $0x1c] sm:$0xf]
      %v1626 = vld [vmem:[#allocation2 + $0x20] sm:$0xf]
      %v1627 = vld [vmem:[#allocation2 + $0x24] sm:$0xf]
      %v1628 = vld [vmem:[#allocation2 + $0x28] sm:$0xf]
      %v1629 = vld [vmem:[#allocation2 + $0x2c] sm:$0xf]
      %v1630 = vld [vmem:[#allocation2 + $0x30] sm:$0x1]
      %s1631 = scalar_lea.vmem %s3, 320
      %v1632 = vld [vmem:[%s1631] sm:$0xf]
      %v1633 = vld [vmem:[%s1631 + $0x4] sm:$0xf]
      %v1634 = vld [vmem:[%s1631 + $0x8] sm:$0xf]
      %v1635 = vld [vmem:[%s1631 + $0xc] sm:$0xf]
      %v1636 = vld [vmem:[%s1631 + $0x10] sm:$0xf]
      %v1637 = vld [vmem:[%s1631 + $0x14] sm:$0xf]
      %v1638 = vld [vmem:[%s1631 + $0x18] sm:$0xf]
      %v1639 = vld [vmem:[%s1631 + $0x1c] sm:$0xf]
      %v1640 = vld [vmem:[%s1631 + $0x20] sm:$0xf]
      %v1641 = vld [vmem:[%s1631 + $0x24] sm:$0xf]
      %v1642 = vld [vmem:[%s1631 + $0x28] sm:$0xf]
      %v1643 = vld [vmem:[%s1631 + $0x2c] sm:$0xf]
      %v1644 = vld [vmem:[%s1631 + $0x30] sm:$0xf]
      %v1645 = vld [vmem:[%s1631 + $0x34] sm:$0xf]
      %v1646 = vld [vmem:[%s1631 + $0x38] sm:$0xf]
      %v1647 = vld [vmem:[%s1631 + $0x3c] sm:$0xf]
      %v1659 = vunpack.c.l.b16 %v1620
      %v1660 = vunpack.c.l.b16 %v1621
      %v1661 = vunpack.c.l.b16 %v1622
      %v1662 = vunpack.c.l.b16 %v1623
      %v1663 = vunpack.c.l.b16 %v1624
      %v1664 = vunpack.c.l.b16 %v1625
      %v1665 = vunpack.c.l.b16 %v1626
      %v1666 = vunpack.c.l.b16 %v1627
      %v1667 = vunpack.c.l.b16 %v1628
      %v1668 = vunpack.c.l.b16 %v1629
      %v1669 = vunpack.c.l.b16 %v1630
      %v1670 = vpack.c.b16 %v1660, %v1659
      %v1671 = vpack.c.b16 %v1662, %v1661
      %v1672 = vpack.c.b16 %v1664, %v1663
      %v1673 = vpack.c.b16 %v1666, %v1665
      %v1674 = vpack.c.b16 %v1668, %v1667
      %v1675 = vpack.c.b16 %v1669, %v1669
      %vm1676 = vsmask.f32 7424
      %v1678 = vshrl.u32 %v1670, 16
      %v1680 = vshll.u32 %v1670, 16
      %v1682 = vrot.slane %v1680, 1
      %v1683 = vor.u32 %v1678, %v1682
      %v1685 = vshll.u32 %v1671, 16
      %v1687 = vrot.slane %v1685, 1
      %v1688 = vsel %vm1676, %v1683, %v1687
      %v1689 = vshrl.u32 %v1671, 16
      %v1691 = vor.u32 %v1689, %v1687
      %v1693 = vshll.u32 %v1672, 16
      %v1695 = vrot.slane %v1693, 1
      %v1696 = vsel %vm1676, %v1691, %v1695
      %v1697 = vshrl.u32 %v1672, 16
      %v1699 = vor.u32 %v1697, %v1695
      %v1701 = vshll.u32 %v1673, 16
      %v1703 = vrot.slane %v1701, 1
      %v1704 = vsel %vm1676, %v1699, %v1703
      %v1705 = vshrl.u32 %v1673, 16
      %v1707 = vor.u32 %v1705, %v1703
      %v1709 = vshll.u32 %v1674, 16
      %v1711 = vrot.slane %v1709, 1
      %v1712 = vsel %vm1676, %v1707, %v1711
      %v1713 = vshrl.u32 %v1674, 16
      %v1715 = vor.u32 %v1713, %v1711
      %v1717 = vshll.u32 %v1675, 16
      %v1719 = vrot.slane %v1717, 1
      %v1720 = vsel %vm1676, %v1715, %v1719
      %v1742 = vunpack.c.l.b16 %v1632
      %v1743 = vunpack.c.l.b16 %v1633
      %v1744 = vunpack.c.l.b16 %v1634
      %v1745 = vunpack.c.l.b16 %v1635
      %v1746 = vunpack.c.l.b16 %v1636
      %v1747 = vunpack.c.l.b16 %v1637
      %v1748 = vunpack.c.l.b16 %v1638
      %v1749 = vunpack.c.l.b16 %v1639
      %v1750 = vunpack.c.l.b16 %v1640
      %v1751 = vunpack.c.l.b16 %v1641
      %v1752 = vunpack.c.l.b16 %v1642
      %v1753 = vunpack.c.l.b16 %v1643
      %v1754 = vunpack.c.l.b16 %v1644
      %v1755 = vunpack.c.l.b16 %v1645
      %v1756 = vunpack.c.l.b16 %v1646
      %v1757 = vunpack.c.l.b16 %v1647
      %v1758 = vpack.c.b16 %v1743, %v1742
      %v1759 = vpack.c.b16 %v1745, %v1744
      %v1760 = vpack.c.b16 %v1747, %v1746
      %v1761 = vpack.c.b16 %v1749, %v1748
      %v1762 = vpack.c.b16 %v1751, %v1750
      %v1763 = vpack.c.b16 %v1753, %v1752
      %v1764 = vpack.c.b16 %v1755, %v1754
      %v1765 = vpack.c.b16 %v1757, %v1756
      %1774 = vmatprep.subr.bf16.mxu0 0
      %1775 = vmatpush1.bf16.msra.mxu0 %v1765
      %1776 = vmatprep.subr.bf16.mxu0 0
      %1777 = vmatpush1.bf16.msra.mxu0 %v1764
      %1778 = vmatprep.subr.bf16.mxu0 0
      %1779 = vmatpush1.bf16.msra.mxu0 %v1763
      %1780 = vmatprep.subr.bf16.mxu0 0
      %1781 = vmatpush1.bf16.msra.mxu0 %v1762
      %1782 = vmatprep.subr.bf16.mxu0 0
      %1783 = vmatpush1.bf16.msra.mxu0 %v1761
      %1784 = vmatprep.subr.bf16.mxu0 0
      %1785 = vmatpush1.bf16.msra.mxu0 %v1760
      %1786 = vmatprep.subr.bf16.mxu0 0
      %1787 = vmatpush1.bf16.msra.mxu0 %v1759
      %1788 = vmatprep.subr.bf16.mxu0 0
      %1789 = vmatpush1.bf16.msra.mxu0 %v1758
      %1790 = vmatprep.subr.bf16.mxu0 0
      %1791 = vmatpush2.bf16.msra.mxu0 0
      %1792 = vmatprep.subr.bf16.mxu0 0
      %1793 = vmatpush2.bf16.msra.mxu0 0
      %1794 = vmatprep.subr.bf16.mxu0 0
      %1795 = vmatpush2.bf16.msra.mxu0 0
      %1796 = vmatprep.subr.bf16.mxu0 0
      %1797 = vmatpush2.bf16.msra.mxu0 0
      %1798 = vmatprep.subr.bf16.mxu0 0
      %1799 = vmatpush2.bf16.msra.mxu0 0
      %1800 = vmatprep.subr.bf16.mxu0 0
      %1801 = vmatpush2.bf16.msra.mxu0 0
      %1802 = vmatprep.subr.bf16.mxu0 0
      %1803 = vmatpush2.bf16.msra.mxu0 0
      %1804 = vmatprep.subr.bf16.mxu0 0
      %1805 = vmatpush2.bf16.msra.mxu0 0
      %1806 = vmatprep.mubr.bf16.mxu0 0
      %1807 = vmatmul.mubr.bf16.gmra.mxu0 %v1688
      %v1808 = vpop.f32.mrf.mxu0
      %v1809 = vadd.f32 0.0, %v1808
      %v1810 = vpop.f32.mrf.mxu0
      %v1811 = vpop.f32.mrf.mxu0
      %v1812 = vadd.f32 0.0, %v1811
      %v1813 = vpop.f32.mrf.mxu0
      %1814 = vmatprep.mubr.bf16.mxu0 0
      %1815 = vmatmul.mubr.bf16.gmra.mxu0 %v1696
      %v1816 = vpop.f32.mrf.mxu0
      %v1817 = vadd.f32 0.0, %v1816
      %v1818 = vpop.f32.mrf.mxu0
      %v1819 = vpop.f32.mrf.mxu0
      %v1820 = vadd.f32 0.0, %v1819
      %v1821 = vpop.f32.mrf.mxu0
      %1822 = vmatprep.mubr.bf16.mxu0 0
      %1823 = vmatmul.mubr.bf16.gmra.mxu0 %v1704
      %v1824 = vpop.f32.mrf.mxu0
      %v1825 = vadd.f32 0.0, %v1824
      %v1826 = vpop.f32.mrf.mxu0
      %v1827 = vpop.f32.mrf.mxu0
      %v1828 = vadd.f32 0.0, %v1827
      %v1829 = vpop.f32.mrf.mxu0
      %1830 = vmatprep.mubr.bf16.mxu0 0
      %1831 = vmatmul.mubr.bf16.gmra.mxu0 %v1712
      %v1832 = vpop.f32.mrf.mxu0
      %v1833 = vadd.f32 0.0, %v1832
      %v1834 = vpop.f32.mrf.mxu0
      %v1835 = vpop.f32.mrf.mxu0
      %v1836 = vadd.f32 0.0, %v1835
      %v1837 = vpop.f32.mrf.mxu0
      %1838 = vmatprep.mubr.bf16.mxu0 0
      %1839 = vmatmul.mubr.bf16.gmra.mxu0 %v1720
      %v1840 = vpop.f32.mrf.mxu0
      %v1841 = vadd.f32 0.0, %v1840
      %v1842 = vpop.f32.mrf.mxu0
      %v1843 = vpop.f32.mrf.mxu0
      %v1844 = vadd.f32 0.0, %v1843
      %v1845 = vpop.f32.mrf.mxu0
      %1846 = vdwg.mxu0
      %v1847 = vadd.f32 %v1610, %v1809
      %v1848 = vadd.f32 %v1611, %v1812
      %v1849 = vadd.f32 %v1612, %v1817
      %v1850 = vadd.f32 %v1613, %v1820
      %v1851 = vadd.f32 %v1614, %v1825
      %v1852 = vadd.f32 %v1615, %v1828
      %v1853 = vadd.f32 %v1616, %v1833
      %v1854 = vadd.f32 %v1617, %v1836
      %v1855 = vadd.f32 %v1618, %v1841
      %v1856 = vadd.f32 %v1619, %v1844
      %v1857 = vld [vmem:[#allocation2 + $0xc] sm:$0xf]
      %v1858 = vld [vmem:[#allocation2 + $0x10] sm:$0xf]
      %v1859 = vld [vmem:[#allocation2 + $0x14] sm:$0xf]
      %v1860 = vld [vmem:[#allocation2 + $0x18] sm:$0xf]
      %v1861 = vld [vmem:[#allocation2 + $0x1c] sm:$0xf]
      %v1862 = vld [vmem:[#allocation2 + $0x20] sm:$0xf]
      %v1863 = vld [vmem:[#allocation2 + $0x24] sm:$0xf]
      %v1864 = vld [vmem:[#allocation2 + $0x28] sm:$0xf]
      %v1865 = vld [vmem:[#allocation2 + $0x2c] sm:$0xf]
      %v1866 = vld [vmem:[#allocation2 + $0x30] sm:$0xf]
      %v1867 = vld [vmem:[#allocation2 + $0x34] sm:$0x1]
      %s1868 = scalar_lea.vmem %s3, 384
      %v1869 = vld [vmem:[%s1868] sm:$0xf]
      %v1870 = vld [vmem:[%s1868 + $0x4] sm:$0xf]
      %v1871 = vld [vmem:[%s1868 + $0x8] sm:$0xf]
      %v1872 = vld [vmem:[%s1868 + $0xc] sm:$0xf]
      %v1873 = vld [vmem:[%s1868 + $0x10] sm:$0xf]
      %v1874 = vld [vmem:[%s1868 + $0x14] sm:$0xf]
      %v1875 = vld [vmem:[%s1868 + $0x18] sm:$0xf]
      %v1876 = vld [vmem:[%s1868 + $0x1c] sm:$0xf]
      %v1877 = vld [vmem:[%s1868 + $0x20] sm:$0xf]
      %v1878 = vld [vmem:[%s1868 + $0x24] sm:$0xf]
      %v1879 = vld [vmem:[%s1868 + $0x28] sm:$0xf]
      %v1880 = vld [vmem:[%s1868 + $0x2c] sm:$0xf]
      %v1881 = vld [vmem:[%s1868 + $0x30] sm:$0xf]
      %v1882 = vld [vmem:[%s1868 + $0x34] sm:$0xf]
      %v1883 = vld [vmem:[%s1868 + $0x38] sm:$0xf]
      %v1884 = vld [vmem:[%s1868 + $0x3c] sm:$0xf]
      %v1896 = vunpack.c.l.b16 %v1857
      %v1897 = vunpack.c.l.b16 %v1858
      %v1898 = vunpack.c.l.b16 %v1859
      %v1899 = vunpack.c.l.b16 %v1860
      %v1900 = vunpack.c.l.b16 %v1861
      %v1901 = vunpack.c.l.b16 %v1862
      %v1902 = vunpack.c.l.b16 %v1863
      %v1903 = vunpack.c.l.b16 %v1864
      %v1904 = vunpack.c.l.b16 %v1865
      %v1905 = vunpack.c.l.b16 %v1866
      %v1906 = vunpack.c.l.b16 %v1867
      %v1907 = vpack.c.b16 %v1897, %v1896
      %v1908 = vpack.c.b16 %v1899, %v1898
      %v1909 = vpack.c.b16 %v1901, %v1900
      %v1910 = vpack.c.b16 %v1903, %v1902
      %v1911 = vpack.c.b16 %v1905, %v1904
      %v1912 = vpack.c.b16 %v1906, %v1906
      %v1914 = vshrl.u32 %v1907, 16
      %v1916 = vshll.u32 %v1907, 16
      %v1918 = vrot.slane %v1916, 1
      %v1919 = vor.u32 %v1914, %v1918
      %v1921 = vshll.u32 %v1908, 16
      %v1923 = vrot.slane %v1921, 1
      %v1924 = vsel %vm1676, %v1919, %v1923
      %v1925 = vshrl.u32 %v1908, 16
      %v1927 = vor.u32 %v1925, %v1923
      %v1929 = vshll.u32 %v1909, 16
      %v1931 = vrot.slane %v1929, 1
      %v1932 = vsel %vm1676, %v1927, %v1931
      %v1933 = vshrl.u32 %v1909, 16
      %v1935 = vor.u32 %v1933, %v1931
      %v1937 = vshll.u32 %v1910, 16
      %v1939 = vrot.slane %v1937, 1
      %v1940 = vsel %vm1676, %v1935, %v1939
      %v1941 = vshrl.u32 %v1910, 16
      %v1943 = vor.u32 %v1941, %v1939
      %v1945 = vshll.u32 %v1911, 16
      %v1947 = vrot.slane %v1945, 1
      %v1948 = vsel %vm1676, %v1943, %v1947
      %v1949 = vshrl.u32 %v1911, 16
      %v1951 = vor.u32 %v1949, %v1947
      %v1953 = vshll.u32 %v1912, 16
      %v1955 = vrot.slane %v1953, 1
      %v1956 = vsel %vm1676, %v1951, %v1955
      %v1978 = vunpack.c.l.b16 %v1869
      %v1979 = vunpack.c.l.b16 %v1870
      %v1980 = vunpack.c.l.b16 %v1871
      %v1981 = vunpack.c.l.b16 %v1872
      %v1982 = vunpack.c.l.b16 %v1873
      %v1983 = vunpack.c.l.b16 %v1874
      %v1984 = vunpack.c.l.b16 %v1875
      %v1985 = vunpack.c.l.b16 %v1876
      %v1986 = vunpack.c.l.b16 %v1877
      %v1987 = vunpack.c.l.b16 %v1878
      %v1988 = vunpack.c.l.b16 %v1879
      %v1989 = vunpack.c.l.b16 %v1880
      %v1990 = vunpack.c.l.b16 %v1881
      %v1991 = vunpack.c.l.b16 %v1882
      %v1992 = vunpack.c.l.b16 %v1883
      %v1993 = vunpack.c.l.b16 %v1884
      %v1994 = vpack.c.b16 %v1979, %v1978
      %v1995 = vpack.c.b16 %v1981, %v1980
      %v1996 = vpack.c.b16 %v1983, %v1982
      %v1997 = vpack.c.b16 %v1985, %v1984
      %v1998 = vpack.c.b16 %v1987, %v1986
      %v1999 = vpack.c.b16 %v1989, %v1988
      %v2000 = vpack.c.b16 %v1991, %v1990
      %v2001 = vpack.c.b16 %v1993, %v1992
      %2010 = vmatprep.subr.bf16.mxu0 0
      %2011 = vmatpush1.bf16.msra.mxu0 %v2001
      %2012 = vmatprep.subr.bf16.mxu0 0
      %2013 = vmatpush1.bf16.msra.mxu0 %v2000
      %2014 = vmatprep.subr.bf16.mxu0 0
      %2015 = vmatpush1.bf16.msra.mxu0 %v1999
      %2016 = vmatprep.subr.bf16.mxu0 0
      %2017 = vmatpush1.bf16.msra.mxu0 %v1998
      %2018 = vmatprep.subr.bf16.mxu0 0
      %2019 = vmatpush1.bf16.msra.mxu0 %v1997
      %2020 = vmatprep.subr.bf16.mxu0 0
      %2021 = vmatpush1.bf16.msra.mxu0 %v1996
      %2022 = vmatprep.subr.bf16.mxu0 0
      %2023 = vmatpush1.bf16.msra.mxu0 %v1995
      %2024 = vmatprep.subr.bf16.mxu0 0
      %2025 = vmatpush1.bf16.msra.mxu0 %v1994
      %2026 = vmatprep.subr.bf16.mxu0 0
      %2027 = vmatpush2.bf16.msra.mxu0 0
      %2028 = vmatprep.subr.bf16.mxu0 0
      %2029 = vmatpush2.bf16.msra.mxu0 0
      %2030 = vmatprep.subr.bf16.mxu0 0
      %2031 = vmatpush2.bf16.msra.mxu0 0
      %2032 = vmatprep.subr.bf16.mxu0 0
      %2033 = vmatpush2.bf16.msra.mxu0 0
      %2034 = vmatprep.subr.bf16.mxu0 0
      %2035 = vmatpush2.bf16.msra.mxu0 0
      %2036 = vmatprep.subr.bf16.mxu0 0
      %2037 = vmatpush2.bf16.msra.mxu0 0
      %2038 = vmatprep.subr.bf16.mxu0 0
      %2039 = vmatpush2.bf16.msra.mxu0 0
      %2040 = vmatprep.subr.bf16.mxu0 0
      %2041 = vmatpush2.bf16.msra.mxu0 0
      %2042 = vmatprep.mubr.bf16.mxu0 0
      %2043 = vmatmul.mubr.bf16.gmra.mxu0 %v1924
      %v2044 = vpop.f32.mrf.mxu0
      %v2045 = vadd.f32 0.0, %v2044
      %v2046 = vpop.f32.mrf.mxu0
      %v2047 = vpop.f32.mrf.mxu0
      %v2048 = vadd.f32 0.0, %v2047
      %v2049 = vpop.f32.mrf.mxu0
      %2050 = vmatprep.mubr.bf16.mxu0 0
      %2051 = vmatmul.mubr.bf16.gmra.mxu0 %v1932
      %v2052 = vpop.f32.mrf.mxu0
      %v2053 = vadd.f32 0.0, %v2052
      %v2054 = vpop.f32.mrf.mxu0
      %v2055 = vpop.f32.mrf.mxu0
      %v2056 = vadd.f32 0.0, %v2055
      %v2057 = vpop.f32.mrf.mxu0
      %2058 = vmatprep.mubr.bf16.mxu0 0
      %2059 = vmatmul.mubr.bf16.gmra.mxu0 %v1940
      %v2060 = vpop.f32.mrf.mxu0
      %v2061 = vadd.f32 0.0, %v2060
      %v2062 = vpop.f32.mrf.mxu0
      %v2063 = vpop.f32.mrf.mxu0
      %v2064 = vadd.f32 0.0, %v2063
      %v2065 = vpop.f32.mrf.mxu0
      %2066 = vmatprep.mubr.bf16.mxu0 0
      %2067 = vmatmul.mubr.bf16.gmra.mxu0 %v1948
      %v2068 = vpop.f32.mrf.mxu0
      %v2069 = vadd.f32 0.0, %v2068
      %v2070 = vpop.f32.mrf.mxu0
      %v2071 = vpop.f32.mrf.mxu0
      %v2072 = vadd.f32 0.0, %v2071
      %v2073 = vpop.f32.mrf.mxu0
      %2074 = vmatprep.mubr.bf16.mxu0 0
      %2075 = vmatmul.mubr.bf16.gmra.mxu0 %v1956
      %v2076 = vpop.f32.mrf.mxu0
      %v2077 = vadd.f32 0.0, %v2076
      %v2078 = vpop.f32.mrf.mxu0
      %v2079 = vpop.f32.mrf.mxu0
      %v2080 = vadd.f32 0.0, %v2079
      %v2081 = vpop.f32.mrf.mxu0
      %2082 = vdwg.mxu0
      %v2083 = vadd.f32 %v1847, %v2045
      %v2084 = vadd.f32 %v1848, %v2048
      %v2085 = vadd.f32 %v1849, %v2053
      %v2086 = vadd.f32 %v1850, %v2056
      %v2087 = vadd.f32 %v1851, %v2061
      %v2088 = vadd.f32 %v1852, %v2064
      %v2089 = vadd.f32 %v1853, %v2069
      %v2090 = vadd.f32 %v1854, %v2072
      %v2091 = vadd.f32 %v1855, %v2077
      %v2092 = vadd.f32 %v1856, %v2080
      %v2093 = vld [vmem:[#allocation2 + $0xc] sm:$0xe]
      %s2094 = scalar_lea.vmem %s3, 448
      %v2095 = vld [vmem:[%s2094] sm:$0xf]
      %v2096 = vld [vmem:[%s2094 + $0x4] sm:$0xf]
      %v2097 = vld [vmem:[%s2094 + $0x8] sm:$0xf]
      %v2098 = vld [vmem:[%s2094 + $0xc] sm:$0xf]
      %v2099 = vld [vmem:[%s2094 + $0x10] sm:$0xf]
      %v2100 = vld [vmem:[%s2094 + $0x14] sm:$0xf]
      %v2101 = vld [vmem:[%s2094 + $0x18] sm:$0xf]
      %v2102 = vld [vmem:[%s2094 + $0x1c] sm:$0xf]
      %v2103 = vld [vmem:[%s2094 + $0x20] sm:$0xf]
      %v2104 = vld [vmem:[%s2094 + $0x24] sm:$0xf]
      %v2105 = vld [vmem:[%s2094 + $0x28] sm:$0xf]
      %v2106 = vld [vmem:[%s2094 + $0x2c] sm:$0xf]
      %v2107 = vld [vmem:[%s2094 + $0x30] sm:$0xf]
      %v2108 = vld [vmem:[%s2094 + $0x34] sm:$0xf]
      %v2109 = vld [vmem:[%s2094 + $0x38] sm:$0xf]
      %v2110 = vld [vmem:[%s2094 + $0x3c] sm:$0xf]
      %v2112 = vunpack.c.l.b16 %v2093
      %v2113 = vpack.c.b16 %v1897, %v2112
      %vm2114 = vcmask 1046528
      %v2115 = vrot.slane %v2113, 1
      %v2116 = vrot.slane %v1908, 1
      %v2117 = vsel %vm2114, %v2115, %v2116
      %v2118 = vrot.slane %v1909, 1
      %v2119 = vsel %vm2114, %v2116, %v2118
      %v2120 = vrot.slane %v1910, 1
      %v2121 = vsel %vm2114, %v2118, %v2120
      %v2122 = vrot.slane %v1911, 1
      %v2123 = vsel %vm2114, %v2120, %v2122
      %v2124 = vrot.slane %v1912, 1
      %v2125 = vsel %vm2114, %v2122, %v2124
      %v2147 = vunpack.c.l.b16 %v2095
      %v2148 = vunpack.c.l.b16 %v2096
      %v2149 = vunpack.c.l.b16 %v2097
      %v2150 = vunpack.c.l.b16 %v2098
      %v2151 = vunpack.c.l.b16 %v2099
      %v2152 = vunpack.c.l.b16 %v2100
      %v2153 = vunpack.c.l.b16 %v2101
      %v2154 = vunpack.c.l.b16 %v2102
      %v2155 = vunpack.c.l.b16 %v2103
      %v2156 = vunpack.c.l.b16 %v2104
      %v2157 = vunpack.c.l.b16 %v2105
      %v2158 = vunpack.c.l.b16 %v2106
      %v2159 = vunpack.c.l.b16 %v2107
      %v2160 = vunpack.c.l.b16 %v2108
      %v2161 = vunpack.c.l.b16 %v2109
      %v2162 = vunpack.c.l.b16 %v2110
      %v2163 = vpack.c.b16 %v2148, %v2147
      %v2164 = vpack.c.b16 %v2150, %v2149
      %v2165 = vpack.c.b16 %v2152, %v2151
      %v2166 = vpack.c.b16 %v2154, %v2153
      %v2167 = vpack.c.b16 %v2156, %v2155
      %v2168 = vpack.c.b16 %v2158, %v2157
      %v2169 = vpack.c.b16 %v2160, %v2159
      %v2170 = vpack.c.b16 %v2162, %v2161
      %2179 = vmatprep.subr.bf16.mxu0 0
      %2180 = vmatpush1.bf16.msra.mxu0 %v2170
      %2181 = vmatprep.subr.bf16.mxu0 0
      %2182 = vmatpush1.bf16.msra.mxu0 %v2169
      %2183 = vmatprep.subr.bf16.mxu0 0
      %2184 = vmatpush1.bf16.msra.mxu0 %v2168
      %2185 = vmatprep.subr.bf16.mxu0 0
      %2186 = vmatpush1.bf16.msra.mxu0 %v2167
      %2187 = vmatprep.subr.bf16.mxu0 0
      %2188 = vmatpush1.bf16.msra.mxu0 %v2166
      %2189 = vmatprep.subr.bf16.mxu0 0
      %2190 = vmatpush1.bf16.msra.mxu0 %v2165
      %2191 = vmatprep.subr.bf16.mxu0 0
      %2192 = vmatpush1.bf16.msra.mxu0 %v2164
      %2193 = vmatprep.subr.bf16.mxu0 0
      %2194 = vmatpush1.bf16.msra.mxu0 %v2163
      %2195 = vmatprep.subr.bf16.mxu0 0
      %2196 = vmatpush2.bf16.msra.mxu0 0
      %2197 = vmatprep.subr.bf16.mxu0 0
      %2198 = vmatpush2.bf16.msra.mxu0 0
      %2199 = vmatprep.subr.bf16.mxu0 0
      %2200 = vmatpush2.bf16.msra.mxu0 0
      %2201 = vmatprep.subr.bf16.mxu0 0
      %2202 = vmatpush2.bf16.msra.mxu0 0
      %2203 = vmatprep.subr.bf16.mxu0 0
      %2204 = vmatpush2.bf16.msra.mxu0 0
      %2205 = vmatprep.subr.bf16.mxu0 0
      %2206 = vmatpush2.bf16.msra.mxu0 0
      %2207 = vmatprep.subr.bf16.mxu0 0
      %2208 = vmatpush2.bf16.msra.mxu0 0
      %2209 = vmatprep.subr.bf16.mxu0 0
      %2210 = vmatpush2.bf16.msra.mxu0 0
      %2211 = vmatprep.mubr.bf16.mxu0 0
      %2212 = vmatmul.mubr.bf16.gmra.mxu0 %v2117
      %v2213 = vpop.f32.mrf.mxu0
      %v2214 = vadd.f32 0.0, %v2213
      %v2215 = vpop.f32.mrf.mxu0
      %v2216 = vpop.f32.mrf.mxu0
      %v2217 = vadd.f32 0.0, %v2216
      %v2218 = vpop.f32.mrf.mxu0
      %2219 = vmatprep.mubr.bf16.mxu0 0
      %2220 = vmatmul.mubr.bf16.gmra.mxu0 %v2119
      %v2221 = vpop.f32.mrf.mxu0
      %v2222 = vadd.f32 0.0, %v2221
      %v2223 = vpop.f32.mrf.mxu0
      %v2224 = vpop.f32.mrf.mxu0
      %v2225 = vadd.f32 0.0, %v2224
      %v2226 = vpop.f32.mrf.mxu0
      %2227 = vmatprep.mubr.bf16.mxu0 0
      %2228 = vmatmul.mubr.bf16.gmra.mxu0 %v2121
      %v2229 = vpop.f32.mrf.mxu0
      %v2230 = vadd.f32 0.0, %v2229
      %v2231 = vpop.f32.mrf.mxu0
      %v2232 = vpop.f32.mrf.mxu0
      %v2233 = vadd.f32 0.0, %v2232
      %v2234 = vpop.f32.mrf.mxu0
      %2235 = vmatprep.mubr.bf16.mxu0 0
      %2236 = vmatmul.mubr.bf16.gmra.mxu0 %v2123
      %v2237 = vpop.f32.mrf.mxu0
      %v2238 = vadd.f32 0.0, %v2237
      %v2239 = vpop.f32.mrf.mxu0
      %v2240 = vpop.f32.mrf.mxu0
      %v2241 = vadd.f32 0.0, %v2240
      %v2242 = vpop.f32.mrf.mxu0
      %2243 = vmatprep.mubr.bf16.mxu0 0
      %2244 = vmatmul.mubr.bf16.gmra.mxu0 %v2125
      %v2245 = vpop.f32.mrf.mxu0
      %v2246 = vadd.f32 0.0, %v2245
      %v2247 = vpop.f32.mrf.mxu0
      %v2248 = vpop.f32.mrf.mxu0
      %v2249 = vadd.f32 0.0, %v2248
      %v2250 = vpop.f32.mrf.mxu0
      %2251 = vdwg.mxu0
      %v2252 = vadd.f32 %v2083, %v2214
      %v2253 = vadd.f32 %v2084, %v2217
      %v2254 = vadd.f32 %v2085, %v2222
      %v2255 = vadd.f32 %v2086, %v2225
      %v2256 = vadd.f32 %v2087, %v2230
      %v2257 = vadd.f32 %v2088, %v2233
      %v2258 = vadd.f32 %v2089, %v2238
      %v2259 = vadd.f32 %v2090, %v2241
      %v2260 = vadd.f32 %v2091, %v2246
      %v2261 = vadd.f32 %v2092, %v2249
      %v2262 = vld [vmem:[#allocation2 + $0x34] sm:$0x3]
      %s2263 = scalar_lea.vmem %s3, 512
      %v2264 = vld [vmem:[%s2263] sm:$0xf]
      %v2265 = vld [vmem:[%s2263 + $0x4] sm:$0xf]
      %v2266 = vld [vmem:[%s2263 + $0x8] sm:$0xf]
      %v2267 = vld [vmem:[%s2263 + $0xc] sm:$0xf]
      %v2268 = vld [vmem:[%s2263 + $0x10] sm:$0xf]
      %v2269 = vld [vmem:[%s2263 + $0x14] sm:$0xf]
      %v2270 = vld [vmem:[%s2263 + $0x18] sm:$0xf]
      %v2271 = vld [vmem:[%s2263 + $0x1c] sm:$0xf]
      %v2272 = vld [vmem:[%s2263 + $0x20] sm:$0xf]
      %v2273 = vld [vmem:[%s2263 + $0x24] sm:$0xf]
      %v2274 = vld [vmem:[%s2263 + $0x28] sm:$0xf]
      %v2275 = vld [vmem:[%s2263 + $0x2c] sm:$0xf]
      %v2276 = vld [vmem:[%s2263 + $0x30] sm:$0xf]
      %v2277 = vld [vmem:[%s2263 + $0x34] sm:$0xf]
      %v2278 = vld [vmem:[%s2263 + $0x38] sm:$0xf]
      %v2279 = vld [vmem:[%s2263 + $0x3c] sm:$0xf]
      %v2281 = vunpack.c.l.b16 %v2262
      %v2282 = vpack.c.b16 %v2281, %v2281
      %vm2283 = vsmask.f32 6400
      %v2285 = vshrl.u32 %v2113, 16
      %v2287 = vrot.slane %v2285, 1
      %v2288 = vshll.u32 %v2113, 16
      %v2290 = vrot.slane %v2288, 2
      %v2291 = vor.u32 %v2287, %v2290
      %v2292 = vrot.slane %v1925, 1
      %v2293 = vrot.slane %v1921, 2
      %v2294 = vor.u32 %v2292, %v2293
      %v2295 = vsel %vm2283, %v2291, %v2294
      %v2296 = vrot.slane %v1933, 1
      %v2297 = vrot.slane %v1929, 2
      %v2298 = vor.u32 %v2296, %v2297
      %v2299 = vsel %vm2283, %v2294, %v2298
      %v2300 = vrot.slane %v1941, 1
      %v2301 = vrot.slane %v1937, 2
      %v2302 = vor.u32 %v2300, %v2301
      %v2303 = vsel %vm2283, %v2298, %v2302
      %v2304 = vrot.slane %v1949, 1
      %v2305 = vrot.slane %v1945, 2
      %v2306 = vor.u32 %v2304, %v2305
      %v2307 = vsel %vm2283, %v2302, %v2306
      %v2309 = vshrl.u32 %v2282, 16
      %v2311 = vrot.slane %v2309, 1
      %v2312 = vshll.u32 %v2282, 16
      %v2314 = vrot.slane %v2312, 2
      %v2315 = vor.u32 %v2311, %v2314
      %v2316 = vsel %vm2283, %v2306, %v2315
      %v2338 = vunpack.c.l.b16 %v2264
      %v2339 = vunpack.c.l.b16 %v2265
      %v2340 = vunpack.c.l.b16 %v2266
      %v2341 = vunpack.c.l.b16 %v2267
      %v2342 = vunpack.c.l.b16 %v2268
      %v2343 = vunpack.c.l.b16 %v2269
      %v2344 = vunpack.c.l.b16 %v2270
      %v2345 = vunpack.c.l.b16 %v2271
      %v2346 = vunpack.c.l.b16 %v2272
      %v2347 = vunpack.c.l.b16 %v2273
      %v2348 = vunpack.c.l.b16 %v2274
      %v2349 = vunpack.c.l.b16 %v2275
      %v2350 = vunpack.c.l.b16 %v2276
      %v2351 = vunpack.c.l.b16 %v2277
      %v2352 = vunpack.c.l.b16 %v2278
      %v2353 = vunpack.c.l.b16 %v2279
      %v2354 = vpack.c.b16 %v2339, %v2338
      %v2355 = vpack.c.b16 %v2341, %v2340
      %v2356 = vpack.c.b16 %v2343, %v2342
      %v2357 = vpack.c.b16 %v2345, %v2344
      %v2358 = vpack.c.b16 %v2347, %v2346
      %v2359 = vpack.c.b16 %v2349, %v2348
      %v2360 = vpack.c.b16 %v2351, %v2350
      %v2361 = vpack.c.b16 %v2353, %v2352
      %2370 = vmatprep.subr.bf16.mxu0 0
      %2371 = vmatpush1.bf16.msra.mxu0 %v2361
      %2372 = vmatprep.subr.bf16.mxu0 0
      %2373 = vmatpush1.bf16.msra.mxu0 %v2360
      %2374 = vmatprep.subr.bf16.mxu0 0
      %2375 = vmatpush1.bf16.msra.mxu0 %v2359
      %2376 = vmatprep.subr.bf16.mxu0 0
      %2377 = vmatpush1.bf16.msra.mxu0 %v2358
      %2378 = vmatprep.subr.bf16.mxu0 0
      %2379 = vmatpush1.bf16.msra.mxu0 %v2357
      %2380 = vmatprep.subr.bf16.mxu0 0
      %2381 = vmatpush1.bf16.msra.mxu0 %v2356
      %2382 = vmatprep.subr.bf16.mxu0 0
      %2383 = vmatpush1.bf16.msra.mxu0 %v2355
      %2384 = vmatprep.subr.bf16.mxu0 0
      %2385 = vmatpush1.bf16.msra.mxu0 %v2354
      %2386 = vmatprep.subr.bf16.mxu0 0
      %2387 = vmatpush2.bf16.msra.mxu0 0
      %2388 = vmatprep.subr.bf16.mxu0 0
      %2389 = vmatpush2.bf16.msra.mxu0 0
      %2390 = vmatprep.subr.bf16.mxu0 0
      %2391 = vmatpush2.bf16.msra.mxu0 0
      %2392 = vmatprep.subr.bf16.mxu0 0
      %2393 = vmatpush2.bf16.msra.mxu0 0
      %2394 = vmatprep.subr.bf16.mxu0 0
      %2395 = vmatpush2.bf16.msra.mxu0 0
      %2396 = vmatprep.subr.bf16.mxu0 0
      %2397 = vmatpush2.bf16.msra.mxu0 0
      %2398 = vmatprep.subr.bf16.mxu0 0
      %2399 = vmatpush2.bf16.msra.mxu0 0
      %2400 = vmatprep.subr.bf16.mxu0 0
      %2401 = vmatpush2.bf16.msra.mxu0 0
      %2402 = vmatprep.mubr.bf16.mxu0 0
      %2403 = vmatmul.mubr.bf16.gmra.mxu0 %v2295
      %v2404 = vpop.f32.mrf.mxu0
      %v2405 = vadd.f32 0.0, %v2404
      %v2406 = vpop.f32.mrf.mxu0
      %v2407 = vpop.f32.mrf.mxu0
      %v2408 = vadd.f32 0.0, %v2407
      %v2409 = vpop.f32.mrf.mxu0
      %2410 = vmatprep.mubr.bf16.mxu0 0
      %2411 = vmatmul.mubr.bf16.gmra.mxu0 %v2299
      %v2412 = vpop.f32.mrf.mxu0
      %v2413 = vadd.f32 0.0, %v2412
      %v2414 = vpop.f32.mrf.mxu0
      %v2415 = vpop.f32.mrf.mxu0
      %v2416 = vadd.f32 0.0, %v2415
      %v2417 = vpop.f32.mrf.mxu0
      %2418 = vmatprep.mubr.bf16.mxu0 0
      %2419 = vmatmul.mubr.bf16.gmra.mxu0 %v2303
      %v2420 = vpop.f32.mrf.mxu0
      %v2421 = vadd.f32 0.0, %v2420
      %v2422 = vpop.f32.mrf.mxu0
      %v2423 = vpop.f32.mrf.mxu0
      %v2424 = vadd.f32 0.0, %v2423
      %v2425 = vpop.f32.mrf.mxu0
      %2426 = vmatprep.mubr.bf16.mxu0 0
      %2427 = vmatmul.mubr.bf16.gmra.mxu0 %v2307
      %v2428 = vpop.f32.mrf.mxu0
      %v2429 = vadd.f32 0.0, %v2428
      %v2430 = vpop.f32.mrf.mxu0
      %v2431 = vpop.f32.mrf.mxu0
      %v2432 = vadd.f32 0.0, %v2431
      %v2433 = vpop.f32.mrf.mxu0
      %2434 = vmatprep.mubr.bf16.mxu0 0
      %2435 = vmatmul.mubr.bf16.gmra.mxu0 %v2316
      %v2436 = vpop.f32.mrf.mxu0
      %v2437 = vadd.f32 0.0, %v2436
      %v2438 = vpop.f32.mrf.mxu0
      %v2439 = vpop.f32.mrf.mxu0
      %v2440 = vadd.f32 0.0, %v2439
      %v2441 = vpop.f32.mrf.mxu0
      %2442 = vdwg.mxu0
      %v2443 = vadd.f32 %v2252, %v2405
      %v2444 = vadd.f32 %v2253, %v2408
      %v2445 = vadd.f32 %v2254, %v2413
      %v2446 = vadd.f32 %v2255, %v2416
      %v2447 = vadd.f32 %v2256, %v2421
      %v2448 = vadd.f32 %v2257, %v2424
      %v2449 = vadd.f32 %v2258, %v2429
      %v2450 = vadd.f32 %v2259, %v2432
      %v2451 = vadd.f32 %v2260, %v2437
      %v2452 = vadd.f32 %v2261, %v2440
      %v2453 = vsel %vm542, %v2443, 0.0
      %v2454 = vsel %vm543, %v2444, 0.0
      %v2455 = vsel %vm544, %v2445, 0.0
      %v2456 = vsel %vm545, %v2446, 0.0
      %v2457 = vsel %vm546, %v2447, 0.0
      %v2458 = vsel %vm547, %v2448, 0.0
      %v2459 = vsel %vm548, %v2449, 0.0
      %v2460 = vsel %vm549, %v2450, 0.0
      %v2461 = vsel %vm550, %v2451, 0.0
      %v2462 = vsel %vm551, %v2452, 0.0
      %v2463 = vpack.c.bf16 %v2454, %v2453
      %v2464 = vpack.c.bf16 %v2456, %v2455
      %v2465 = vpack.c.bf16 %v2458, %v2457
      %v2466 = vpack.c.bf16 %v2460, %v2459
      %v2467 = vpack.c.bf16 %v2462, %v2461
      %v2473 = vunpack.c.l.b16 %v2463
      %v2474 = vunpack.c.h.b16 %v2463
      %v2475 = vunpack.c.l.b16 %v2464
      %v2476 = vunpack.c.h.b16 %v2464
      %v2477 = vunpack.c.l.b16 %v2465
      %v2478 = vunpack.c.h.b16 %v2465
      %v2479 = vunpack.c.l.b16 %v2466
      %v2480 = vunpack.c.h.b16 %v2466
      %v2481 = vunpack.c.l.b16 %v2467
      %v2482 = vunpack.c.h.b16 %v2467
      %v2483 = vpack.c.b16 %v2473, %v2473
      %v2484 = vpack.c.b16 %v2474, %v2474
      %v2485 = vpack.c.b16 %v2475, %v2475
      %v2486 = vpack.c.b16 %v2476, %v2476
      %v2487 = vpack.c.b16 %v2477, %v2477
      %v2488 = vpack.c.b16 %v2478, %v2478
      %v2489 = vpack.c.b16 %v2479, %v2479
      %v2490 = vpack.c.b16 %v2480, %v2480
      %v2491 = vpack.c.b16 %v2481, %v2481
      %v2492 = vpack.c.b16 %v2482, %v2482
      %2503 = vst [vmem:[%s372] sm:$0xf] %v2483
      %2504 = vst [vmem:[%s372 + $0x4] sm:$0xf] %v2484
      %2505 = vst [vmem:[%s372 + $0x8] sm:$0xf] %v2485
      %2506 = vst [vmem:[%s372 + $0xc] sm:$0xf] %v2486
      %2507 = vst [vmem:[%s372 + $0x10] sm:$0xf] %v2487
      %2508 = vst [vmem:[%s372 + $0x14] sm:$0xf] %v2488
      %2509 = vst [vmem:[%s372 + $0x18] sm:$0xf] %v2489
      %2510 = vst [vmem:[%s372 + $0x1c] sm:$0xf] %v2490
      %2511 = vst [vmem:[%s372 + $0x20] sm:$0xf] %v2491
      %2512 = vst [vmem:[%s372 + $0x24] sm:$0xf] %v2492
      %v2513 = vadd.f32 %v2453, %v2454
      %v2514 = vadd.f32 %v2513, %v2455
      %v2515 = vadd.f32 %v2514, %v2456
      %v2516 = vadd.f32 %v2515, %v2457
      %v2517 = vadd.f32 %v2516, %v2458
      %v2518 = vadd.f32 %v2517, %v2459
      %v2519 = vadd.f32 %v2518, %v2460
      %v2520 = vadd.f32 %v2519, %v2461
      %v2521 = vadd.f32 %v2520, %v2462
      %v2522 = vrot.slane %v2521, 4
      %v2523 = vadd.f32 %v2521, %v2522
      %v2524 = vrot.slane %v2523, 2
      %v2525 = vadd.f32 %v2523, %v2524
      %v2526 = vrot.slane %v2525, 1
      %v2527 = vadd.f32 %v2525, %v2526
      %v2528 = vmul.f32 %v2453, %v2453
      %v2529 = vmul.f32 %v2454, %v2454
      %v2530 = vmul.f32 %v2455, %v2455
      %v2531 = vmul.f32 %v2456, %v2456
      %v2532 = vmul.f32 %v2457, %v2457
      %v2533 = vmul.f32 %v2458, %v2458
      %v2534 = vmul.f32 %v2459, %v2459
      %v2535 = vmul.f32 %v2460, %v2460
      %v2536 = vmul.f32 %v2461, %v2461
      %v2537 = vmul.f32 %v2462, %v2462
      %v2538 = vadd.f32 %v2528, %v2529
      %v2539 = vadd.f32 %v2538, %v2530
      %v2540 = vadd.f32 %v2539, %v2531
      %v2541 = vadd.f32 %v2540, %v2532
      %v2542 = vadd.f32 %v2541, %v2533
      %v2543 = vadd.f32 %v2542, %v2534
      %v2544 = vadd.f32 %v2543, %v2535
      %v2545 = vadd.f32 %v2544, %v2536
      %v2546 = vadd.f32 %v2545, %v2537
      %v2547 = vrot.slane %v2546, 4
      %v2548 = vadd.f32 %v2546, %v2547
      %v2549 = vrot.slane %v2548, 2
      %v2550 = vadd.f32 %v2548, %v2549
      %v2551 = vrot.slane %v2550, 1
      %v2552 = vadd.f32 %v2550, %v2551
      %vm2553 = vcmp.eq.s32.totalorder %v388, 0
      %vm2554 = vcmp.eq.s32.totalorder %v388, 1
      %v2555 = vsel %vm2554, %v2552, 0.0
      %v2556 = vsel %vm2553, %v2527, %v2555
      %2557 = vst [vmem:[%s376] sm:$0xff] %v2556
      %v2558 = vld [vmem:[%s367] sm:$0xf]
      %v2559 = vld [vmem:[%s367 + $0x4] sm:$0xf]
      %v2560 = vld [vmem:[%s367 + $0x8] sm:$0xf]
      %v2561 = vld [vmem:[%s367 + $0xc] sm:$0xf]
      %v2562 = vld [vmem:[%s367 + $0x10] sm:$0xf]
      %v2563 = vld [vmem:[%s367 + $0x14] sm:$0xf]
      %v2564 = vld [vmem:[%s367 + $0x18] sm:$0xf]
      %v2565 = vld [vmem:[%s367 + $0x1c] sm:$0xf]
      %v2566 = vld [vmem:[%s367 + $0x20] sm:$0xf]
      %v2567 = vld [vmem:[%s367 + $0x24] sm:$0xf]
      %v2568 = vld [vmem:[%s5] sm:$0x3]
      %v2579 = vunpack.c.l.b16 %v2558
      %v2580 = vunpack.c.l.b16 %v2559
      %v2581 = vunpack.c.l.b16 %v2560
      %v2582 = vunpack.c.l.b16 %v2561
      %v2583 = vunpack.c.l.b16 %v2562
      %v2584 = vunpack.c.l.b16 %v2563
      %v2585 = vunpack.c.l.b16 %v2564
      %v2586 = vunpack.c.l.b16 %v2565
      %v2587 = vunpack.c.l.b16 %v2566
      %v2588 = vunpack.c.l.b16 %v2567
      %v2589 = vpack.c.b16 %v2580, %v2579
      %v2590 = vpack.c.b16 %v2582, %v2581
      %v2591 = vpack.c.b16 %v2584, %v2583
      %v2592 = vpack.c.b16 %v2586, %v2585
      %v2593 = vpack.c.b16 %v2588, %v2587
      %vm2594 = vcmask 31744
      %v2596 = vsel %vm2594, %v2589, 0
      %v2599 = vsel %vm2594, %v2590, 0
      %v2602 = vsel %vm2594, %v2591, 0
      %v2605 = vsel %vm2594, %v2592, 0
      %v2608 = vsel %vm2594, %v2593, 0
      %vm2610 = vcmask 1041408
      %v2612 = vsel %vm2610, %v2568, 0
      %2614 = vmatprep.subr.bf16.mxu0 0
      %2615 = vmatpush1.bf16.msra.mxu0 0
      %2616 = vmatprep.subr.bf16.mxu0 0
      %2617 = vmatpush1.bf16.msra.mxu0 0
      %2618 = vmatprep.subr.bf16.mxu0 0
      %2619 = vmatpush1.bf16.msra.mxu0 0
      %2620 = vmatprep.subr.bf16.mxu0 0
      %2621 = vmatpush1.bf16.msra.mxu0 0
      %2622 = vmatprep.subr.bf16.mxu0 0
      %2623 = vmatpush1.bf16.msra.mxu0 0
      %2624 = vmatprep.subr.bf16.mxu0 0
      %2625 = vmatpush1.bf16.msra.mxu0 0
      %2626 = vmatprep.subr.bf16.mxu0 0
      %2627 = vmatpush1.bf16.msra.mxu0 0
      %2628 = vmatprep.subr.bf16.mxu0 0
      %2629 = vmatpush1.bf16.msra.mxu0 %v2612
      %2630 = vmatprep.subr.bf16.mxu0 0
      %2631 = vmatpush2.bf16.msra.mxu0 0
      %2632 = vmatprep.subr.bf16.mxu0 0
      %2633 = vmatpush2.bf16.msra.mxu0 0
      %2634 = vmatprep.subr.bf16.mxu0 0
      %2635 = vmatpush2.bf16.msra.mxu0 0
      %2636 = vmatprep.subr.bf16.mxu0 0
      %2637 = vmatpush2.bf16.msra.mxu0 0
      %2638 = vmatprep.subr.bf16.mxu0 0
      %2639 = vmatpush2.bf16.msra.mxu0 0
      %2640 = vmatprep.subr.bf16.mxu0 0
      %2641 = vmatpush2.bf16.msra.mxu0 0
      %2642 = vmatprep.subr.bf16.mxu0 0
      %2643 = vmatpush2.bf16.msra.mxu0 0
      %2644 = vmatprep.subr.bf16.mxu0 0
      %2645 = vmatpush2.bf16.msra.mxu0 0
      %2646 = vmatprep.mubr.bf16.mxu0 0
      %2647 = vmatmul.mubr.bf16.gmra.mxu0 %v2596
      %v2648 = vpop.f32.mrf.mxu0
      %v2649 = vadd.f32 0.0, %v2648
      %v2650 = vpop.f32.mrf.mxu0
      %v2651 = vpop.f32.mrf.mxu0
      %v2652 = vadd.f32 0.0, %v2651
      %v2653 = vpop.f32.mrf.mxu0
      %2654 = vmatprep.mubr.bf16.mxu0 0
      %2655 = vmatmul.mubr.bf16.gmra.mxu0 %v2599
      %v2656 = vpop.f32.mrf.mxu0
      %v2657 = vadd.f32 0.0, %v2656
      %v2658 = vpop.f32.mrf.mxu0
      %v2659 = vpop.f32.mrf.mxu0
      %v2660 = vadd.f32 0.0, %v2659
      %v2661 = vpop.f32.mrf.mxu0
      %2662 = vmatprep.mubr.bf16.mxu0 0
      %2663 = vmatmul.mubr.bf16.gmra.mxu0 %v2602
      %v2664 = vpop.f32.mrf.mxu0
      %v2665 = vadd.f32 0.0, %v2664
      %v2666 = vpop.f32.mrf.mxu0
      %v2667 = vpop.f32.mrf.mxu0
      %v2668 = vadd.f32 0.0, %v2667
      %v2669 = vpop.f32.mrf.mxu0
      %2670 = vmatprep.mubr.bf16.mxu0 0
      %2671 = vmatmul.mubr.bf16.gmra.mxu0 %v2605
      %v2672 = vpop.f32.mrf.mxu0
      %v2673 = vadd.f32 0.0, %v2672
      %v2674 = vpop.f32.mrf.mxu0
      %v2675 = vpop.f32.mrf.mxu0
      %v2676 = vadd.f32 0.0, %v2675
      %v2677 = vpop.f32.mrf.mxu0
      %2678 = vmatprep.mubr.bf16.mxu0 0
      %2679 = vmatmul.mubr.bf16.gmra.mxu0 %v2608
      %v2680 = vpop.f32.mrf.mxu0
      %v2681 = vadd.f32 0.0, %v2680
      %v2682 = vpop.f32.mrf.mxu0
      %v2683 = vpop.f32.mrf.mxu0
      %v2684 = vadd.f32 0.0, %v2683
      %v2685 = vpop.f32.mrf.mxu0
      %2686 = vdwg.mxu0
      %v2687 = vpack.c.bf16 %v2652, %v2649
      %v2688 = vpack.c.bf16 %v2660, %v2657
      %v2689 = vpack.c.bf16 %v2668, %v2665
      %v2690 = vpack.c.bf16 %v2676, %v2673
      %v2691 = vpack.c.bf16 %v2684, %v2681
      %v2697 = vunpack.c.l.b16 %v2687
      %v2698 = vunpack.c.h.b16 %v2687
      %v2699 = vunpack.c.l.b16 %v2688
      %v2700 = vunpack.c.h.b16 %v2688
      %v2701 = vunpack.c.l.b16 %v2689
      %v2702 = vunpack.c.h.b16 %v2689
      %v2703 = vunpack.c.l.b16 %v2690
      %v2704 = vunpack.c.h.b16 %v2690
      %v2705 = vunpack.c.l.b16 %v2691
      %v2706 = vunpack.c.h.b16 %v2691
      %v2707 = vpack.c.b16 %v2697, %v2697
      %v2708 = vpack.c.b16 %v2698, %v2698
      %v2709 = vpack.c.b16 %v2699, %v2699
      %v2710 = vpack.c.b16 %v2700, %v2700
      %v2711 = vpack.c.b16 %v2701, %v2701
      %v2712 = vpack.c.b16 %v2702, %v2702
      %v2713 = vpack.c.b16 %v2703, %v2703
      %v2714 = vpack.c.b16 %v2704, %v2704
      %v2715 = vpack.c.b16 %v2705, %v2705
      %v2716 = vpack.c.b16 %v2706, %v2706
      %2727 = vst [vmem:[%s381] sm:$0xf] %v2707
      %2728 = vst [vmem:[%s381 + $0x4] sm:$0xf] %v2708
      %2729 = vst [vmem:[%s381 + $0x8] sm:$0xf] %v2709
      %2730 = vst [vmem:[%s381 + $0xc] sm:$0xf] %v2710
      %2731 = vst [vmem:[%s381 + $0x10] sm:$0xf] %v2711
      %2732 = vst [vmem:[%s381 + $0x14] sm:$0xf] %v2712
      %2733 = vst [vmem:[%s381 + $0x18] sm:$0xf] %v2713
      %2734 = vst [vmem:[%s381 + $0x1c] sm:$0xf] %v2714
      %2735 = vst [vmem:[%s381 + $0x20] sm:$0xf] %v2715
      %2736 = vst [vmem:[%s381 + $0x24] sm:$0xf] %v2716
      %v2737 = vadd.f32 %v2649, %v2652
      %v2738 = vadd.f32 %v2737, %v2657
      %v2739 = vadd.f32 %v2738, %v2660
      %v2740 = vadd.f32 %v2739, %v2665
      %v2741 = vadd.f32 %v2740, %v2668
      %v2742 = vadd.f32 %v2741, %v2673
      %v2743 = vadd.f32 %v2742, %v2676
      %v2744 = vadd.f32 %v2743, %v2681
      %v2745 = vadd.f32 %v2744, %v2684
      %v2746 = vrot.slane %v2745, 4
      %v2747 = vadd.f32 %v2745, %v2746
      %v2748 = vrot.slane %v2747, 2
      %v2749 = vadd.f32 %v2747, %v2748
      %v2750 = vrot.slane %v2749, 1
      %v2751 = vadd.f32 %v2749, %v2750
      %v2752 = vmul.f32 %v2649, %v2649
      %v2753 = vmul.f32 %v2652, %v2652
      %v2754 = vmul.f32 %v2657, %v2657
      %v2755 = vmul.f32 %v2660, %v2660
      %v2756 = vmul.f32 %v2665, %v2665
      %v2757 = vmul.f32 %v2668, %v2668
      %v2758 = vmul.f32 %v2673, %v2673
      %v2759 = vmul.f32 %v2676, %v2676
      %v2760 = vmul.f32 %v2681, %v2681
      %v2761 = vmul.f32 %v2684, %v2684
      %v2762 = vadd.f32 %v2752, %v2753
      %v2763 = vadd.f32 %v2762, %v2754
      %v2764 = vadd.f32 %v2763, %v2755
      %v2765 = vadd.f32 %v2764, %v2756
      %v2766 = vadd.f32 %v2765, %v2757
      %v2767 = vadd.f32 %v2766, %v2758
      %v2768 = vadd.f32 %v2767, %v2759
      %v2769 = vadd.f32 %v2768, %v2760
      %v2770 = vadd.f32 %v2769, %v2761
      %v2771 = vrot.slane %v2770, 4
      %v2772 = vadd.f32 %v2770, %v2771
      %v2773 = vrot.slane %v2772, 2
      %v2774 = vadd.f32 %v2772, %v2773
      %v2775 = vrot.slane %v2774, 1
      %v2776 = vadd.f32 %v2774, %v2775
      %v2777 = vsel %vm2554, %v2776, 0.0
      %v2778 = vsel %vm2553, %v2751, %v2777
      %2779 = vst [vmem:[%s385] sm:$0xff] %v2778
      %p2780 = scmp.lt.s32.totalorder %s21, 1
      %s2781 = scalar_select %p2780, %s21, 1
      %s2782 = smul.addr %s2781, 10
      %s2783 = smul.addr %s2782, 4
      %s2784 = scalar_lea.vmem %s6, %s2783
      %p2785 = scmp.lt.s32.totalorder %s21, 1
      %s2786 = scalar_select %p2785, %s21, 1
      %s2787 = smul.addr %s2786, 8
      %s2788 = scalar_lea.vmem %s7, %s2787
      %p2789 = scmp.lt.s32.totalorder %s21, 1
      %s2790 = scalar_select %p2789, %s21, 1
      %s2791 = smul.addr %s2790, 10
      %s2792 = smul.addr %s2791, 4
      %s2793 = scalar_lea.vmem %s8, %s2792
      %p2794 = scmp.lt.s32.totalorder %s21, 1
      %s2795 = scalar_select %p2794, %s21, 1
      %s2796 = smul.addr %s2795, 8
      %s2797 = scalar_lea.vmem %s9, %s2796
      // Predicated region
      $region45: #{resblk_forward.4} parent=43 // pred_check
        %p2798 = pneg %p175
      $region46: #{resblk_forward.4} parent=43 // pred_check_branch
        %2800 = sbr.rel (%p2798) target = $region48
      $region47: #{resblk_forward.4} parent=43 // pred_region
        _
      $region48: #{resblk_forward.4} parent=43 // pred_fallthru
        _
      // Predicated region
      $region49: #{resblk_forward.4} parent=43 // pred_check
        %p2801 = pneg %p201
      $region50: #{resblk_forward.4} parent=43 // pred_check_branch
        %2803 = sbr.rel (%p2801) target = $region52
      $region51: #{resblk_forward.4} parent=43 // pred_region
        _
      $region52: #{resblk_forward.4} parent=43 // pred_fallthru
        _
      // Predicated region
      $region53: #{resblk_forward.4} parent=43 // pred_check
        %p2804 = pneg %p227
      $region54: #{resblk_forward.4} parent=43 // pred_check_branch
        %2806 = sbr.rel (%p2804) target = $region56
      $region55: #{resblk_forward.4} parent=43 // pred_region
        _
      $region56: #{resblk_forward.4} parent=43 // pred_fallthru
        _
      // Predicated region
      $region57: #{resblk_forward.4} parent=43 // pred_check
        %p2807 = pneg %p253
      $region58: #{resblk_forward.4} parent=43 // pred_check_branch
        %2809 = sbr.rel (%p2807) target = $region60
      $region59: #{resblk_forward.4} parent=43 // pred_region
        _
      $region60: #{resblk_forward.4} parent=43 // pred_fallthru
        _
    $region44: #{resblk_forward.4} parent=5 // pred_fallthru
      _
    %p2810 = scmp.le.s32.totalorder 2, %s16
    // Predicated region
    $region61: #{resblk_forward.4} parent=5 // pred_check
      %p2811 = pneg %p2810
    $region62: #{resblk_forward.4} parent=5 // pred_check_branch
      %2813 = sbr.rel (%p2811) target = $region64
    $region63: #{resblk_forward.4} parent=5 // pred_region
      %s2814 = ssub.s32 %s16, 2
      // Predicated region
      $region65: #{resblk_forward.4} parent=63 // pred_check
        %p2815 = pneg %p181
      $region66: #{resblk_forward.4} parent=63 // pred_check_branch
        %2817 = sbr.rel (%p2815) target = $region68
      $region67: #{resblk_forward.4} parent=63 // pred_region
        %p2818 = scmp.lt.s32.totalorder %s22, 1
        %s2819 = scalar_select %p2818, %s22, 1
        %s2820 = smul.addr %s2819, 10
        %s2821 = smul.addr %s2820, 4
        %s2822 = scalar_lea.vmem %s6, %s2821
      $region68: #{resblk_forward.4} parent=63 // pred_fallthru
        _
      // Predicated region
      $region69: #{resblk_forward.4} parent=63 // pred_check
        %p2823 = pneg %p207
      $region70: #{resblk_forward.4} parent=63 // pred_check_branch
        %2825 = sbr.rel (%p2823) target = $region72
      $region71: #{resblk_forward.4} parent=63 // pred_region
        %p2826 = scmp.lt.s32.totalorder %s22, 1
        %s2827 = scalar_select %p2826, %s22, 1
        %s2828 = smul.addr %s2827, 8
        %s2829 = scalar_lea.vmem %s7, %s2828
      $region72: #{resblk_forward.4} parent=63 // pred_fallthru
        _
      // Predicated region
      $region73: #{resblk_forward.4} parent=63 // pred_check
        %p2830 = pneg %p233
      $region74: #{resblk_forward.4} parent=63 // pred_check_branch
        %2832 = sbr.rel (%p2830) target = $region76
      $region75: #{resblk_forward.4} parent=63 // pred_region
        %p2833 = scmp.lt.s32.totalorder %s22, 1
        %s2834 = scalar_select %p2833, %s22, 1
        %s2835 = smul.addr %s2834, 10
        %s2836 = smul.addr %s2835, 4
        %s2837 = scalar_lea.vmem %s8, %s2836
      $region76: #{resblk_forward.4} parent=63 // pred_fallthru
        _
      // Predicated region
      $region77: #{resblk_forward.4} parent=63 // pred_check
        %p2838 = pneg %p259
      $region78: #{resblk_forward.4} parent=63 // pred_check_branch
        %2840 = sbr.rel (%p2838) target = $region80
      $region79: #{resblk_forward.4} parent=63 // pred_region
        %p2841 = scmp.lt.s32.totalorder %s22, 1
        %s2842 = scalar_select %p2841, %s22, 1
        %s2843 = smul.addr %s2842, 8
        %s2844 = scalar_lea.vmem %s9, %s2843
      $region80: #{resblk_forward.4} parent=63 // pred_fallthru
        _
    $region64: #{resblk_forward.4} parent=5 // pred_fallthru
      _
  $region6: #{resblk_forward.4} parent=0 // loop_footer
    %s20 = sadd.s32 1, %s16
  $region7: #{resblk_forward.4} parent=0 // loop_footer_branch
    %15 = sbr.rel target = $region3
  $region8: #{resblk_forward.4} parent=0 // loop_exit
    _

</llo_original>
